<compile_context>
chip_gen: v5e
topology: v5e:2x2
jax: 0.10.0
libtpu: 0.0.40
codegen_flags: <defaults>
</compile_context>

<pallas_src>
import functools

import jax
import jax.numpy as jnp
from jax.experimental import pallas as pl
from jax.experimental.pallas import tpu as pltpu

NEG_INF = -10000000.0        # same padding constant the PyTorch module uses
LRELU_SLOPE = 0.2            # helper_torch_util.conv2d uses LeakyReLU(0.2)
ACT_DTYPE = jnp.bfloat16     # dtype of the two HBM intermediates (halves traffic)


# ----------------------------------------------------------------------------
# Kernel 1: fused  mlp_in -> mlp_b1 -> mlp_corr  +  per-cluster max pooling
# ----------------------------------------------------------------------------
def _prepool_kernel(*refs, n_in, n_b1, n_corr, k_pad):
    n_layers = n_in + n_b1 + n_corr
    x_ref, g_ref = refs[0], refs[1]
    w_refs = refs[2:2 + 3 * n_layers]
    xin_ref, xb1_ref, cf_ref, cc_ref = refs[2 + 3 * n_layers:2 + 3 * n_layers + 4]

    def layer(h, idx):                       # 1x1 conv + folded BN + LeakyReLU
        w = w_refs[3 * idx][...]
        s = w_refs[3 * idx + 1][...]
        b = w_refs[3 * idx + 2][...]
        y = jnp.dot(w, h, preferred_element_type=jnp.float32)    # (Cout, TN)
        y = y * s + b
        return jnp.where(y >= 0.0, y, LRELU_SLOPE * y)

    # Layer 0 consumes the (TN, F) input tile via a trans-B contraction and
    # produces the lane-dense (C, TN) layout used by every later layer.
    x_nf = x_ref[0]                                              # (TN, F)
    h = jax.lax.dot_general(w_refs[0][...], x_nf, (((1,), (1,)), ((), ())),
                            preferred_element_type=jnp.float32)  # (d0, TN)
    h = h * w_refs[1][...] + w_refs[2][...]
    h = jnp.where(h >= 0.0, h, LRELU_SLOPE * h)

    li = 1
    for _ in range(n_in - 1):
        h = layer(h, li); li += 1
    x_in = h                                                     # (D_in, TN)
    for _ in range(n_b1):
        h = layer(h, li); li += 1
    x_b1 = h                                                     # (D1, TN)
    c = x_b1
    for _ in range(n_corr):
        c = layer(c, li); li += 1
    corr = c                                                     # (D2, TN)

    xin_ref[0] = x_in.astype(xin_ref.dtype)
    xb1_ref[0] = x_b1.astype(xb1_ref.dtype)

    # Per-cluster masked max pooling, accumulated across N tiles (grid axis 1).
    @pl.when(pl.program_id(1) == 0)
    def _():
        cf_ref[...] = jnp.full(cf_ref.shape, NEG_INF, cf_ref.dtype)
        cc_ref[...] = jnp.full(cc_ref.shape, NEG_INF, cc_ref.dtype)

    gid = g_ref[0]                                               # (1, TN) int32
    d1, d2 = x_b1.shape[0], corr.shape[0]
    lane_f = jax.lax.broadcasted_iota(jnp.int32, (d1, k_pad), 1)
    lane_c = jax.lax.broadcasted_iota(jnp.int32, (d2, k_pad), 1)
    cf_t = jnp.full((d1, k_pad), NEG_INF, jnp.float32)
    cc_t = jnp.full((d2, k_pad), NEG_INF, jnp.float32)
    for k in range(k_pad):                                       # static unroll
        mk = gid == k                                            # (1, TN)
        fcol = jnp.max(jnp.where(mk, x_b1, NEG_INF), axis=1, keepdims=True)
        ccol = jnp.max(jnp.where(mk, corr, NEG_INF), axis=1, keepdims=True)
        cf_t = jnp.where(lane_f == k, fcol, cf_t)                # place column k
        cc_t = jnp.where(lane_c == k, ccol, cc_t)
    cf_ref[0] = jnp.maximum(cf_ref[0], cf_t)
    cc_ref[0] = jnp.maximum(cc_ref[0], cc_t)


# ----------------------------------------------------------------------------
# Kernel 2: cluster mixing + scatter + mlp_out + final layers + log_softmax
# ----------------------------------------------------------------------------
def _postpool_kernel(*refs, n_rest, k_pad, num_cluster):
    (xin_ref, xb1_ref, g_ref, cf_ref, cc_ref,
     wa_ref, wb_ref, wp_ref, s0_ref, b0_ref) = refs[:10]
    w_refs = refs[10:10 + 3 * n_rest]
    out_ref = refs[10 + 3 * n_rest]

    x_in = xin_ref[0].astype(jnp.float32)                        # (D_in, TN)
    x_b1 = xb1_ref[0].astype(jnp.float32)                        # (D1, TN)
    gid = g_ref[0]                                               # (1, TN)
    cf = cf_ref[0]                                               # (D1, K)
    cc = cc_ref[0]                                               # (D2, K)
    tn = gid.shape[1]

    # F.normalize(cluster_corr^T, dim=-1): L2-normalize each cluster column,
    # then zero the padded (nonexistent) clusters.
    nrm = jnp.sqrt(jnp.sum(cc * cc, axis=0, keepdims=True))      # (1, K)
    cc_n = cc / jnp.maximum(nrm, 1e-12)
    valid = jax.lax.broadcasted_iota(jnp.int32, (1, k_pad), 1) < num_cluster
    cc_n = jnp.where(valid, cc_n, 0.0)

    # out_pool = CF @ (CCn^T CCn) @ onehot == (CF @ CCn^T) @ (CCn @ onehot)
    onehot = (jax.lax.broadcasted_iota(jnp.int32, (k_pad, tn), 0) == gid
              ).astype(jnp.float32)                              # (K, TN)
    t1 = jax.lax.dot_general(cf, cc_n, (((1,), (1,)), ((), ())),
                             preferred_element_type=jnp.float32)     # (D1, D2)
    t2 = jnp.dot(cc_n, onehot, preferred_element_type=jnp.float32)   # (D2, TN)
    out_pool = jnp.dot(t1, t2, preferred_element_type=jnp.float32)   # (D1, TN)

    # First mlp_out layer over the implicit concat [x_in ; x_b1 ; out_pool].
    y = (jnp.dot(wa_ref[...], x_in, preferred_element_type=jnp.float32)
         + jnp.dot(wb_ref[...], x_b1, preferred_element_type=jnp.float32)
         + jnp.dot(wp_ref[...], out_pool, preferred_element_type=jnp.float32))
    y = y * s0_ref[...] + b0_ref[...]
    y = jnp.where(y >= 0.0, y, LRELU_SLOPE * y)

    # Remaining mlp_out layers + final layers (post-BN affines pre-folded).
    for i in range(n_rest):
        w = w_refs[3 * i][...]
        s = w_refs[3 * i + 1][...]
        b = w_refs[3 * i + 2][...]
        y = jnp.dot(w, y, preferred_element_type=jnp.float32)
        y = y * s + b
        y = jnp.where(y >= 0.0, y, LRELU_SLOPE * y)

    # log_softmax over channels (sublane axis) == torch dim=1.
    m = jnp.max(y, axis=0, keepdims=True)
    z = y - m
    lse = jnp.log(jnp.sum(jnp.exp(z), axis=0, keepdims=True))
    out_ref[0] = (z - lse).astype(out_ref.dtype)


# ----------------------------------------------------------------------------
# Config, parameters and host-side glue
# ----------------------------------------------------------------------------
class Cfg:
    d_feature = 8
    d_in = [16, 32]
    d_b1 = [[32, 32]]
    d_b2 = [[16, 32]]          # last dims of d_b1[i]/d_b2[i] must match (module's
    num_cluster = [4]          # implicit assumption)
    pooling = True
    d_outmlp = [32]
    d_finalmlp = [32, 8]       # 8 output classes


def _make_conv_params(key, cin, cout, bn_eps=1e-6):
    kw, kb = jax.random.split(key)
    w = jax.random.normal(kw, (cout, cin), jnp.float32) / jnp.sqrt(jnp.float32(cin))
    b = jax.random.normal(kb, (cout, 1), jnp.float32) * 0.01
    # eval-mode BN with default stats (gamma=1, beta=0, mean=0, var=1)
    scale = jnp.full((cout, 1), 1.0 / jnp.sqrt(1.0 + bn_eps), jnp.float32)
    bias = b * scale
    return w, scale, bias


def build_params(cfg, key):
    keys = iter(jax.random.split(key, 64))
    params = {"mlp_in": [], "mlp_b1": [], "mlp_corr": [], "mlp_out": [], "final": []}
    ld = cfg.d_feature
    for d in cfg.d_in:
        params["mlp_in"].append(_make_conv_params(next(keys), ld, d))
        ld = d
    for i in range(len(cfg.d_b1)):
        ld1, blk = ld, []
        for d in cfg.d_b1[i]:
            blk.append(_make_conv_params(next(keys), ld1, d))
            ld1 = d
        params["mlp_b1"].append(blk)
        ld2, blk2 = ld1, []
        for d in cfg.d_b2[i]:
            blk2.append(_make_conv_params(next(keys), ld2, d))
            ld2 = d
        params["mlp_corr"].append(blk2)
    ld = cfg.d_in[-1]
    for i in range(len(cfg.d_b1)):
        ld += cfg.d_b1[i][-1]
        if cfg.pooling:
            ld += cfg.d_b2[i][-1]
    for d in cfg.d_outmlp:
        params["mlp_out"].append(_make_conv_params(next(keys), ld, d))
        ld = d
    for i, d in enumerate(cfg.d_finalmlp):
        w, s, b = _make_conv_params(next(keys), ld, d)
        if i != len(cfg.d_finalmlp) - 1:
            eps = 1e-5  # extra nn.BatchNorm2d(d), eval mode, default init
            ps = jnp.full((d, 1), 1.0 / jnp.sqrt(1.0 + eps), jnp.float32)
            pb = jnp.zeros((d, 1), jnp.float32)
        else:
            ps = pb = None
        params["final"].append((w, s, b, ps, pb))
        ld = d
    return params


def _fold_final_post_affine(final_params):
    """Fold the eval-mode final_bn_i affine (applied after LeakyReLU) into the
    following conv's weight/bias -- exact, removes extra per-layer inputs."""
    folded, pend_s, pend_b = [], None, None
    for (w, s, b, ps, pb) in final_params:
        if pend_s is not None:
            b = b + jnp.dot(w, pend_b) * s
            w = w * pend_s.reshape(1, -1)
        folded.append((w, s, b))
        pend_s, pend_b = ps, pb
    return folded


def _pick_tile_n(n, max_tn=512):
    # Largest multiple of 128 that divides N and is <= max_tn.  Per-tile VMEM
    # footprint here is tiny, so 512 is safe on v5e/v6e (128 MiB) and v7x
    # (64 MiB); raise max_tn for very large point clouds on v5e/v6e.
    assert n % 128 == 0, "N must be a multiple of 128"
    tn = min(max_tn, n)
    while n % tn:
        tn -= 128
    return tn


def lapcluster_forward(cfg, params, feature, cluster, *, tile_n=None):
    """feature: (B, N, d_feature) f32;  cluster: (B, n_blocks, N) int ids.
    Returns per-point log-probabilities shaped (B, num_classes, N)."""
    assert cfg.pooling and len(cfg.d_b1) == 1
    assert cfg.d_b1[0][-1] == cfg.d_b2[0][-1]
    B, N, F = feature.shape
    tn = tile_n or _pick_tile_n(N)
    assert N % tn == 0 and tn % 128 == 0
    nt = N // tn

    d_in = cfg.d_in[-1]
    d1 = cfg.d_b1[0][-1]
    d2 = cfg.d_b2[0][-1]
    n_cls = cfg.d_finalmlp[-1]
    num_cluster = cfg.num_cluster[0]
    k_pad = max(8, ((num_cluster + 7) // 8) * 8)

    gidx = cluster[:, 0:1, :].astype(jnp.int32)                  # (B, 1, N)
    const2d = lambda a: pl.BlockSpec(a.shape, lambda b_, t_: (0, 0))

    # ------------------------------ kernel 1 ------------------------------
    pre_layers = params["mlp_in"] + params["mlp_b1"][0] + params["mlp_corr"][0]
    w_args = []
    for (w, s, b) in pre_layers:
        w_args += [w, s, b]
    kern1 = functools.partial(_prepool_kernel,
                              n_in=len(params["mlp_in"]),
                              n_b1=len(params["mlp_b1"][0]),
                              n_corr=len(params["mlp_corr"][0]),
                              k_pad=k_pad)
    in_specs1 = ([pl.BlockSpec((1, tn, F), lambda b_, t_: (b_, t_, 0)),
                  pl.BlockSpec((1, 1, tn), lambda b_, t_: (b_, 0, t_))]
                 + [const2d(a) for a in w_args])
    out_shape1 = (jax.ShapeDtypeStruct((B, d_in, N), ACT_DTYPE),
                  jax.ShapeDtypeStruct((B, d1, N), ACT_DTYPE),
                  jax.ShapeDtypeStruct((B, d1, k_pad), jnp.float32),
                  jax.ShapeDtypeStruct((B, d2, k_pad), jnp.float32))
    out_specs1 = (pl.BlockSpec((1, d_in, tn), lambda b_, t_: (b_, 0, t_)),
                  pl.BlockSpec((1, d1, tn), lambda b_, t_: (b_, 0, t_)),
                  pl.BlockSpec((1, d1, k_pad), lambda b_, t_: (b_, 0, 0)),
                  pl.BlockSpec((1, d2, k_pad), lambda b_, t_: (b_, 0, 0)))
    flops1 = 2 * B * N * sum(w.shape[0] * w.shape[1] for (w, _, _) in pre_layers)
    bytes1 = (feature.size * 4 + gidx.size * 4 + sum(a.size * 4 for a in w_args)
              + (B * d_in * N + B * d1 * N) * 2 + B * (d1 + d2) * k_pad * 4)
    x_in, x_b1, cf, cc = pl.pallas_call(
        kern1,
        out_shape=out_shape1,
        grid=(B, nt),
        in_specs=in_specs1,
        out_specs=out_specs1,
        compiler_params=pltpu.CompilerParams(
            dimension_semantics=("parallel", "arbitrary")),
        cost_estimate=pl.CostEstimate(flops=int(flops1), transcendentals=0,
                                      bytes_accessed=int(bytes1)),
    )(feature, gidx, *w_args)

    # ------------------------------ kernel 2 ------------------------------
    w_out0, s_out0, b_out0 = params["mlp_out"][0]
    wa = w_out0[:, :d_in]                       # concat slice for x_in
    wb = w_out0[:, d_in:d_in + d1]              # concat slice for x_b1
    wp = w_out0[:, d_in + d1:]                  # concat slice for out_pool
    rest_layers = params["mlp_out"][1:] + _fold_final_post_affine(params["final"])
    rest_args = []
    for (w, s, b) in rest_layers:
        rest_args += [w, s, b]
    n_rest = len(rest_layers)

    kern2 = functools.partial(_postpool_kernel, n_rest=n_rest, k_pad=k_pad,
                              num_cluster=num_cluster)
    in_specs2 = ([pl.BlockSpec((1, d_in, tn), lambda b_, t_: (b_, 0, t_)),
                  pl.BlockSpec((1, d1, tn), lambda b_, t_: (b_, 0, t_)),
                  pl.BlockSpec((1, 1, tn), lambda b_, t_: (b_, 0, t_)),
                  pl.BlockSpec((1, d1, k_pad), lambda b_, t_: (b_, 0, 0)),
                  pl.BlockSpec((1, d2, k_pad), lambda b_, t_: (b_, 0, 0))]
                 + [const2d(a) for a in (wa, wb, wp, s_out0, b_out0)]
                 + [const2d(a) for a in rest_args])
    flops2 = 2 * B * N * (w_out0.shape[0] * (d_in + d1 + d2) + k_pad * d2 + d2 * d1
                          + sum(w.shape[0] * w.shape[1] for (w, _, _) in rest_layers))
    bytes2 = ((B * d_in * N + B * d1 * N) * 2 + gidx.size * 4
              + B * (d1 + d2) * k_pad * 4 + B * n_cls * N * 4
              + sum(a.size * 4 for a in (wa, wb, wp, s_out0, b_out0))
              + sum(a.size * 4 for a in rest_args))
    out = pl.pallas_call(
        kern2,
        out_shape=jax.ShapeDtypeStruct((B, n_cls, N), jnp.float32),
        grid=(B, nt),
        in_specs=in_specs2,
        out_specs=pl.BlockSpec((1, n_cls, tn), lambda b_, t_: (b_, 0, t_)),
        compiler_params=pltpu.CompilerParams(
            dimension_semantics=("parallel", "parallel")),
        cost_estimate=pl.CostEstimate(flops=int(flops2),
                                      transcendentals=int(B * N * n_cls),
                                      bytes_accessed=int(bytes2)),
    )(x_in, x_b1, gidx, cf, cc, wa, wb, wp, s_out0, b_out0, *rest_args)
    return out                                   # (B, num_classes, N)


if __name__ == "__main__":
    cfg = Cfg()
    B, N = 2, 512
    key = jax.random.PRNGKey(0)
    kf, kc, kp = jax.random.split(key, 3)
    feature = jax.random.normal(kf, (B, N, cfg.d_feature), jnp.float32)
    cluster = jax.random.randint(kc, (B, len(cfg.d_b1), N), 0,
                                 cfg.num_cluster[0], jnp.int32)
    params = build_params(cfg, kp)

    # tile_n=256 so the demo exercises multi-tile pooled-max accumulation
    # (NT=2); the default _pick_tile_n chooses up to 512 for real point clouds.
    fwd = jax.jit(lambda f, c: lapcluster_forward(cfg, params, f, c, tile_n=256))
    out = fwd(feature, cluster)
    jax.block_until_ready(out)
    assert out.shape == (B, cfg.d_finalmlp[-1], N)
    assert bool(jnp.all(jnp.isfinite(out)))
    print("KERNEL_OK")
</pallas_src>

<mosaic_0001>
module attributes {stable_mosaic.version = 11 : i64} {
  func.func @_prepool_kernel(%arg0: i32, %arg1: i32, %arg2: memref<1x256x8xf32, #tpu.memory_space<vmem>>, %arg3: memref<1x1x256xi32, #tpu.memory_space<vmem>>, %arg4: memref<16x8xf32, #tpu.memory_space<vmem>>, %arg5: memref<16x1xf32, #tpu.memory_space<vmem>>, %arg6: memref<16x1xf32, #tpu.memory_space<vmem>>, %arg7: memref<32x16xf32, #tpu.memory_space<vmem>>, %arg8: memref<32x1xf32, #tpu.memory_space<vmem>>, %arg9: memref<32x1xf32, #tpu.memory_space<vmem>>, %arg10: memref<32x32xf32, #tpu.memory_space<vmem>>, %arg11: memref<32x1xf32, #tpu.memory_space<vmem>>, %arg12: memref<32x1xf32, #tpu.memory_space<vmem>>, %arg13: memref<32x32xf32, #tpu.memory_space<vmem>>, %arg14: memref<32x1xf32, #tpu.memory_space<vmem>>, %arg15: memref<32x1xf32, #tpu.memory_space<vmem>>, %arg16: memref<16x32xf32, #tpu.memory_space<vmem>>, %arg17: memref<16x1xf32, #tpu.memory_space<vmem>>, %arg18: memref<16x1xf32, #tpu.memory_space<vmem>>, %arg19: memref<32x16xf32, #tpu.memory_space<vmem>>, %arg20: memref<32x1xf32, #tpu.memory_space<vmem>>, %arg21: memref<32x1xf32, #tpu.memory_space<vmem>>, %arg22: memref<1x32x256xbf16, #tpu.memory_space<vmem>>, %arg23: memref<1x32x256xbf16, #tpu.memory_space<vmem>>, %arg24: memref<1x32x8xf32, #tpu.memory_space<vmem>>, %arg25: memref<1x32x8xf32, #tpu.memory_space<vmem>>) attributes {dimension_semantics = [#tpu.dimension_semantics<parallel>, #tpu.dimension_semantics<arbitrary>], iteration_bounds = array<i64: 2, 2>, scalar_prefetch = 0 : i64, scratch_operands = 0 : i64, tpu.core_type = #tpu.core_type<tc>, window_params = [{transform_indices = @transform_0, window_bounds = array<i64: 1, 256, 8>}, {transform_indices = @transform_1, window_bounds = array<i64: 1, 1, 256>}, {pipeline_mode = #tpu.pipeline_mode<synchronous>, transform_indices = @transform_2, window_bounds = array<i64: 16, 8>}, {pipeline_mode = #tpu.pipeline_mode<synchronous>, transform_indices = @transform_3, window_bounds = array<i64: 16, 1>}, {pipeline_mode = #tpu.pipeline_mode<synchronous>, transform_indices = @transform_4, window_bounds = array<i64: 16, 1>}, {pipeline_mode = #tpu.pipeline_mode<synchronous>, transform_indices = @transform_5, window_bounds = array<i64: 32, 16>}, {pipeline_mode = #tpu.pipeline_mode<synchronous>, transform_indices = @transform_6, window_bounds = array<i64: 32, 1>}, {pipeline_mode = #tpu.pipeline_mode<synchronous>, transform_indices = @transform_7, window_bounds = array<i64: 32, 1>}, {pipeline_mode = #tpu.pipeline_mode<synchronous>, transform_indices = @transform_8, window_bounds = array<i64: 32, 32>}, {pipeline_mode = #tpu.pipeline_mode<synchronous>, transform_indices = @transform_9, window_bounds = array<i64: 32, 1>}, {pipeline_mode = #tpu.pipeline_mode<synchronous>, transform_indices = @transform_10, window_bounds = array<i64: 32, 1>}, {pipeline_mode = #tpu.pipeline_mode<synchronous>, transform_indices = @transform_11, window_bounds = array<i64: 32, 32>}, {pipeline_mode = #tpu.pipeline_mode<synchronous>, transform_indices = @transform_12, window_bounds = array<i64: 32, 1>}, {pipeline_mode = #tpu.pipeline_mode<synchronous>, transform_indices = @transform_13, window_bounds = array<i64: 32, 1>}, {pipeline_mode = #tpu.pipeline_mode<synchronous>, transform_indices = @transform_14, window_bounds = array<i64: 16, 32>}, {pipeline_mode = #tpu.pipeline_mode<synchronous>, transform_indices = @transform_15, window_bounds = array<i64: 16, 1>}, {pipeline_mode = #tpu.pipeline_mode<synchronous>, transform_indices = @transform_16, window_bounds = array<i64: 16, 1>}, {pipeline_mode = #tpu.pipeline_mode<synchronous>, transform_indices = @transform_17, window_bounds = array<i64: 32, 16>}, {pipeline_mode = #tpu.pipeline_mode<synchronous>, transform_indices = @transform_18, window_bounds = array<i64: 32, 1>}, {pipeline_mode = #tpu.pipeline_mode<synchronous>, transform_indices = @transform_19, window_bounds = array<i64: 32, 1>}, {transform_indices = @transform_20, window_bounds = array<i64: 1, 32, 256>}, {transform_indices = @transform_21, window_bounds = array<i64: 1, 32, 256>}, {transform_indices = @transform_22, window_bounds = array<i64: 1, 32, 8>}, {transform_indices = @transform_23, window_bounds = array<i64: 1, 32, 8>}]} {
    %c0 = arith.constant 0 : index
    %c0_0 = arith.constant 0 : index
    %c0_1 = arith.constant 0 : index
    %0 = vector.load %arg2[%c0, %c0_0, %c0_1] : memref<1x256x8xf32, #tpu.memory_space<vmem>>, vector<1x256x8xf32>
    %1 = vector.shape_cast %0 : vector<1x256x8xf32> to vector<256x8xf32>
    %c0_2 = arith.constant 0 : index
    %c0_3 = arith.constant 0 : index
    %2 = vector.load %arg4[%c0_2, %c0_3] : memref<16x8xf32, #tpu.memory_space<vmem>>, vector<16x8xf32>
    %cst = arith.constant dense<0.000000e+00> : vector<16x256xf32>
    %3 = tpu.matmul %2, %1, %cst {dimension_numbers = #tpu.dot_dimension_numbers<[1], [1], [0], [0], [0, 0, 1, 0], [], []>} : vector<16x8xf32>, vector<256x8xf32>, vector<16x256xf32> -> vector<16x256xf32>
    %c0_4 = arith.constant 0 : index
    %c0_5 = arith.constant 0 : index
    %4 = vector.load %arg5[%c0_4, %c0_5] : memref<16x1xf32, #tpu.memory_space<vmem>>, vector<16x1xf32>
    %5 = vector.broadcast %4 : vector<16x1xf32> to vector<16x256xf32>
    %6 = arith.mulf %3, %5 : vector<16x256xf32>
    %c0_6 = arith.constant 0 : index
    %c0_7 = arith.constant 0 : index
    %7 = vector.load %arg6[%c0_6, %c0_7] : memref<16x1xf32, #tpu.memory_space<vmem>>, vector<16x1xf32>
    %8 = vector.broadcast %7 : vector<16x1xf32> to vector<16x256xf32>
    %9 = arith.addf %6, %8 : vector<16x256xf32>
    %cst_8 = arith.constant 0.000000e+00 : f32
    %10 = vector.broadcast %cst_8 : f32 to vector<16x256xf32>
    %11 = arith.cmpf oge, %9, %10 : vector<16x256xf32>
    %cst_9 = arith.constant 2.000000e-01 : f32
    %12 = vector.broadcast %cst_9 : f32 to vector<16x256xf32>
    %13 = arith.mulf %12, %9 : vector<16x256xf32>
    %14 = arith.select %11, %9, %13 : vector<16x256xi1>, vector<16x256xf32>
    %c0_10 = arith.constant 0 : index
    %c0_11 = arith.constant 0 : index
    %15 = vector.load %arg7[%c0_10, %c0_11] : memref<32x16xf32, #tpu.memory_space<vmem>>, vector<32x16xf32>
    %c0_12 = arith.constant 0 : index
    %c0_13 = arith.constant 0 : index
    %16 = vector.load %arg8[%c0_12, %c0_13] : memref<32x1xf32, #tpu.memory_space<vmem>>, vector<32x1xf32>
    %c0_14 = arith.constant 0 : index
    %c0_15 = arith.constant 0 : index
    %17 = vector.load %arg9[%c0_14, %c0_15] : memref<32x1xf32, #tpu.memory_space<vmem>>, vector<32x1xf32>
    %cst_16 = arith.constant dense<0.000000e+00> : vector<32x256xf32>
    %18 = tpu.matmul %15, %14, %cst_16 {dimension_numbers = #tpu.dot_dimension_numbers<[1], [0], [0], [1], [0, 0, 1, 1], [], []>} : vector<32x16xf32>, vector<16x256xf32>, vector<32x256xf32> -> vector<32x256xf32>
    %19 = vector.broadcast %16 : vector<32x1xf32> to vector<32x256xf32>
    %20 = arith.mulf %18, %19 : vector<32x256xf32>
    %21 = vector.broadcast %17 : vector<32x1xf32> to vector<32x256xf32>
    %22 = arith.addf %20, %21 : vector<32x256xf32>
    %cst_17 = arith.constant 0.000000e+00 : f32
    %23 = vector.broadcast %cst_17 : f32 to vector<32x256xf32>
    %24 = arith.cmpf oge, %22, %23 : vector<32x256xf32>
    %cst_18 = arith.constant 2.000000e-01 : f32
    %25 = vector.broadcast %cst_18 : f32 to vector<32x256xf32>
    %26 = arith.mulf %25, %22 : vector<32x256xf32>
    %27 = arith.select %24, %22, %26 : vector<32x256xi1>, vector<32x256xf32>
    %c0_19 = arith.constant 0 : index
    %c0_20 = arith.constant 0 : index
    %28 = vector.load %arg10[%c0_19, %c0_20] : memref<32x32xf32, #tpu.memory_space<vmem>>, vector<32x32xf32>
    %c0_21 = arith.constant 0 : index
    %c0_22 = arith.constant 0 : index
    %29 = vector.load %arg11[%c0_21, %c0_22] : memref<32x1xf32, #tpu.memory_space<vmem>>, vector<32x1xf32>
    %c0_23 = arith.constant 0 : index
    %c0_24 = arith.constant 0 : index
    %30 = vector.load %arg12[%c0_23, %c0_24] : memref<32x1xf32, #tpu.memory_space<vmem>>, vector<32x1xf32>
    %cst_25 = arith.constant dense<0.000000e+00> : vector<32x256xf32>
    %31 = tpu.matmul %28, %27, %cst_25 {dimension_numbers = #tpu.dot_dimension_numbers<[1], [0], [0], [1], [0, 0, 1, 1], [], []>} : vector<32x32xf32>, vector<32x256xf32>, vector<32x256xf32> -> vector<32x256xf32>
    %32 = vector.broadcast %29 : vector<32x1xf32> to vector<32x256xf32>
    %33 = arith.mulf %31, %32 : vector<32x256xf32>
    %34 = vector.broadcast %30 : vector<32x1xf32> to vector<32x256xf32>
    %35 = arith.addf %33, %34 : vector<32x256xf32>
    %cst_26 = arith.constant 0.000000e+00 : f32
    %36 = vector.broadcast %cst_26 : f32 to vector<32x256xf32>
    %37 = arith.cmpf oge, %35, %36 : vector<32x256xf32>
    %cst_27 = arith.constant 2.000000e-01 : f32
    %38 = vector.broadcast %cst_27 : f32 to vector<32x256xf32>
    %39 = arith.mulf %38, %35 : vector<32x256xf32>
    %40 = arith.select %37, %35, %39 : vector<32x256xi1>, vector<32x256xf32>
    %c0_28 = arith.constant 0 : index
    %c0_29 = arith.constant 0 : index
    %41 = vector.load %arg13[%c0_28, %c0_29] : memref<32x32xf32, #tpu.memory_space<vmem>>, vector<32x32xf32>
    %c0_30 = arith.constant 0 : index
    %c0_31 = arith.constant 0 : index
    %42 = vector.load %arg14[%c0_30, %c0_31] : memref<32x1xf32, #tpu.memory_space<vmem>>, vector<32x1xf32>
    %c0_32 = arith.constant 0 : index
    %c0_33 = arith.constant 0 : index
    %43 = vector.load %arg15[%c0_32, %c0_33] : memref<32x1xf32, #tpu.memory_space<vmem>>, vector<32x1xf32>
    %cst_34 = arith.constant dense<0.000000e+00> : vector<32x256xf32>
    %44 = tpu.matmul %41, %40, %cst_34 {dimension_numbers = #tpu.dot_dimension_numbers<[1], [0], [0], [1], [0, 0, 1, 1], [], []>} : vector<32x32xf32>, vector<32x256xf32>, vector<32x256xf32> -> vector<32x256xf32>
    %45 = vector.broadcast %42 : vector<32x1xf32> to vector<32x256xf32>
    %46 = arith.mulf %44, %45 : vector<32x256xf32>
    %47 = vector.broadcast %43 : vector<32x1xf32> to vector<32x256xf32>
    %48 = arith.addf %46, %47 : vector<32x256xf32>
    %cst_35 = arith.constant 0.000000e+00 : f32
    %49 = vector.broadcast %cst_35 : f32 to vector<32x256xf32>
    %50 = arith.cmpf oge, %48, %49 : vector<32x256xf32>
    %cst_36 = arith.constant 2.000000e-01 : f32
    %51 = vector.broadcast %cst_36 : f32 to vector<32x256xf32>
    %52 = arith.mulf %51, %48 : vector<32x256xf32>
    %53 = arith.select %50, %48, %52 : vector<32x256xi1>, vector<32x256xf32>
    %c0_37 = arith.constant 0 : index
    %c0_38 = arith.constant 0 : index
    %54 = vector.load %arg16[%c0_37, %c0_38] : memref<16x32xf32, #tpu.memory_space<vmem>>, vector<16x32xf32>
    %c0_39 = arith.constant 0 : index
    %c0_40 = arith.constant 0 : index
    %55 = vector.load %arg17[%c0_39, %c0_40] : memref<16x1xf32, #tpu.memory_space<vmem>>, vector<16x1xf32>
    %c0_41 = arith.constant 0 : index
    %c0_42 = arith.constant 0 : index
    %56 = vector.load %arg18[%c0_41, %c0_42] : memref<16x1xf32, #tpu.memory_space<vmem>>, vector<16x1xf32>
    %cst_43 = arith.constant dense<0.000000e+00> : vector<16x256xf32>
    %57 = tpu.matmul %54, %53, %cst_43 {dimension_numbers = #tpu.dot_dimension_numbers<[1], [0], [0], [1], [0, 0, 1, 1], [], []>} : vector<16x32xf32>, vector<32x256xf32>, vector<16x256xf32> -> vector<16x256xf32>
    %58 = vector.broadcast %55 : vector<16x1xf32> to vector<16x256xf32>
    %59 = arith.mulf %57, %58 : vector<16x256xf32>
    %60 = vector.broadcast %56 : vector<16x1xf32> to vector<16x256xf32>
    %61 = arith.addf %59, %60 : vector<16x256xf32>
    %cst_44 = arith.constant 0.000000e+00 : f32
    %62 = vector.broadcast %cst_44 : f32 to vector<16x256xf32>
    %63 = arith.cmpf oge, %61, %62 : vector<16x256xf32>
    %cst_45 = arith.constant 2.000000e-01 : f32
    %64 = vector.broadcast %cst_45 : f32 to vector<16x256xf32>
    %65 = arith.mulf %64, %61 : vector<16x256xf32>
    %66 = arith.select %63, %61, %65 : vector<16x256xi1>, vector<16x256xf32>
    %c0_46 = arith.constant 0 : index
    %c0_47 = arith.constant 0 : index
    %67 = vector.load %arg19[%c0_46, %c0_47] : memref<32x16xf32, #tpu.memory_space<vmem>>, vector<32x16xf32>
    %c0_48 = arith.constant 0 : index
    %c0_49 = arith.constant 0 : index
    %68 = vector.load %arg20[%c0_48, %c0_49] : memref<32x1xf32, #tpu.memory_space<vmem>>, vector<32x1xf32>
    %c0_50 = arith.constant 0 : index
    %c0_51 = arith.constant 0 : index
    %69 = vector.load %arg21[%c0_50, %c0_51] : memref<32x1xf32, #tpu.memory_space<vmem>>, vector<32x1xf32>
    %cst_52 = arith.constant dense<0.000000e+00> : vector<32x256xf32>
    %70 = tpu.matmul %67, %66, %cst_52 {dimension_numbers = #tpu.dot_dimension_numbers<[1], [0], [0], [1], [0, 0, 1, 1], [], []>} : vector<32x16xf32>, vector<16x256xf32>, vector<32x256xf32> -> vector<32x256xf32>
    %71 = vector.broadcast %68 : vector<32x1xf32> to vector<32x256xf32>
    %72 = arith.mulf %70, %71 : vector<32x256xf32>
    %73 = vector.broadcast %69 : vector<32x1xf32> to vector<32x256xf32>
    %74 = arith.addf %72, %73 : vector<32x256xf32>
    %cst_53 = arith.constant 0.000000e+00 : f32
    %75 = vector.broadcast %cst_53 : f32 to vector<32x256xf32>
    %76 = arith.cmpf oge, %74, %75 : vector<32x256xf32>
    %cst_54 = arith.constant 2.000000e-01 : f32
    %77 = vector.broadcast %cst_54 : f32 to vector<32x256xf32>
    %78 = arith.mulf %77, %74 : vector<32x256xf32>
    %79 = arith.select %76, %74, %78 : vector<32x256xi1>, vector<32x256xf32>
    %80 = arith.truncf %27 : vector<32x256xf32> to vector<32x256xbf16>
    %c0_55 = arith.constant 0 : index
    %c0_56 = arith.constant 0 : index
    %c0_57 = arith.constant 0 : index
    %81 = vector.load %arg22[%c0_55, %c0_56, %c0_57] : memref<1x32x256xbf16, #tpu.memory_space<vmem>>, vector<1x32x256xbf16>
    %82 = vector.shape_cast %81 : vector<1x32x256xbf16> to vector<32x256xbf16>
    %83 = vector.shape_cast %80 : vector<32x256xbf16> to vector<1x32x256xbf16>
    tpu.vector_store %arg22[%c0_55, %c0_56, %c0_57], %83 {strides = array<i32>} : memref<1x32x256xbf16, #tpu.memory_space<vmem>>, vector<1x32x256xbf16>,
    %84 = arith.truncf %53 : vector<32x256xf32> to vector<32x256xbf16>
    %c0_58 = arith.constant 0 : index
    %c0_59 = arith.constant 0 : index
    %c0_60 = arith.constant 0 : index
    %85 = vector.load %arg23[%c0_58, %c0_59, %c0_60] : memref<1x32x256xbf16, #tpu.memory_space<vmem>>, vector<1x32x256xbf16>
    %86 = vector.shape_cast %85 : vector<1x32x256xbf16> to vector<32x256xbf16>
    %87 = vector.shape_cast %84 : vector<32x256xbf16> to vector<1x32x256xbf16>
    tpu.vector_store %arg23[%c0_58, %c0_59, %c0_60], %87 {strides = array<i32>} : memref<1x32x256xbf16, #tpu.memory_space<vmem>>, vector<1x32x256xbf16>,
    %c0_i32 = arith.constant 0 : i32
    %88 = arith.cmpi eq, %arg1, %c0_i32 : i32
    %89 = arith.extui %88 : i1 to i32
    %c0_i32_61 = arith.constant 0 : i32
    %90 = arith.cmpi ne, %89, %c0_i32_61 : i32
    scf.if %90 {
      %cst_128 = arith.constant -1.000000e+07 : f32
      %301 = vector.broadcast %cst_128 : f32 to vector<1x32x8xf32>
      %c0_129 = arith.constant 0 : index
      %c0_130 = arith.constant 0 : index
      %c0_131 = arith.constant 0 : index
      %302 = vector.load %arg24[%c0_129, %c0_130, %c0_131] : memref<1x32x8xf32, #tpu.memory_space<vmem>>, vector<1x32x8xf32>
      tpu.vector_store %arg24[%c0_129, %c0_130, %c0_131], %301 {strides = array<i32>} : memref<1x32x8xf32, #tpu.memory_space<vmem>>, vector<1x32x8xf32>,
      %cst_132 = arith.constant -1.000000e+07 : f32
      %303 = vector.broadcast %cst_132 : f32 to vector<1x32x8xf32>
      %c0_133 = arith.constant 0 : index
      %c0_134 = arith.constant 0 : index
      %c0_135 = arith.constant 0 : index
      %304 = vector.load %arg25[%c0_133, %c0_134, %c0_135] : memref<1x32x8xf32, #tpu.memory_space<vmem>>, vector<1x32x8xf32>
      tpu.vector_store %arg25[%c0_133, %c0_134, %c0_135], %303 {strides = array<i32>} : memref<1x32x8xf32, #tpu.memory_space<vmem>>, vector<1x32x8xf32>,
    } else {
    }
    %c0_62 = arith.constant 0 : index
    %c0_63 = arith.constant 0 : index
    %c0_64 = arith.constant 0 : index
    %91 = vector.load %arg3[%c0_62, %c0_63, %c0_64] : memref<1x1x256xi32, #tpu.memory_space<vmem>>, vector<1x1x256xi32>
    %92 = vector.shape_cast %91 : vector<1x1x256xi32> to vector<1x256xi32>
    %93 = tpu.iota {dimensions = array<i32: 1>} : vector<32x8xi32>
    %94 = tpu.iota {dimensions = array<i32: 1>} : vector<32x8xi32>
    %cst_65 = arith.constant -1.000000e+07 : f32
    %95 = vector.broadcast %cst_65 : f32 to vector<32x8xf32>
    %cst_66 = arith.constant -1.000000e+07 : f32
    %96 = vector.broadcast %cst_66 : f32 to vector<32x8xf32>
    %c0_i32_67 = arith.constant 0 : i32
    %97 = vector.broadcast %c0_i32_67 : i32 to vector<1x256xi32>
    %98 = arith.cmpi eq, %92, %97 : vector<1x256xi32>
    %cst_68 = arith.constant -1.000000e+07 : f32
    %99 = vector.shape_cast %98 : vector<1x256xi1> to vector<1x256xi1>
    %100 = vector.broadcast %99 : vector<1x256xi1> to vector<32x256xi1>
    %101 = vector.broadcast %cst_68 : f32 to vector<32x256xf32>
    %102 = arith.select %100, %53, %101 : vector<32x256xi1>, vector<32x256xf32>
    %cst_69 = arith.constant dense<0xFF800000> : vector<32xf32>
    %103 = vector.multi_reduction <maximumf>, %102, %cst_69 [1] : vector<32x256xf32> to vector<32xf32>
    %104 = vector.shape_cast %103 : vector<32xf32> to vector<32x1xf32>
    %cst_70 = arith.constant -1.000000e+07 : f32
    %105 = vector.shape_cast %98 : vector<1x256xi1> to vector<1x256xi1>
    %106 = vector.broadcast %105 : vector<1x256xi1> to vector<32x256xi1>
    %107 = vector.broadcast %cst_70 : f32 to vector<32x256xf32>
    %108 = arith.select %106, %79, %107 : vector<32x256xi1>, vector<32x256xf32>
    %cst_71 = arith.constant dense<0xFF800000> : vector<32xf32>
    %109 = vector.multi_reduction <maximumf>, %108, %cst_71 [1] : vector<32x256xf32> to vector<32xf32>
    %110 = vector.shape_cast %109 : vector<32xf32> to vector<32x1xf32>
    %c0_i32_72 = arith.constant 0 : i32
    %111 = vector.broadcast %c0_i32_72 : i32 to vector<32x8xi32>
    %112 = arith.cmpi eq, %93, %111 : vector<32x8xi32>
    %113 = vector.shape_cast %104 : vector<32x1xf32> to vector<32x1xf32>
    %114 = vector.broadcast %113 : vector<32x1xf32> to vector<32x8xf32>
    %115 = arith.select %112, %114, %95 : vector<32x8xi1>, vector<32x8xf32>
    %c0_i32_73 = arith.constant 0 : i32
    %116 = vector.broadcast %c0_i32_73 : i32 to vector<32x8xi32>
    %117 = arith.cmpi eq, %94, %116 : vector<32x8xi32>
    %118 = vector.shape_cast %110 : vector<32x1xf32> to vector<32x1xf32>
    %119 = vector.broadcast %118 : vector<32x1xf32> to vector<32x8xf32>
    %120 = arith.select %117, %119, %96 : vector<32x8xi1>, vector<32x8xf32>
    %c1_i32 = arith.constant 1 : i32
    %121 = vector.broadcast %c1_i32 : i32 to vector<1x256xi32>
    %122 = arith.cmpi eq, %92, %121 : vector<1x256xi32>
    %cst_74 = arith.constant -1.000000e+07 : f32
    %123 = vector.shape_cast %122 : vector<1x256xi1> to vector<1x256xi1>
    %124 = vector.broadcast %123 : vector<1x256xi1> to vector<32x256xi1>
    %125 = vector.broadcast %cst_74 : f32 to vector<32x256xf32>
    %126 = arith.select %124, %53, %125 : vector<32x256xi1>, vector<32x256xf32>
    %cst_75 = arith.constant dense<0xFF800000> : vector<32xf32>
    %127 = vector.multi_reduction <maximumf>, %126, %cst_75 [1] : vector<32x256xf32> to vector<32xf32>
    %128 = vector.shape_cast %127 : vector<32xf32> to vector<32x1xf32>
    %cst_76 = arith.constant -1.000000e+07 : f32
    %129 = vector.shape_cast %122 : vector<1x256xi1> to vector<1x256xi1>
    %130 = vector.broadcast %129 : vector<1x256xi1> to vector<32x256xi1>
    %131 = vector.broadcast %cst_76 : f32 to vector<32x256xf32>
    %132 = arith.select %130, %79, %131 : vector<32x256xi1>, vector<32x256xf32>
    %cst_77 = arith.constant dense<0xFF800000> : vector<32xf32>
    %133 = vector.multi_reduction <maximumf>, %132, %cst_77 [1] : vector<32x256xf32> to vector<32xf32>
    %134 = vector.shape_cast %133 : vector<32xf32> to vector<32x1xf32>
    %c1_i32_78 = arith.constant 1 : i32
    %135 = vector.broadcast %c1_i32_78 : i32 to vector<32x8xi32>
    %136 = arith.cmpi eq, %93, %135 : vector<32x8xi32>
    %137 = vector.shape_cast %128 : vector<32x1xf32> to vector<32x1xf32>
    %138 = vector.broadcast %137 : vector<32x1xf32> to vector<32x8xf32>
    %139 = arith.select %136, %138, %115 : vector<32x8xi1>, vector<32x8xf32>
    %c1_i32_79 = arith.constant 1 : i32
    %140 = vector.broadcast %c1_i32_79 : i32 to vector<32x8xi32>
    %141 = arith.cmpi eq, %94, %140 : vector<32x8xi32>
    %142 = vector.shape_cast %134 : vector<32x1xf32> to vector<32x1xf32>
    %143 = vector.broadcast %142 : vector<32x1xf32> to vector<32x8xf32>
    %144 = arith.select %141, %143, %120 : vector<32x8xi1>, vector<32x8xf32>
    %c2_i32 = arith.constant 2 : i32
    %145 = vector.broadcast %c2_i32 : i32 to vector<1x256xi32>
    %146 = arith.cmpi eq, %92, %145 : vector<1x256xi32>
    %cst_80 = arith.constant -1.000000e+07 : f32
    %147 = vector.shape_cast %146 : vector<1x256xi1> to vector<1x256xi1>
    %148 = vector.broadcast %147 : vector<1x256xi1> to vector<32x256xi1>
    %149 = vector.broadcast %cst_80 : f32 to vector<32x256xf32>
    %150 = arith.select %148, %53, %149 : vector<32x256xi1>, vector<32x256xf32>
    %cst_81 = arith.constant dense<0xFF800000> : vector<32xf32>
    %151 = vector.multi_reduction <maximumf>, %150, %cst_81 [1] : vector<32x256xf32> to vector<32xf32>
    %152 = vector.shape_cast %151 : vector<32xf32> to vector<32x1xf32>
    %cst_82 = arith.constant -1.000000e+07 : f32
    %153 = vector.shape_cast %146 : vector<1x256xi1> to vector<1x256xi1>
    %154 = vector.broadcast %153 : vector<1x256xi1> to vector<32x256xi1>
    %155 = vector.broadcast %cst_82 : f32 to vector<32x256xf32>
    %156 = arith.select %154, %79, %155 : vector<32x256xi1>, vector<32x256xf32>
    %cst_83 = arith.constant dense<0xFF800000> : vector<32xf32>
    %157 = vector.multi_reduction <maximumf>, %156, %cst_83 [1] : vector<32x256xf32> to vector<32xf32>
    %158 = vector.shape_cast %157 : vector<32xf32> to vector<32x1xf32>
    %c2_i32_84 = arith.constant 2 : i32
    %159 = vector.broadcast %c2_i32_84 : i32 to vector<32x8xi32>
    %160 = arith.cmpi eq, %93, %159 : vector<32x8xi32>
    %161 = vector.shape_cast %152 : vector<32x1xf32> to vector<32x1xf32>
    %162 = vector.broadcast %161 : vector<32x1xf32> to vector<32x8xf32>
    %163 = arith.select %160, %162, %139 : vector<32x8xi1>, vector<32x8xf32>
    %c2_i32_85 = arith.constant 2 : i32
    %164 = vector.broadcast %c2_i32_85 : i32 to vector<32x8xi32>
    %165 = arith.cmpi eq, %94, %164 : vector<32x8xi32>
    %166 = vector.shape_cast %158 : vector<32x1xf32> to vector<32x1xf32>
    %167 = vector.broadcast %166 : vector<32x1xf32> to vector<32x8xf32>
    %168 = arith.select %165, %167, %144 : vector<32x8xi1>, vector<32x8xf32>
    %c3_i32 = arith.constant 3 : i32
    %169 = vector.broadcast %c3_i32 : i32 to vector<1x256xi32>
    %170 = arith.cmpi eq, %92, %169 : vector<1x256xi32>
    %cst_86 = arith.constant -1.000000e+07 : f32
    %171 = vector.shape_cast %170 : vector<1x256xi1> to vector<1x256xi1>
    %172 = vector.broadcast %171 : vector<1x256xi1> to vector<32x256xi1>
    %173 = vector.broadcast %cst_86 : f32 to vector<32x256xf32>
    %174 = arith.select %172, %53, %173 : vector<32x256xi1>, vector<32x256xf32>
    %cst_87 = arith.constant dense<0xFF800000> : vector<32xf32>
    %175 = vector.multi_reduction <maximumf>, %174, %cst_87 [1] : vector<32x256xf32> to vector<32xf32>
    %176 = vector.shape_cast %175 : vector<32xf32> to vector<32x1xf32>
    %cst_88 = arith.constant -1.000000e+07 : f32
    %177 = vector.shape_cast %170 : vector<1x256xi1> to vector<1x256xi1>
    %178 = vector.broadcast %177 : vector<1x256xi1> to vector<32x256xi1>
    %179 = vector.broadcast %cst_88 : f32 to vector<32x256xf32>
    %180 = arith.select %178, %79, %179 : vector<32x256xi1>, vector<32x256xf32>
    %cst_89 = arith.constant dense<0xFF800000> : vector<32xf32>
    %181 = vector.multi_reduction <maximumf>, %180, %cst_89 [1] : vector<32x256xf32> to vector<32xf32>
    %182 = vector.shape_cast %181 : vector<32xf32> to vector<32x1xf32>
    %c3_i32_90 = arith.constant 3 : i32
    %183 = vector.broadcast %c3_i32_90 : i32 to vector<32x8xi32>
    %184 = arith.cmpi eq, %93, %183 : vector<32x8xi32>
    %185 = vector.shape_cast %176 : vector<32x1xf32> to vector<32x1xf32>
    %186 = vector.broadcast %185 : vector<32x1xf32> to vector<32x8xf32>
    %187 = arith.select %184, %186, %163 : vector<32x8xi1>, vector<32x8xf32>
    %c3_i32_91 = arith.constant 3 : i32
    %188 = vector.broadcast %c3_i32_91 : i32 to vector<32x8xi32>
    %189 = arith.cmpi eq, %94, %188 : vector<32x8xi32>
    %190 = vector.shape_cast %182 : vector<32x1xf32> to vector<32x1xf32>
    %191 = vector.broadcast %190 : vector<32x1xf32> to vector<32x8xf32>
    %192 = arith.select %189, %191, %168 : vector<32x8xi1>, vector<32x8xf32>
    %c4_i32 = arith.constant 4 : i32
    %193 = vector.broadcast %c4_i32 : i32 to vector<1x256xi32>
    %194 = arith.cmpi eq, %92, %193 : vector<1x256xi32>
    %cst_92 = arith.constant -1.000000e+07 : f32
    %195 = vector.shape_cast %194 : vector<1x256xi1> to vector<1x256xi1>
    %196 = vector.broadcast %195 : vector<1x256xi1> to vector<32x256xi1>
    %197 = vector.broadcast %cst_92 : f32 to vector<32x256xf32>
    %198 = arith.select %196, %53, %197 : vector<32x256xi1>, vector<32x256xf32>
    %cst_93 = arith.constant dense<0xFF800000> : vector<32xf32>
    %199 = vector.multi_reduction <maximumf>, %198, %cst_93 [1] : vector<32x256xf32> to vector<32xf32>
    %200 = vector.shape_cast %199 : vector<32xf32> to vector<32x1xf32>
    %cst_94 = arith.constant -1.000000e+07 : f32
    %201 = vector.shape_cast %194 : vector<1x256xi1> to vector<1x256xi1>
    %202 = vector.broadcast %201 : vector<1x256xi1> to vector<32x256xi1>
    %203 = vector.broadcast %cst_94 : f32 to vector<32x256xf32>
    %204 = arith.select %202, %79, %203 : vector<32x256xi1>, vector<32x256xf32>
    %cst_95 = arith.constant dense<0xFF800000> : vector<32xf32>
    %205 = vector.multi_reduction <maximumf>, %204, %cst_95 [1] : vector<32x256xf32> to vector<32xf32>
    %206 = vector.shape_cast %205 : vector<32xf32> to vector<32x1xf32>
    %c4_i32_96 = arith.constant 4 : i32
    %207 = vector.broadcast %c4_i32_96 : i32 to vector<32x8xi32>
    %208 = arith.cmpi eq, %93, %207 : vector<32x8xi32>
    %209 = vector.shape_cast %200 : vector<32x1xf32> to vector<32x1xf32>
    %210 = vector.broadcast %209 : vector<32x1xf32> to vector<32x8xf32>
    %211 = arith.select %208, %210, %187 : vector<32x8xi1>, vector<32x8xf32>
    %c4_i32_97 = arith.constant 4 : i32
    %212 = vector.broadcast %c4_i32_97 : i32 to vector<32x8xi32>
    %213 = arith.cmpi eq, %94, %212 : vector<32x8xi32>
    %214 = vector.shape_cast %206 : vector<32x1xf32> to vector<32x1xf32>
    %215 = vector.broadcast %214 : vector<32x1xf32> to vector<32x8xf32>
    %216 = arith.select %213, %215, %192 : vector<32x8xi1>, vector<32x8xf32>
    %c5_i32 = arith.constant 5 : i32
    %217 = vector.broadcast %c5_i32 : i32 to vector<1x256xi32>
    %218 = arith.cmpi eq, %92, %217 : vector<1x256xi32>
    %cst_98 = arith.constant -1.000000e+07 : f32
    %219 = vector.shape_cast %218 : vector<1x256xi1> to vector<1x256xi1>
    %220 = vector.broadcast %219 : vector<1x256xi1> to vector<32x256xi1>
    %221 = vector.broadcast %cst_98 : f32 to vector<32x256xf32>
    %222 = arith.select %220, %53, %221 : vector<32x256xi1>, vector<32x256xf32>
    %cst_99 = arith.constant dense<0xFF800000> : vector<32xf32>
    %223 = vector.multi_reduction <maximumf>, %222, %cst_99 [1] : vector<32x256xf32> to vector<32xf32>
    %224 = vector.shape_cast %223 : vector<32xf32> to vector<32x1xf32>
    %cst_100 = arith.constant -1.000000e+07 : f32
    %225 = vector.shape_cast %218 : vector<1x256xi1> to vector<1x256xi1>
    %226 = vector.broadcast %225 : vector<1x256xi1> to vector<32x256xi1>
    %227 = vector.broadcast %cst_100 : f32 to vector<32x256xf32>
    %228 = arith.select %226, %79, %227 : vector<32x256xi1>, vector<32x256xf32>
    %cst_101 = arith.constant dense<0xFF800000> : vector<32xf32>
    %229 = vector.multi_reduction <maximumf>, %228, %cst_101 [1] : vector<32x256xf32> to vector<32xf32>
    %230 = vector.shape_cast %229 : vector<32xf32> to vector<32x1xf32>
    %c5_i32_102 = arith.constant 5 : i32
    %231 = vector.broadcast %c5_i32_102 : i32 to vector<32x8xi32>
    %232 = arith.cmpi eq, %93, %231 : vector<32x8xi32>
    %233 = vector.shape_cast %224 : vector<32x1xf32> to vector<32x1xf32>
    %234 = vector.broadcast %233 : vector<32x1xf32> to vector<32x8xf32>
    %235 = arith.select %232, %234, %211 : vector<32x8xi1>, vector<32x8xf32>
    %c5_i32_103 = arith.constant 5 : i32
    %236 = vector.broadcast %c5_i32_103 : i32 to vector<32x8xi32>
    %237 = arith.cmpi eq, %94, %236 : vector<32x8xi32>
    %238 = vector.shape_cast %230 : vector<32x1xf32> to vector<32x1xf32>
    %239 = vector.broadcast %238 : vector<32x1xf32> to vector<32x8xf32>
    %240 = arith.select %237, %239, %216 : vector<32x8xi1>, vector<32x8xf32>
    %c6_i32 = arith.constant 6 : i32
    %241 = vector.broadcast %c6_i32 : i32 to vector<1x256xi32>
    %242 = arith.cmpi eq, %92, %241 : vector<1x256xi32>
    %cst_104 = arith.constant -1.000000e+07 : f32
    %243 = vector.shape_cast %242 : vector<1x256xi1> to vector<1x256xi1>
    %244 = vector.broadcast %243 : vector<1x256xi1> to vector<32x256xi1>
    %245 = vector.broadcast %cst_104 : f32 to vector<32x256xf32>
    %246 = arith.select %244, %53, %245 : vector<32x256xi1>, vector<32x256xf32>
    %cst_105 = arith.constant dense<0xFF800000> : vector<32xf32>
    %247 = vector.multi_reduction <maximumf>, %246, %cst_105 [1] : vector<32x256xf32> to vector<32xf32>
    %248 = vector.shape_cast %247 : vector<32xf32> to vector<32x1xf32>
    %cst_106 = arith.constant -1.000000e+07 : f32
    %249 = vector.shape_cast %242 : vector<1x256xi1> to vector<1x256xi1>
    %250 = vector.broadcast %249 : vector<1x256xi1> to vector<32x256xi1>
    %251 = vector.broadcast %cst_106 : f32 to vector<32x256xf32>
    %252 = arith.select %250, %79, %251 : vector<32x256xi1>, vector<32x256xf32>
    %cst_107 = arith.constant dense<0xFF800000> : vector<32xf32>
    %253 = vector.multi_reduction <maximumf>, %252, %cst_107 [1] : vector<32x256xf32> to vector<32xf32>
    %254 = vector.shape_cast %253 : vector<32xf32> to vector<32x1xf32>
    %c6_i32_108 = arith.constant 6 : i32
    %255 = vector.broadcast %c6_i32_108 : i32 to vector<32x8xi32>
    %256 = arith.cmpi eq, %93, %255 : vector<32x8xi32>
    %257 = vector.shape_cast %248 : vector<32x1xf32> to vector<32x1xf32>
    %258 = vector.broadcast %257 : vector<32x1xf32> to vector<32x8xf32>
    %259 = arith.select %256, %258, %235 : vector<32x8xi1>, vector<32x8xf32>
    %c6_i32_109 = arith.constant 6 : i32
    %260 = vector.broadcast %c6_i32_109 : i32 to vector<32x8xi32>
    %261 = arith.cmpi eq, %94, %260 : vector<32x8xi32>
    %262 = vector.shape_cast %254 : vector<32x1xf32> to vector<32x1xf32>
    %263 = vector.broadcast %262 : vector<32x1xf32> to vector<32x8xf32>
    %264 = arith.select %261, %263, %240 : vector<32x8xi1>, vector<32x8xf32>
    %c7_i32 = arith.constant 7 : i32
    %265 = vector.broadcast %c7_i32 : i32 to vector<1x256xi32>
    %266 = arith.cmpi eq, %92, %265 : vector<1x256xi32>
    %cst_110 = arith.constant -1.000000e+07 : f32
    %267 = vector.shape_cast %266 : vector<1x256xi1> to vector<1x256xi1>
    %268 = vector.broadcast %267 : vector<1x256xi1> to vector<32x256xi1>
    %269 = vector.broadcast %cst_110 : f32 to vector<32x256xf32>
    %270 = arith.select %268, %53, %269 : vector<32x256xi1>, vector<32x256xf32>
    %cst_111 = arith.constant dense<0xFF800000> : vector<32xf32>
    %271 = vector.multi_reduction <maximumf>, %270, %cst_111 [1] : vector<32x256xf32> to vector<32xf32>
    %272 = vector.shape_cast %271 : vector<32xf32> to vector<32x1xf32>
    %cst_112 = arith.constant -1.000000e+07 : f32
    %273 = vector.shape_cast %266 : vector<1x256xi1> to vector<1x256xi1>
    %274 = vector.broadcast %273 : vector<1x256xi1> to vector<32x256xi1>
    %275 = vector.broadcast %cst_112 : f32 to vector<32x256xf32>
    %276 = arith.select %274, %79, %275 : vector<32x256xi1>, vector<32x256xf32>
    %cst_113 = arith.constant dense<0xFF800000> : vector<32xf32>
    %277 = vector.multi_reduction <maximumf>, %276, %cst_113 [1] : vector<32x256xf32> to vector<32xf32>
    %278 = vector.shape_cast %277 : vector<32xf32> to vector<32x1xf32>
    %c7_i32_114 = arith.constant 7 : i32
    %279 = vector.broadcast %c7_i32_114 : i32 to vector<32x8xi32>
    %280 = arith.cmpi eq, %93, %279 : vector<32x8xi32>
    %281 = vector.shape_cast %272 : vector<32x1xf32> to vector<32x1xf32>
    %282 = vector.broadcast %281 : vector<32x1xf32> to vector<32x8xf32>
    %283 = arith.select %280, %282, %259 : vector<32x8xi1>, vector<32x8xf32>
    %c7_i32_115 = arith.constant 7 : i32
    %284 = vector.broadcast %c7_i32_115 : i32 to vector<32x8xi32>
    %285 = arith.cmpi eq, %94, %284 : vector<32x8xi32>
    %286 = vector.shape_cast %278 : vector<32x1xf32> to vector<32x1xf32>
    %287 = vector.broadcast %286 : vector<32x1xf32> to vector<32x8xf32>
    %288 = arith.select %285, %287, %264 : vector<32x8xi1>, vector<32x8xf32>
    %c0_116 = arith.constant 0 : index
    %c0_117 = arith.constant 0 : index
    %c0_118 = arith.constant 0 : index
    %289 = vector.load %arg24[%c0_116, %c0_117, %c0_118] : memref<1x32x8xf32, #tpu.memory_space<vmem>>, vector<1x32x8xf32>
    %290 = vector.shape_cast %289 : vector<1x32x8xf32> to vector<32x8xf32>
    %291 = arith.maximumf %290, %283 : vector<32x8xf32>
    %c0_119 = arith.constant 0 : index
    %c0_120 = arith.constant 0 : index
    %c0_121 = arith.constant 0 : index
    %292 = vector.load %arg24[%c0_119, %c0_120, %c0_121] : memref<1x32x8xf32, #tpu.memory_space<vmem>>, vector<1x32x8xf32>
    %293 = vector.shape_cast %292 : vector<1x32x8xf32> to vector<32x8xf32>
    %294 = vector.shape_cast %291 : vector<32x8xf32> to vector<1x32x8xf32>
    tpu.vector_store %arg24[%c0_119, %c0_120, %c0_121], %294 {strides = array<i32>} : memref<1x32x8xf32, #tpu.memory_space<vmem>>, vector<1x32x8xf32>,
    %c0_122 = arith.constant 0 : index
    %c0_123 = arith.constant 0 : index
    %c0_124 = arith.constant 0 : index
    %295 = vector.load %arg25[%c0_122, %c0_123, %c0_124] : memref<1x32x8xf32, #tpu.memory_space<vmem>>, vector<1x32x8xf32>
    %296 = vector.shape_cast %295 : vector<1x32x8xf32> to vector<32x8xf32>
    %297 = arith.maximumf %296, %288 : vector<32x8xf32>
    %c0_125 = arith.constant 0 : index
    %c0_126 = arith.constant 0 : index
    %c0_127 = arith.constant 0 : index
    %298 = vector.load %arg25[%c0_125, %c0_126, %c0_127] : memref<1x32x8xf32, #tpu.memory_space<vmem>>, vector<1x32x8xf32>
    %299 = vector.shape_cast %298 : vector<1x32x8xf32> to vector<32x8xf32>
    %300 = vector.shape_cast %297 : vector<32x8xf32> to vector<1x32x8xf32>
    tpu.vector_store %arg25[%c0_125, %c0_126, %c0_127], %300 {strides = array<i32>} : memref<1x32x8xf32, #tpu.memory_space<vmem>>, vector<1x32x8xf32>,
    return
  }
  func.func @transform_0(%arg0: i32, %arg1: i32) -> (i32, i32, i32) {
    %c0_i32 = arith.constant 0 : i32
    %c0_i32_0 = arith.constant 0 : i32
    return %arg0, %arg1, %c0_i32 : i32, i32, i32
  }
  func.func @transform_1(%arg0: i32, %arg1: i32) -> (i32, i32, i32) {
    %c0_i32 = arith.constant 0 : i32
    %c0_i32_0 = arith.constant 0 : i32
    return %arg0, %c0_i32, %arg1 : i32, i32, i32
  }
  func.func @transform_2(%arg0: i32, %arg1: i32) -> (i32, i32) {
    %c0_i32 = arith.constant 0 : i32
    %c0_i32_0 = arith.constant 0 : i32
    %c0_i32_1 = arith.constant 0 : i32
    return %c0_i32, %c0_i32_0 : i32, i32
  }
  func.func @transform_3(%arg0: i32, %arg1: i32) -> (i32, i32) {
    %c0_i32 = arith.constant 0 : i32
    %c0_i32_0 = arith.constant 0 : i32
    %c0_i32_1 = arith.constant 0 : i32
    return %c0_i32, %c0_i32_0 : i32, i32
  }
  func.func @transform_4(%arg0: i32, %arg1: i32) -> (i32, i32) {
    %c0_i32 = arith.constant 0 : i32
    %c0_i32_0 = arith.constant 0 : i32
    %c0_i32_1 = arith.constant 0 : i32
    return %c0_i32, %c0_i32_0 : i32, i32
  }
  func.func @transform_5(%arg0: i32, %arg1: i32) -> (i32, i32) {
    %c0_i32 = arith.constant 0 : i32
    %c0_i32_0 = arith.constant 0 : i32
    %c0_i32_1 = arith.constant 0 : i32
    return %c0_i32, %c0_i32_0 : i32, i32
  }
  func.func @transform_6(%arg0: i32, %arg1: i32) -> (i32, i32) {
    %c0_i32 = arith.constant 0 : i32
    %c0_i32_0 = arith.constant 0 : i32
    %c0_i32_1 = arith.constant 0 : i32
    return %c0_i32, %c0_i32_0 : i32, i32
  }
  func.func @transform_7(%arg0: i32, %arg1: i32) -> (i32, i32) {
    %c0_i32 = arith.constant 0 : i32
    %c0_i32_0 = arith.constant 0 : i32
    %c0_i32_1 = arith.constant 0 : i32
    return %c0_i32, %c0_i32_0 : i32, i32
  }
  func.func @transform_8(%arg0: i32, %arg1: i32) -> (i32, i32) {
    %c0_i32 = arith.constant 0 : i32
    %c0_i32_0 = arith.constant 0 : i32
    %c0_i32_1 = arith.constant 0 : i32
    return %c0_i32, %c0_i32_0 : i32, i32
  }
  func.func @transform_9(%arg0: i32, %arg1: i32) -> (i32, i32) {
    %c0_i32 = arith.constant 0 : i32
    %c0_i32_0 = arith.constant 0 : i32
    %c0_i32_1 = arith.constant 0 : i32
    return %c0_i32, %c0_i32_0 : i32, i32
  }
  func.func @transform_10(%arg0: i32, %arg1: i32) -> (i32, i32) {
    %c0_i32 = arith.constant 0 : i32
    %c0_i32_0 = arith.constant 0 : i32
    %c0_i32_1 = arith.constant 0 : i32
    return %c0_i32, %c0_i32_0 : i32, i32
  }
  func.func @transform_11(%arg0: i32, %arg1: i32) -> (i32, i32) {
    %c0_i32 = arith.constant 0 : i32
    %c0_i32_0 = arith.constant 0 : i32
    %c0_i32_1 = arith.constant 0 : i32
    return %c0_i32, %c0_i32_0 : i32, i32
  }
  func.func @transform_12(%arg0: i32, %arg1: i32) -> (i32, i32) {
    %c0_i32 = arith.constant 0 : i32
    %c0_i32_0 = arith.constant 0 : i32
    %c0_i32_1 = arith.constant 0 : i32
    return %c0_i32, %c0_i32_0 : i32, i32
  }
  func.func @transform_13(%arg0: i32, %arg1: i32) -> (i32, i32) {
    %c0_i32 = arith.constant 0 : i32
    %c0_i32_0 = arith.constant 0 : i32
    %c0_i32_1 = arith.constant 0 : i32
    return %c0_i32, %c0_i32_0 : i32, i32
  }
  func.func @transform_14(%arg0: i32, %arg1: i32) -> (i32, i32) {
    %c0_i32 = arith.constant 0 : i32
    %c0_i32_0 = arith.constant 0 : i32
    %c0_i32_1 = arith.constant 0 : i32
    return %c0_i32, %c0_i32_0 : i32, i32
  }
  func.func @transform_15(%arg0: i32, %arg1: i32) -> (i32, i32) {
    %c0_i32 = arith.constant 0 : i32
    %c0_i32_0 = arith.constant 0 : i32
    %c0_i32_1 = arith.constant 0 : i32
    return %c0_i32, %c0_i32_0 : i32, i32
  }
  func.func @transform_16(%arg0: i32, %arg1: i32) -> (i32, i32) {
    %c0_i32 = arith.constant 0 : i32
    %c0_i32_0 = arith.constant 0 : i32
    %c0_i32_1 = arith.constant 0 : i32
    return %c0_i32, %c0_i32_0 : i32, i32
  }
  func.func @transform_17(%arg0: i32, %arg1: i32) -> (i32, i32) {
    %c0_i32 = arith.constant 0 : i32
    %c0_i32_0 = arith.constant 0 : i32
    %c0_i32_1 = arith.constant 0 : i32
    return %c0_i32, %c0_i32_0 : i32, i32
  }
  func.func @transform_18(%arg0: i32, %arg1: i32) -> (i32, i32) {
    %c0_i32 = arith.constant 0 : i32
    %c0_i32_0 = arith.constant 0 : i32
    %c0_i32_1 = arith.constant 0 : i32
    return %c0_i32, %c0_i32_0 : i32, i32
  }
  func.func @transform_19(%arg0: i32, %arg1: i32) -> (i32, i32) {
    %c0_i32 = arith.constant 0 : i32
    %c0_i32_0 = arith.constant 0 : i32
    %c0_i32_1 = arith.constant 0 : i32
    return %c0_i32, %c0_i32_0 : i32, i32
  }
  func.func @transform_20(%arg0: i32, %arg1: i32) -> (i32, i32, i32) {
    %c0_i32 = arith.constant 0 : i32
    %c0_i32_0 = arith.constant 0 : i32
    return %arg0, %c0_i32, %arg1 : i32, i32, i32
  }
  func.func @transform_21(%arg0: i32, %arg1: i32) -> (i32, i32, i32) {
    %c0_i32 = arith.constant 0 : i32
    %c0_i32_0 = arith.constant 0 : i32
    return %arg0, %c0_i32, %arg1 : i32, i32, i32
  }
  func.func @transform_22(%arg0: i32, %arg1: i32) -> (i32, i32, i32) {
    %c0_i32 = arith.constant 0 : i32
    %c0_i32_0 = arith.constant 0 : i32
    %c0_i32_1 = arith.constant 0 : i32
    return %arg0, %c0_i32, %c0_i32_0 : i32, i32, i32
  }
  func.func @transform_23(%arg0: i32, %arg1: i32) -> (i32, i32, i32) {
    %c0_i32 = arith.constant 0 : i32
    %c0_i32_0 = arith.constant 0 : i32
    %c0_i32_1 = arith.constant 0 : i32
    return %arg0, %c0_i32, %c0_i32_0 : i32, i32, i32
  }
}

module attributes {stable_mosaic.version = 11 : i64} {
  func.func @_postpool_kernel(%arg0: i32, %arg1: i32, %arg2: memref<1x32x256xbf16, #tpu.memory_space<vmem>>, %arg3: memref<1x32x256xbf16, #tpu.memory_space<vmem>>, %arg4: memref<1x1x256xi32, #tpu.memory_space<vmem>>, %arg5: memref<1x32x8xf32, #tpu.memory_space<vmem>>, %arg6: memref<1x32x8xf32, #tpu.memory_space<vmem>>, %arg7: memref<32x32xf32, #tpu.memory_space<vmem>>, %arg8: memref<32x32xf32, #tpu.memory_space<vmem>>, %arg9: memref<32x32xf32, #tpu.memory_space<vmem>>, %arg10: memref<32x1xf32, #tpu.memory_space<vmem>>, %arg11: memref<32x1xf32, #tpu.memory_space<vmem>>, %arg12: memref<32x32xf32, #tpu.memory_space<vmem>>, %arg13: memref<32x1xf32, #tpu.memory_space<vmem>>, %arg14: memref<32x1xf32, #tpu.memory_space<vmem>>, %arg15: memref<8x32xf32, #tpu.memory_space<vmem>>, %arg16: memref<8x1xf32, #tpu.memory_space<vmem>>, %arg17: memref<8x1xf32, #tpu.memory_space<vmem>>, %arg18: memref<1x8x256xf32, #tpu.memory_space<vmem>>) attributes {dimension_semantics = [#tpu.dimension_semantics<parallel>, #tpu.dimension_semantics<parallel>], iteration_bounds = array<i64: 2, 2>, scalar_prefetch = 0 : i64, scratch_operands = 0 : i64, tpu.core_type = #tpu.core_type<tc>, window_params = [{transform_indices = @transform_0, window_bounds = array<i64: 1, 32, 256>}, {transform_indices = @transform_1, window_bounds = array<i64: 1, 32, 256>}, {transform_indices = @transform_2, window_bounds = array<i64: 1, 1, 256>}, {transform_indices = @transform_3, window_bounds = array<i64: 1, 32, 8>}, {transform_indices = @transform_4, window_bounds = array<i64: 1, 32, 8>}, {pipeline_mode = #tpu.pipeline_mode<synchronous>, transform_indices = @transform_5, window_bounds = array<i64: 32, 32>}, {pipeline_mode = #tpu.pipeline_mode<synchronous>, transform_indices = @transform_6, window_bounds = array<i64: 32, 32>}, {pipeline_mode = #tpu.pipeline_mode<synchronous>, transform_indices = @transform_7, window_bounds = array<i64: 32, 32>}, {pipeline_mode = #tpu.pipeline_mode<synchronous>, transform_indices = @transform_8, window_bounds = array<i64: 32, 1>}, {pipeline_mode = #tpu.pipeline_mode<synchronous>, transform_indices = @transform_9, window_bounds = array<i64: 32, 1>}, {pipeline_mode = #tpu.pipeline_mode<synchronous>, transform_indices = @transform_10, window_bounds = array<i64: 32, 32>}, {pipeline_mode = #tpu.pipeline_mode<synchronous>, transform_indices = @transform_11, window_bounds = array<i64: 32, 1>}, {pipeline_mode = #tpu.pipeline_mode<synchronous>, transform_indices = @transform_12, window_bounds = array<i64: 32, 1>}, {pipeline_mode = #tpu.pipeline_mode<synchronous>, transform_indices = @transform_13, window_bounds = array<i64: 8, 32>}, {pipeline_mode = #tpu.pipeline_mode<synchronous>, transform_indices = @transform_14, window_bounds = array<i64: 8, 1>}, {pipeline_mode = #tpu.pipeline_mode<synchronous>, transform_indices = @transform_15, window_bounds = array<i64: 8, 1>}, {transform_indices = @transform_16, window_bounds = array<i64: 1, 8, 256>}]} {
    %c0 = arith.constant 0 : index
    %c0_0 = arith.constant 0 : index
    %c0_1 = arith.constant 0 : index
    %0 = vector.load %arg2[%c0, %c0_0, %c0_1] : memref<1x32x256xbf16, #tpu.memory_space<vmem>>, vector<1x32x256xbf16>
    %1 = vector.shape_cast %0 : vector<1x32x256xbf16> to vector<32x256xbf16>
    %2 = arith.extf %1 : vector<32x256xbf16> to vector<32x256xf32>
    %c0_2 = arith.constant 0 : index
    %c0_3 = arith.constant 0 : index
    %c0_4 = arith.constant 0 : index
    %3 = vector.load %arg3[%c0_2, %c0_3, %c0_4] : memref<1x32x256xbf16, #tpu.memory_space<vmem>>, vector<1x32x256xbf16>
    %4 = vector.shape_cast %3 : vector<1x32x256xbf16> to vector<32x256xbf16>
    %5 = arith.extf %4 : vector<32x256xbf16> to vector<32x256xf32>
    %c0_5 = arith.constant 0 : index
    %c0_6 = arith.constant 0 : index
    %c0_7 = arith.constant 0 : index
    %6 = vector.load %arg4[%c0_5, %c0_6, %c0_7] : memref<1x1x256xi32, #tpu.memory_space<vmem>>, vector<1x1x256xi32>
    %7 = vector.shape_cast %6 : vector<1x1x256xi32> to vector<1x256xi32>
    %c0_8 = arith.constant 0 : index
    %c0_9 = arith.constant 0 : index
    %c0_10 = arith.constant 0 : index
    %8 = vector.load %arg5[%c0_8, %c0_9, %c0_10] : memref<1x32x8xf32, #tpu.memory_space<vmem>>, vector<1x32x8xf32>
    %9 = vector.shape_cast %8 : vector<1x32x8xf32> to vector<32x8xf32>
    %c0_11 = arith.constant 0 : index
    %c0_12 = arith.constant 0 : index
    %c0_13 = arith.constant 0 : index
    %10 = vector.load %arg6[%c0_11, %c0_12, %c0_13] : memref<1x32x8xf32, #tpu.memory_space<vmem>>, vector<1x32x8xf32>
    %11 = vector.shape_cast %10 : vector<1x32x8xf32> to vector<32x8xf32>
    %12 = arith.mulf %11, %11 : vector<32x8xf32>
    %cst = arith.constant dense<0.000000e+00> : vector<8xf32>
    %13 = vector.multi_reduction <add>, %12, %cst [0] : vector<32x8xf32> to vector<8xf32>
    %14 = vector.shape_cast %13 : vector<8xf32> to vector<1x8xf32>
    %15 = math.sqrt %14 : vector<1x8xf32>
    %cst_14 = arith.constant 9.99999996E-13 : f32
    %16 = vector.broadcast %cst_14 : f32 to vector<1x8xf32>
    %17 = arith.maximumf %15, %16 : vector<1x8xf32>
    %18 = vector.broadcast %17 : vector<1x8xf32> to vector<32x8xf32>
    %19 = arith.divf %11, %18 : vector<32x8xf32>
    %20 = tpu.iota {dimensions = array<i32: 1>} : vector<1x8xi32>
    %c4_i32 = arith.constant 4 : i32
    %21 = vector.broadcast %c4_i32 : i32 to vector<1x8xi32>
    %22 = arith.cmpi slt, %20, %21 : vector<1x8xi32>
    %cst_15 = arith.constant 0.000000e+00 : f32
    %23 = vector.shape_cast %22 : vector<1x8xi1> to vector<1x8xi1>
    %24 = vector.broadcast %23 : vector<1x8xi1> to vector<32x8xi1>
    %25 = vector.broadcast %cst_15 : f32 to vector<32x8xf32>
    %26 = arith.select %24, %19, %25 : vector<32x8xi1>, vector<32x8xf32>
    %27 = tpu.iota {dimensions = array<i32: 0>} : vector<8x256xi32>
    %28 = vector.broadcast %7 : vector<1x256xi32> to vector<8x256xi32>
    %29 = arith.cmpi eq, %27, %28 : vector<8x256xi32>
    %30 = arith.extui %29 : vector<8x256xi1> to vector<8x256xi32>
    %31 = arith.sitofp %30 : vector<8x256xi32> to vector<8x256xf32>
    %cst_16 = arith.constant dense<0.000000e+00> : vector<32x32xf32>
    %32 = tpu.matmul %9, %26, %cst_16 {dimension_numbers = #tpu.dot_dimension_numbers<[1], [1], [0], [0], [0, 0, 1, 0], [], []>} : vector<32x8xf32>, vector<32x8xf32>, vector<32x32xf32> -> vector<32x32xf32>
    %cst_17 = arith.constant dense<0.000000e+00> : vector<32x256xf32>
    %33 = tpu.matmul %26, %31, %cst_17 {dimension_numbers = #tpu.dot_dimension_numbers<[1], [0], [0], [1], [0, 0, 1, 1], [], []>} : vector<32x8xf32>, vector<8x256xf32>, vector<32x256xf32> -> vector<32x256xf32>
    %cst_18 = arith.constant dense<0.000000e+00> : vector<32x256xf32>
    %34 = tpu.matmul %32, %33, %cst_18 {dimension_numbers = #tpu.dot_dimension_numbers<[1], [0], [0], [1], [0, 0, 1, 1], [], []>} : vector<32x32xf32>, vector<32x256xf32>, vector<32x256xf32> -> vector<32x256xf32>
    %c0_19 = arith.constant 0 : index
    %c0_20 = arith.constant 0 : index
    %35 = vector.load %arg7[%c0_19, %c0_20] : memref<32x32xf32, #tpu.memory_space<vmem>>, vector<32x32xf32>
    %cst_21 = arith.constant dense<0.000000e+00> : vector<32x256xf32>
    %36 = tpu.matmul %35, %2, %cst_21 {dimension_numbers = #tpu.dot_dimension_numbers<[1], [0], [0], [1], [0, 0, 1, 1], [], []>} : vector<32x32xf32>, vector<32x256xf32>, vector<32x256xf32> -> vector<32x256xf32>
    %c0_22 = arith.constant 0 : index
    %c0_23 = arith.constant 0 : index
    %37 = vector.load %arg8[%c0_22, %c0_23] : memref<32x32xf32, #tpu.memory_space<vmem>>, vector<32x32xf32>
    %cst_24 = arith.constant dense<0.000000e+00> : vector<32x256xf32>
    %38 = tpu.matmul %37, %5, %cst_24 {dimension_numbers = #tpu.dot_dimension_numbers<[1], [0], [0], [1], [0, 0, 1, 1], [], []>} : vector<32x32xf32>, vector<32x256xf32>, vector<32x256xf32> -> vector<32x256xf32>
    %39 = arith.addf %36, %38 : vector<32x256xf32>
    %c0_25 = arith.constant 0 : index
    %c0_26 = arith.constant 0 : index
    %40 = vector.load %arg9[%c0_25, %c0_26] : memref<32x32xf32, #tpu.memory_space<vmem>>, vector<32x32xf32>
    %cst_27 = arith.constant dense<0.000000e+00> : vector<32x256xf32>
    %41 = tpu.matmul %40, %34, %cst_27 {dimension_numbers = #tpu.dot_dimension_numbers<[1], [0], [0], [1], [0, 0, 1, 1], [], []>} : vector<32x32xf32>, vector<32x256xf32>, vector<32x256xf32> -> vector<32x256xf32>
    %42 = arith.addf %39, %41 : vector<32x256xf32>
    %c0_28 = arith.constant 0 : index
    %c0_29 = arith.constant 0 : index
    %43 = vector.load %arg10[%c0_28, %c0_29] : memref<32x1xf32, #tpu.memory_space<vmem>>, vector<32x1xf32>
    %44 = vector.broadcast %43 : vector<32x1xf32> to vector<32x256xf32>
    %45 = arith.mulf %42, %44 : vector<32x256xf32>
    %c0_30 = arith.constant 0 : index
    %c0_31 = arith.constant 0 : index
    %46 = vector.load %arg11[%c0_30, %c0_31] : memref<32x1xf32, #tpu.memory_space<vmem>>, vector<32x1xf32>
    %47 = vector.broadcast %46 : vector<32x1xf32> to vector<32x256xf32>
    %48 = arith.addf %45, %47 : vector<32x256xf32>
    %cst_32 = arith.constant 0.000000e+00 : f32
    %49 = vector.broadcast %cst_32 : f32 to vector<32x256xf32>
    %50 = arith.cmpf oge, %48, %49 : vector<32x256xf32>
    %cst_33 = arith.constant 2.000000e-01 : f32
    %51 = vector.broadcast %cst_33 : f32 to vector<32x256xf32>
    %52 = arith.mulf %51, %48 : vector<32x256xf32>
    %53 = arith.select %50, %48, %52 : vector<32x256xi1>, vector<32x256xf32>
    %c0_34 = arith.constant 0 : index
    %c0_35 = arith.constant 0 : index
    %54 = vector.load %arg12[%c0_34, %c0_35] : memref<32x32xf32, #tpu.memory_space<vmem>>, vector<32x32xf32>
    %c0_36 = arith.constant 0 : index
    %c0_37 = arith.constant 0 : index
    %55 = vector.load %arg13[%c0_36, %c0_37] : memref<32x1xf32, #tpu.memory_space<vmem>>, vector<32x1xf32>
    %c0_38 = arith.constant 0 : index
    %c0_39 = arith.constant 0 : index
    %56 = vector.load %arg14[%c0_38, %c0_39] : memref<32x1xf32, #tpu.memory_space<vmem>>, vector<32x1xf32>
    %cst_40 = arith.constant dense<0.000000e+00> : vector<32x256xf32>
    %57 = tpu.matmul %54, %53, %cst_40 {dimension_numbers = #tpu.dot_dimension_numbers<[1], [0], [0], [1], [0, 0, 1, 1], [], []>} : vector<32x32xf32>, vector<32x256xf32>, vector<32x256xf32> -> vector<32x256xf32>
    %58 = vector.broadcast %55 : vector<32x1xf32> to vector<32x256xf32>
    %59 = arith.mulf %57, %58 : vector<32x256xf32>
    %60 = vector.broadcast %56 : vector<32x1xf32> to vector<32x256xf32>
    %61 = arith.addf %59, %60 : vector<32x256xf32>
    %cst_41 = arith.constant 0.000000e+00 : f32
    %62 = vector.broadcast %cst_41 : f32 to vector<32x256xf32>
    %63 = arith.cmpf oge, %61, %62 : vector<32x256xf32>
    %cst_42 = arith.constant 2.000000e-01 : f32
    %64 = vector.broadcast %cst_42 : f32 to vector<32x256xf32>
    %65 = arith.mulf %64, %61 : vector<32x256xf32>
    %66 = arith.select %63, %61, %65 : vector<32x256xi1>, vector<32x256xf32>
    %c0_43 = arith.constant 0 : index
    %c0_44 = arith.constant 0 : index
    %67 = vector.load %arg15[%c0_43, %c0_44] : memref<8x32xf32, #tpu.memory_space<vmem>>, vector<8x32xf32>
    %c0_45 = arith.constant 0 : index
    %c0_46 = arith.constant 0 : index
    %68 = vector.load %arg16[%c0_45, %c0_46] : memref<8x1xf32, #tpu.memory_space<vmem>>, vector<8x1xf32>
    %c0_47 = arith.constant 0 : index
    %c0_48 = arith.constant 0 : index
    %69 = vector.load %arg17[%c0_47, %c0_48] : memref<8x1xf32, #tpu.memory_space<vmem>>, vector<8x1xf32>
    %cst_49 = arith.constant dense<0.000000e+00> : vector<8x256xf32>
    %70 = tpu.matmul %67, %66, %cst_49 {dimension_numbers = #tpu.dot_dimension_numbers<[1], [0], [0], [1], [0, 0, 1, 1], [], []>} : vector<8x32xf32>, vector<32x256xf32>, vector<8x256xf32> -> vector<8x256xf32>
    %71 = vector.broadcast %68 : vector<8x1xf32> to vector<8x256xf32>
    %72 = arith.mulf %70, %71 : vector<8x256xf32>
    %73 = vector.broadcast %69 : vector<8x1xf32> to vector<8x256xf32>
    %74 = arith.addf %72, %73 : vector<8x256xf32>
    %cst_50 = arith.constant 0.000000e+00 : f32
    %75 = vector.broadcast %cst_50 : f32 to vector<8x256xf32>
    %76 = arith.cmpf oge, %74, %75 : vector<8x256xf32>
    %cst_51 = arith.constant 2.000000e-01 : f32
    %77 = vector.broadcast %cst_51 : f32 to vector<8x256xf32>
    %78 = arith.mulf %77, %74 : vector<8x256xf32>
    %79 = arith.select %76, %74, %78 : vector<8x256xi1>, vector<8x256xf32>
    %cst_52 = arith.constant dense<0xFF800000> : vector<256xf32>
    %80 = vector.multi_reduction <maximumf>, %79, %cst_52 [0] : vector<8x256xf32> to vector<256xf32>
    %81 = vector.shape_cast %80 : vector<256xf32> to vector<1x256xf32>
    %82 = vector.broadcast %81 : vector<1x256xf32> to vector<8x256xf32>
    %83 = arith.subf %79, %82 : vector<8x256xf32>
    %84 = math.exp %83 : vector<8x256xf32>
    %cst_53 = arith.constant dense<0.000000e+00> : vector<256xf32>
    %85 = vector.multi_reduction <add>, %84, %cst_53 [0] : vector<8x256xf32> to vector<256xf32>
    %86 = vector.shape_cast %85 : vector<256xf32> to vector<1x256xf32>
    %87 = math.log %86 : vector<1x256xf32>
    %88 = vector.broadcast %87 : vector<1x256xf32> to vector<8x256xf32>
    %89 = arith.subf %83, %88 : vector<8x256xf32>
    %c0_54 = arith.constant 0 : index
    %c0_55 = arith.constant 0 : index
    %c0_56 = arith.constant 0 : index
    %90 = vector.load %arg18[%c0_54, %c0_55, %c0_56] : memref<1x8x256xf32, #tpu.memory_space<vmem>>, vector<1x8x256xf32>
    %91 = vector.shape_cast %90 : vector<1x8x256xf32> to vector<8x256xf32>
    %92 = vector.shape_cast %89 : vector<8x256xf32> to vector<1x8x256xf32>
    tpu.vector_store %arg18[%c0_54, %c0_55, %c0_56], %92 {strides = array<i32>} : memref<1x8x256xf32, #tpu.memory_space<vmem>>, vector<1x8x256xf32>,
    return
  }
  func.func @transform_0(%arg0: i32, %arg1: i32) -> (i32, i32, i32) {
    %c0_i32 = arith.constant 0 : i32
    %c0_i32_0 = arith.constant 0 : i32
    return %arg0, %c0_i32, %arg1 : i32, i32, i32
  }
  func.func @transform_1(%arg0: i32, %arg1: i32) -> (i32, i32, i32) {
    %c0_i32 = arith.constant 0 : i32
    %c0_i32_0 = arith.constant 0 : i32
    return %arg0, %c0_i32, %arg1 : i32, i32, i32
  }
  func.func @transform_2(%arg0: i32, %arg1: i32) -> (i32, i32, i32) {
    %c0_i32 = arith.constant 0 : i32
    %c0_i32_0 = arith.constant 0 : i32
    return %arg0, %c0_i32, %arg1 : i32, i32, i32
  }
  func.func @transform_3(%arg0: i32, %arg1: i32) -> (i32, i32, i32) {
    %c0_i32 = arith.constant 0 : i32
    %c0_i32_0 = arith.constant 0 : i32
    %c0_i32_1 = arith.constant 0 : i32
    return %arg0, %c0_i32, %c0_i32_0 : i32, i32, i32
  }
  func.func @transform_4(%arg0: i32, %arg1: i32) -> (i32, i32, i32) {
    %c0_i32 = arith.constant 0 : i32
    %c0_i32_0 = arith.constant 0 : i32
    %c0_i32_1 = arith.constant 0 : i32
    return %arg0, %c0_i32, %c0_i32_0 : i32, i32, i32
  }
  func.func @transform_5(%arg0: i32, %arg1: i32) -> (i32, i32) {
    %c0_i32 = arith.constant 0 : i32
    %c0_i32_0 = arith.constant 0 : i32
    %c0_i32_1 = arith.constant 0 : i32
    return %c0_i32, %c0_i32_0 : i32, i32
  }
  func.func @transform_6(%arg0: i32, %arg1: i32) -> (i32, i32) {
    %c0_i32 = arith.constant 0 : i32
    %c0_i32_0 = arith.constant 0 : i32
    %c0_i32_1 = arith.constant 0 : i32
    return %c0_i32, %c0_i32_0 : i32, i32
  }
  func.func @transform_7(%arg0: i32, %arg1: i32) -> (i32, i32) {
    %c0_i32 = arith.constant 0 : i32
    %c0_i32_0 = arith.constant 0 : i32
    %c0_i32_1 = arith.constant 0 : i32
    return %c0_i32, %c0_i32_0 : i32, i32
  }
  func.func @transform_8(%arg0: i32, %arg1: i32) -> (i32, i32) {
    %c0_i32 = arith.constant 0 : i32
    %c0_i32_0 = arith.constant 0 : i32
    %c0_i32_1 = arith.constant 0 : i32
    return %c0_i32, %c0_i32_0 : i32, i32
  }
  func.func @transform_9(%arg0: i32, %arg1: i32) -> (i32, i32) {
    %c0_i32 = arith.constant 0 : i32
    %c0_i32_0 = arith.constant 0 : i32
    %c0_i32_1 = arith.constant 0 : i32
    return %c0_i32, %c0_i32_0 : i32, i32
  }
  func.func @transform_10(%arg0: i32, %arg1: i32) -> (i32, i32) {
    %c0_i32 = arith.constant 0 : i32
    %c0_i32_0 = arith.constant 0 : i32
    %c0_i32_1 = arith.constant 0 : i32
    return %c0_i32, %c0_i32_0 : i32, i32
  }
  func.func @transform_11(%arg0: i32, %arg1: i32) -> (i32, i32) {
    %c0_i32 = arith.constant 0 : i32
    %c0_i32_0 = arith.constant 0 : i32
    %c0_i32_1 = arith.constant 0 : i32
    return %c0_i32, %c0_i32_0 : i32, i32
  }
  func.func @transform_12(%arg0: i32, %arg1: i32) -> (i32, i32) {
    %c0_i32 = arith.constant 0 : i32
    %c0_i32_0 = arith.constant 0 : i32
    %c0_i32_1 = arith.constant 0 : i32
    return %c0_i32, %c0_i32_0 : i32, i32
  }
  func.func @transform_13(%arg0: i32, %arg1: i32) -> (i32, i32) {
    %c0_i32 = arith.constant 0 : i32
    %c0_i32_0 = arith.constant 0 : i32
    %c0_i32_1 = arith.constant 0 : i32
    return %c0_i32, %c0_i32_0 : i32, i32
  }
  func.func @transform_14(%arg0: i32, %arg1: i32) -> (i32, i32) {
    %c0_i32 = arith.constant 0 : i32
    %c0_i32_0 = arith.constant 0 : i32
    %c0_i32_1 = arith.constant 0 : i32
    return %c0_i32, %c0_i32_0 : i32, i32
  }
  func.func @transform_15(%arg0: i32, %arg1: i32) -> (i32, i32) {
    %c0_i32 = arith.constant 0 : i32
    %c0_i32_0 = arith.constant 0 : i32
    %c0_i32_1 = arith.constant 0 : i32
    return %c0_i32, %c0_i32_0 : i32, i32
  }
  func.func @transform_16(%arg0: i32, %arg1: i32) -> (i32, i32, i32) {
    %c0_i32 = arith.constant 0 : i32
    %c0_i32_0 = arith.constant 0 : i32
    return %arg0, %c0_i32, %arg1 : i32, i32, i32
  }
}

</mosaic_0001>

<llo_original>
// kernel: _lambda_.3
$region0: #{_lambda_.3}
  #allocation0 [shape = 'u32[]', space=smem, size = 0x4, offset = 0x4, fixed_abs, tag = 'smem constant byte address 0x4 - core index']
  #allocation1 [shape = 'u32[72,128]{1,0:T(1,128)}', space=vmem, size = 0x9000, scoped, tag = 'internal scratch']
  %s0 = inlined_call_operand.vmem [shape: bf16[2,32,512], index: 0, kind: input, shape index: {}]
  %s1 = inlined_call_operand.vmem [shape: bf16[2,32,512], index: 1, kind: input, shape index: {}]
  %s2 = inlined_call_operand.vmem [shape: s32[2,1,512], index: 2, kind: input, shape index: {}]
  %s3 = inlined_call_operand.vmem [shape: f32[2,32,8], index: 3, kind: input, shape index: {}]
  %s4 = inlined_call_operand.vmem [shape: f32[2,32,8], index: 4, kind: input, shape index: {}]
  %s5 = inlined_call_operand.vmem [shape: f32[32,32], index: 5, kind: input, shape index: {}]
  %s6 = inlined_call_operand.vmem [shape: f32[32,32], index: 6, kind: input, shape index: {}]
  %s7 = inlined_call_operand.vmem [shape: f32[32,32], index: 7, kind: input, shape index: {}]
  %s8 = inlined_call_operand.vmem [shape: f32[32,1], index: 8, kind: input, shape index: {}, may-alias: {8,11}]
  %s9 = inlined_call_operand.vmem [shape: f32[32,1], index: 9, kind: input, shape index: {}]
  %s10 = inlined_call_operand.vmem [shape: f32[32,32], index: 10, kind: input, shape index: {}]
  %s11 = inlined_call_operand.vmem [shape: f32[32,1], index: 11, kind: input, shape index: {}, may-alias: {8,11}]
  %s12 = inlined_call_operand.vmem [shape: f32[32,1], index: 12, kind: input, shape index: {}]
  %s13 = inlined_call_operand.vmem [shape: f32[8,32], index: 13, kind: input, shape index: {}]
  %s14 = inlined_call_operand.vmem [shape: f32[8,1], index: 14, kind: input, shape index: {}]
  %s15 = inlined_call_operand.vmem [shape: f32[8,1], index: 15, kind: input, shape index: {}]
  %s16 = inlined_call_operand.hbm [shape: f32[2,8,512], index: 16, kind: output, shape index: {}]
  %s17 = sld [smem:[#allocation0]]
  $region173: #{_lambda_.3} parent=0
    _
  %s19 = ssub.s32 1, %s17
  %s20 = scalar_select 0, %s19, %s17
  $region1: #{_lambda_.3} parent=0
    #allocation2 [shape = 'u8[32768]{0}', space=vmem, size = 0x8000, scoped, tag = 'input window, operand 0']
    #allocation3 [shape = 'u8[32768]{0}', space=vmem, size = 0x8000, scoped, tag = 'input window, operand 1']
    #allocation4 [shape = 'u8[16384]{0}', space=vmem, size = 0x4000, scoped, tag = 'output window, operand 0']
    #allocation5 [shape = 's32[2]{0}', space=sflag, size = 0x8, scoped, tag = 'scoped memory for _lambda_.3']
    %21 = vsyncpa [#allocation5], 0
    %s22 = scalar_lea.sflag [#allocation5], 1
    %23 = vsyncpa %s22, 0
    loop: start=0, step=1, limit=6
    $region2: #{_lambda_.3} parent=1 // loop_pre_header
      _
    $region3: #{_lambda_.3} parent=1 // loop_header
      %s25 = sphi 0, %s29
      %p26 = scmp.ge.s32.totalorder %s25, 6
      %s32 = sphi 0, %s44
      %s33 = sphi 0, %s40
      %s34 = sphi 0, %s32
      %s35 = sphi 0, %s33
      %s36 = sphi 0, %s34
      %s37 = sphi 0, %s35
      %s49 = sphi 0, %s51
      %s52 = sphi 0, %s49
      %s53 = sphi 0, %s52
      %s69 = sphi 0, %s53
      %s77 = sphi 0, %s79
      %s80 = sphi 0, %s77
      %s81 = sphi 0, %s80
      %s97 = sphi 0, %s81
      %s105 = sphi 0, %s107
      %s108 = sphi 0, %s105
      %s109 = sphi 0, %s108
      %s125 = sphi 0, %s109
      %s131 = sphi 0, %s133
      %s134 = sphi 0, %s131
      %s135 = sphi 0, %s134
      %s151 = sphi 0, %s135
      %s157 = sphi 0, %s159
      %s160 = sphi 0, %s157
      %s161 = sphi 0, %s160
      %s177 = sphi 0, %s161
      %s181 = sphi 0, %s181
      %s183 = sphi 0, %s181
      %s184 = sphi 0, %s183
      %s198 = sphi 0, %s184
      %s202 = sphi 0, %s202
      %s204 = sphi 0, %s202
      %s205 = sphi 0, %s204
      %s219 = sphi 0, %s205
      %s223 = sphi 0, %s223
      %s225 = sphi 0, %s223
      %s226 = sphi 0, %s225
      %s240 = sphi 0, %s226
      %s244 = sphi 0, %s244
      %s246 = sphi 0, %s244
      %s247 = sphi 0, %s246
      %s261 = sphi 0, %s247
      %s265 = sphi 0, %s265
      %s267 = sphi 0, %s265
      %s268 = sphi 0, %s267
      %s282 = sphi 0, %s268
      %s286 = sphi 0, %s286
      %s288 = sphi 0, %s286
      %s289 = sphi 0, %s288
      %s303 = sphi 0, %s289
      %s307 = sphi 0, %s307
      %s309 = sphi 0, %s307
      %s310 = sphi 0, %s309
      %s324 = sphi 0, %s310
      %s328 = sphi 0, %s328
      %s330 = sphi 0, %s328
      %s331 = sphi 0, %s330
      %s345 = sphi 0, %s331
      %s349 = sphi 0, %s349
      %s351 = sphi 0, %s349
      %s352 = sphi 0, %s351
      %s366 = sphi 0, %s352
      %s370 = sphi 0, %s370
      %s372 = sphi 0, %s370
      %s373 = sphi 0, %s372
      %s387 = sphi 0, %s373
      %s391 = sphi 0, %s391
      %s393 = sphi 0, %s391
      %s394 = sphi 0, %s393
      %s408 = sphi 0, %s394
      %s416 = sphi 0, %s418
      %s419 = sphi 0, %s416
      %s420 = sphi 0, %s419
      %s436 = sphi 0, %s420
    $region4: #{_lambda_.3} parent=1 // loop_header_branch
      %28 = sbr.rel (%p26) target = $region8
    $region5: #{_lambda_.3} parent=1 // loop_body
      %s30 = ssub.s32 %s25, 1
      %s31 = ssub.s32 %s25, 2
      %s38 = sadd.s32 1, %s33
      %p39 = scmp.ge.s32.totalorder %s38, 2
      %s40 = scalar_select %p39, 0, %s38
      %s41 = sadd.s32 1, %s32
      %s42 = scalar_select %p39, %s41, %s32
      %p43 = scmp.ge.s32.totalorder %s42, 2
      %s44 = scalar_select %p43, 0, %s42
      %s45 = ssub.s32 %s32, %s44
      %s46 = ssub.s32 %s33, %s40
      %s47 = sor.u32 %s45, %s46
      %p48 = scmp.eq.s32.totalorder %s47, 0
      %s50 = sadd.s32 %s49, 1
      %s51 = scalar_select %p48, %s49, %s50
      %p54 = pneg %p48
      %p55 = scmp.eq.s32.totalorder %s25, 3
      %p56 = por %p54, %p55
      %p57 = scmp.ne.s32.totalorder %s49, %s52
      %p58 = scmp.eq.s32.totalorder %s25, 0
      %p59 = por %p57, %p58
      %p60 = scmp.ne.s32.totalorder %s49, %s52
      %p61 = scmp.eq.s32.totalorder %s30, 3
      %p62 = por %p60, %p61
      %p63 = scmp.ne.s32.totalorder %s52, %s53
      %p64 = scmp.eq.s32.totalorder %s30, 0
      %p65 = por %p63, %p64
      %p66 = scmp.ne.s32.totalorder %s52, %s53
      %p67 = scmp.eq.s32.totalorder %s31, 3
      %p68 = por %p66, %p67
      %p70 = scmp.ne.s32.totalorder %s53, %s69
      %p71 = scmp.eq.s32.totalorder %s31, 0
      %p72 = por %p70, %p71
      %s73 = ssub.s32 %s32, %s44
      %s74 = ssub.s32 %s33, %s40
      %s75 = sor.u32 %s73, %s74
      %p76 = scmp.eq.s32.totalorder %s75, 0
      %s78 = sadd.s32 %s77, 1
      %s79 = scalar_select %p76, %s77, %s78
      %p82 = pneg %p76
      %p83 = scmp.eq.s32.totalorder %s25, 3
      %p84 = por %p82, %p83
      %p85 = scmp.ne.s32.totalorder %s77, %s80
      %p86 = scmp.eq.s32.totalorder %s25, 0
      %p87 = por %p85, %p86
      %p88 = scmp.ne.s32.totalorder %s77, %s80
      %p89 = scmp.eq.s32.totalorder %s30, 3
      %p90 = por %p88, %p89
      %p91 = scmp.ne.s32.totalorder %s80, %s81
      %p92 = scmp.eq.s32.totalorder %s30, 0
      %p93 = por %p91, %p92
      %p94 = scmp.ne.s32.totalorder %s80, %s81
      %p95 = scmp.eq.s32.totalorder %s31, 3
      %p96 = por %p94, %p95
      %p98 = scmp.ne.s32.totalorder %s81, %s97
      %p99 = scmp.eq.s32.totalorder %s31, 0
      %p100 = por %p98, %p99
      %s101 = ssub.s32 %s32, %s44
      %s102 = ssub.s32 %s33, %s40
      %s103 = sor.u32 %s101, %s102
      %p104 = scmp.eq.s32.totalorder %s103, 0
      %s106 = sadd.s32 %s105, 1
      %s107 = scalar_select %p104, %s105, %s106
      %p110 = pneg %p104
      %p111 = scmp.eq.s32.totalorder %s25, 3
      %p112 = por %p110, %p111
      %p113 = scmp.ne.s32.totalorder %s105, %s108
      %p114 = scmp.eq.s32.totalorder %s25, 0
      %p115 = por %p113, %p114
      %p116 = scmp.ne.s32.totalorder %s105, %s108
      %p117 = scmp.eq.s32.totalorder %s30, 3
      %p118 = por %p116, %p117
      %p119 = scmp.ne.s32.totalorder %s108, %s109
      %p120 = scmp.eq.s32.totalorder %s30, 0
      %p121 = por %p119, %p120
      %p122 = scmp.ne.s32.totalorder %s108, %s109
      %p123 = scmp.eq.s32.totalorder %s31, 3
      %p124 = por %p122, %p123
      %p126 = scmp.ne.s32.totalorder %s109, %s125
      %p127 = scmp.eq.s32.totalorder %s31, 0
      %p128 = por %p126, %p127
      %s129 = ssub.s32 %s32, %s44
      %p130 = scmp.eq.s32.totalorder %s129, 0
      %s132 = sadd.s32 %s131, 1
      %s133 = scalar_select %p130, %s131, %s132
      %p136 = pneg %p130
      %p137 = scmp.eq.s32.totalorder %s25, 3
      %p138 = por %p136, %p137
      %p139 = scmp.ne.s32.totalorder %s131, %s134
      %p140 = scmp.eq.s32.totalorder %s25, 0
      %p141 = por %p139, %p140
      %p142 = scmp.ne.s32.totalorder %s131, %s134
      %p143 = scmp.eq.s32.totalorder %s30, 3
      %p144 = por %p142, %p143
      %p145 = scmp.ne.s32.totalorder %s134, %s135
      %p146 = scmp.eq.s32.totalorder %s30, 0
      %p147 = por %p145, %p146
      %p148 = scmp.ne.s32.totalorder %s134, %s135
      %p149 = scmp.eq.s32.totalorder %s31, 3
      %p150 = por %p148, %p149
      %p152 = scmp.ne.s32.totalorder %s135, %s151
      %p153 = scmp.eq.s32.totalorder %s31, 0
      %p154 = por %p152, %p153
      %s155 = ssub.s32 %s32, %s44
      %p156 = scmp.eq.s32.totalorder %s155, 0
      %s158 = sadd.s32 %s157, 1
      %s159 = scalar_select %p156, %s157, %s158
      %p162 = pneg %p156
      %p163 = scmp.eq.s32.totalorder %s25, 3
      %p164 = por %p162, %p163
      %p165 = scmp.ne.s32.totalorder %s157, %s160
      %p166 = scmp.eq.s32.totalorder %s25, 0
      %p167 = por %p165, %p166
      %p168 = scmp.ne.s32.totalorder %s157, %s160
      %p169 = scmp.eq.s32.totalorder %s30, 3
      %p170 = por %p168, %p169
      %p171 = scmp.ne.s32.totalorder %s160, %s161
      %p172 = scmp.eq.s32.totalorder %s30, 0
      %p173 = por %p171, %p172
      %p174 = scmp.ne.s32.totalorder %s160, %s161
      %p175 = scmp.eq.s32.totalorder %s31, 3
      %p176 = por %p174, %p175
      %p178 = scmp.ne.s32.totalorder %s161, %s177
      %p179 = scmp.eq.s32.totalorder %s31, 0
      %p180 = por %p178, %p179
      %s182 = sadd.s32 %s181, 1
      %p185 = scmp.eq.s32.totalorder %s25, 3
      %p186 = scmp.ne.s32.totalorder %s181, %s183
      %p187 = scmp.eq.s32.totalorder %s25, 0
      %p188 = por %p186, %p187
      %p189 = scmp.ne.s32.totalorder %s181, %s183
      %p190 = scmp.eq.s32.totalorder %s30, 3
      %p191 = por %p189, %p190
      %p192 = scmp.ne.s32.totalorder %s183, %s184
      %p193 = scmp.eq.s32.totalorder %s30, 0
      %p194 = por %p192, %p193
      %p195 = scmp.ne.s32.totalorder %s183, %s184
      %p196 = scmp.eq.s32.totalorder %s31, 3
      %p197 = por %p195, %p196
      %p199 = scmp.ne.s32.totalorder %s184, %s198
      %p200 = scmp.eq.s32.totalorder %s31, 0
      %p201 = por %p199, %p200
      %s203 = sadd.s32 %s202, 1
      %p206 = scmp.eq.s32.totalorder %s25, 3
      %p207 = scmp.ne.s32.totalorder %s202, %s204
      %p208 = scmp.eq.s32.totalorder %s25, 0
      %p209 = por %p207, %p208
      %p210 = scmp.ne.s32.totalorder %s202, %s204
      %p211 = scmp.eq.s32.totalorder %s30, 3
      %p212 = por %p210, %p211
      %p213 = scmp.ne.s32.totalorder %s204, %s205
      %p214 = scmp.eq.s32.totalorder %s30, 0
      %p215 = por %p213, %p214
      %p216 = scmp.ne.s32.totalorder %s204, %s205
      %p217 = scmp.eq.s32.totalorder %s31, 3
      %p218 = por %p216, %p217
      %p220 = scmp.ne.s32.totalorder %s205, %s219
      %p221 = scmp.eq.s32.totalorder %s31, 0
      %p222 = por %p220, %p221
      %s224 = sadd.s32 %s223, 1
      %p227 = scmp.eq.s32.totalorder %s25, 3
      %p228 = scmp.ne.s32.totalorder %s223, %s225
      %p229 = scmp.eq.s32.totalorder %s25, 0
      %p230 = por %p228, %p229
      %p231 = scmp.ne.s32.totalorder %s223, %s225
      %p232 = scmp.eq.s32.totalorder %s30, 3
      %p233 = por %p231, %p232
      %p234 = scmp.ne.s32.totalorder %s225, %s226
      %p235 = scmp.eq.s32.totalorder %s30, 0
      %p236 = por %p234, %p235
      %p237 = scmp.ne.s32.totalorder %s225, %s226
      %p238 = scmp.eq.s32.totalorder %s31, 3
      %p239 = por %p237, %p238
      %p241 = scmp.ne.s32.totalorder %s226, %s240
      %p242 = scmp.eq.s32.totalorder %s31, 0
      %p243 = por %p241, %p242
      %s245 = sadd.s32 %s244, 1
      %p248 = scmp.eq.s32.totalorder %s25, 3
      %p249 = scmp.ne.s32.totalorder %s244, %s246
      %p250 = scmp.eq.s32.totalorder %s25, 0
      %p251 = por %p249, %p250
      %p252 = scmp.ne.s32.totalorder %s244, %s246
      %p253 = scmp.eq.s32.totalorder %s30, 3
      %p254 = por %p252, %p253
      %p255 = scmp.ne.s32.totalorder %s246, %s247
      %p256 = scmp.eq.s32.totalorder %s30, 0
      %p257 = por %p255, %p256
      %p258 = scmp.ne.s32.totalorder %s246, %s247
      %p259 = scmp.eq.s32.totalorder %s31, 3
      %p260 = por %p258, %p259
      %p262 = scmp.ne.s32.totalorder %s247, %s261
      %p263 = scmp.eq.s32.totalorder %s31, 0
      %p264 = por %p262, %p263
      %s266 = sadd.s32 %s265, 1
      %p269 = scmp.eq.s32.totalorder %s25, 3
      %p270 = scmp.ne.s32.totalorder %s265, %s267
      %p271 = scmp.eq.s32.totalorder %s25, 0
      %p272 = por %p270, %p271
      %p273 = scmp.ne.s32.totalorder %s265, %s267
      %p274 = scmp.eq.s32.totalorder %s30, 3
      %p275 = por %p273, %p274
      %p276 = scmp.ne.s32.totalorder %s267, %s268
      %p277 = scmp.eq.s32.totalorder %s30, 0
      %p278 = por %p276, %p277
      %p279 = scmp.ne.s32.totalorder %s267, %s268
      %p280 = scmp.eq.s32.totalorder %s31, 3
      %p281 = por %p279, %p280
      %p283 = scmp.ne.s32.totalorder %s268, %s282
      %p284 = scmp.eq.s32.totalorder %s31, 0
      %p285 = por %p283, %p284
      %s287 = sadd.s32 %s286, 1
      %p290 = scmp.eq.s32.totalorder %s25, 3
      %p291 = scmp.ne.s32.totalorder %s286, %s288
      %p292 = scmp.eq.s32.totalorder %s25, 0
      %p293 = por %p291, %p292
      %p294 = scmp.ne.s32.totalorder %s286, %s288
      %p295 = scmp.eq.s32.totalorder %s30, 3
      %p296 = por %p294, %p295
      %p297 = scmp.ne.s32.totalorder %s288, %s289
      %p298 = scmp.eq.s32.totalorder %s30, 0
      %p299 = por %p297, %p298
      %p300 = scmp.ne.s32.totalorder %s288, %s289
      %p301 = scmp.eq.s32.totalorder %s31, 3
      %p302 = por %p300, %p301
      %p304 = scmp.ne.s32.totalorder %s289, %s303
      %p305 = scmp.eq.s32.totalorder %s31, 0
      %p306 = por %p304, %p305
      %s308 = sadd.s32 %s307, 1
      %p311 = scmp.eq.s32.totalorder %s25, 3
      %p312 = scmp.ne.s32.totalorder %s307, %s309
      %p313 = scmp.eq.s32.totalorder %s25, 0
      %p314 = por %p312, %p313
      %p315 = scmp.ne.s32.totalorder %s307, %s309
      %p316 = scmp.eq.s32.totalorder %s30, 3
      %p317 = por %p315, %p316
      %p318 = scmp.ne.s32.totalorder %s309, %s310
      %p319 = scmp.eq.s32.totalorder %s30, 0
      %p320 = por %p318, %p319
      %p321 = scmp.ne.s32.totalorder %s309, %s310
      %p322 = scmp.eq.s32.totalorder %s31, 3
      %p323 = por %p321, %p322
      %p325 = scmp.ne.s32.totalorder %s310, %s324
      %p326 = scmp.eq.s32.totalorder %s31, 0
      %p327 = por %p325, %p326
      %s329 = sadd.s32 %s328, 1
      %p332 = scmp.eq.s32.totalorder %s25, 3
      %p333 = scmp.ne.s32.totalorder %s328, %s330
      %p334 = scmp.eq.s32.totalorder %s25, 0
      %p335 = por %p333, %p334
      %p336 = scmp.ne.s32.totalorder %s328, %s330
      %p337 = scmp.eq.s32.totalorder %s30, 3
      %p338 = por %p336, %p337
      %p339 = scmp.ne.s32.totalorder %s330, %s331
      %p340 = scmp.eq.s32.totalorder %s30, 0
      %p341 = por %p339, %p340
      %p342 = scmp.ne.s32.totalorder %s330, %s331
      %p343 = scmp.eq.s32.totalorder %s31, 3
      %p344 = por %p342, %p343
      %p346 = scmp.ne.s32.totalorder %s331, %s345
      %p347 = scmp.eq.s32.totalorder %s31, 0
      %p348 = por %p346, %p347
      %s350 = sadd.s32 %s349, 1
      %p353 = scmp.eq.s32.totalorder %s25, 3
      %p354 = scmp.ne.s32.totalorder %s349, %s351
      %p355 = scmp.eq.s32.totalorder %s25, 0
      %p356 = por %p354, %p355
      %p357 = scmp.ne.s32.totalorder %s349, %s351
      %p358 = scmp.eq.s32.totalorder %s30, 3
      %p359 = por %p357, %p358
      %p360 = scmp.ne.s32.totalorder %s351, %s352
      %p361 = scmp.eq.s32.totalorder %s30, 0
      %p362 = por %p360, %p361
      %p363 = scmp.ne.s32.totalorder %s351, %s352
      %p364 = scmp.eq.s32.totalorder %s31, 3
      %p365 = por %p363, %p364
      %p367 = scmp.ne.s32.totalorder %s352, %s366
      %p368 = scmp.eq.s32.totalorder %s31, 0
      %p369 = por %p367, %p368
      %s371 = sadd.s32 %s370, 1
      %p374 = scmp.eq.s32.totalorder %s25, 3
      %p375 = scmp.ne.s32.totalorder %s370, %s372
      %p376 = scmp.eq.s32.totalorder %s25, 0
      %p377 = por %p375, %p376
      %p378 = scmp.ne.s32.totalorder %s370, %s372
      %p379 = scmp.eq.s32.totalorder %s30, 3
      %p380 = por %p378, %p379
      %p381 = scmp.ne.s32.totalorder %s372, %s373
      %p382 = scmp.eq.s32.totalorder %s30, 0
      %p383 = por %p381, %p382
      %p384 = scmp.ne.s32.totalorder %s372, %s373
      %p385 = scmp.eq.s32.totalorder %s31, 3
      %p386 = por %p384, %p385
      %p388 = scmp.ne.s32.totalorder %s373, %s387
      %p389 = scmp.eq.s32.totalorder %s31, 0
      %p390 = por %p388, %p389
      %s392 = sadd.s32 %s391, 1
      %p395 = scmp.eq.s32.totalorder %s25, 3
      %p396 = scmp.ne.s32.totalorder %s391, %s393
      %p397 = scmp.eq.s32.totalorder %s25, 0
      %p398 = por %p396, %p397
      %p399 = scmp.ne.s32.totalorder %s391, %s393
      %p400 = scmp.eq.s32.totalorder %s30, 3
      %p401 = por %p399, %p400
      %p402 = scmp.ne.s32.totalorder %s393, %s394
      %p403 = scmp.eq.s32.totalorder %s30, 0
      %p404 = por %p402, %p403
      %p405 = scmp.ne.s32.totalorder %s393, %s394
      %p406 = scmp.eq.s32.totalorder %s31, 3
      %p407 = por %p405, %p406
      %p409 = scmp.ne.s32.totalorder %s394, %s408
      %p410 = scmp.eq.s32.totalorder %s31, 0
      %p411 = por %p409, %p410
      %s412 = ssub.s32 %s32, %s44
      %s413 = ssub.s32 %s33, %s40
      %s414 = sor.u32 %s412, %s413
      %p415 = scmp.eq.s32.totalorder %s414, 0
      %s417 = sadd.s32 %s416, 1
      %s418 = scalar_select %p415, %s416, %s417
      %p421 = pneg %p415
      %p422 = scmp.eq.s32.totalorder %s25, 3
      %p423 = por %p421, %p422
      %p424 = scmp.ne.s32.totalorder %s416, %s419
      %p425 = scmp.eq.s32.totalorder %s25, 0
      %p426 = por %p424, %p425
      %p427 = scmp.ne.s32.totalorder %s416, %s419
      %p428 = scmp.eq.s32.totalorder %s30, 3
      %p429 = por %p427, %p428
      %p430 = scmp.ne.s32.totalorder %s419, %s420
      %p431 = scmp.eq.s32.totalorder %s30, 0
      %p432 = por %p430, %p431
      %p433 = scmp.ne.s32.totalorder %s419, %s420
      %p434 = scmp.eq.s32.totalorder %s31, 3
      %p435 = por %p433, %p434
      %p437 = scmp.ne.s32.totalorder %s420, %s436
      %p438 = scmp.eq.s32.totalorder %s31, 0
      %p439 = por %p437, %p438
      %p440 = scmp.le.s32.totalorder 1, %s25
      %p441 = scmp.lt.s32.totalorder %s25, 5
      %p442 = pnand %p440, %p441
      %p443 = pneg %p442
      // Predicated region
      $region9: #{_lambda_.3} parent=5 // pred_check
        _
      $region10: #{_lambda_.3} parent=5 // pred_check_branch
        %445 = sbr.rel (%p442) target = $region12
      $region11: #{_lambda_.3} parent=5 // pred_region
        %s446 = ssub.s32 %s25, 1
        // Predicated region
        $region13: #{_lambda_.3} parent=11 // pred_check
          %p447 = pneg %p194
        $region14: #{_lambda_.3} parent=11 // pred_check_branch
          %449 = sbr.rel (%p447) target = $region16
        $region15: #{_lambda_.3} parent=11 // pred_region
          _
        $region16: #{_lambda_.3} parent=11 // pred_fallthru
          _
        // Predicated region
        $region17: #{_lambda_.3} parent=11 // pred_check
          %p450 = pneg %p215
        $region18: #{_lambda_.3} parent=11 // pred_check_branch
          %452 = sbr.rel (%p450) target = $region20
        $region19: #{_lambda_.3} parent=11 // pred_region
          _
        $region20: #{_lambda_.3} parent=11 // pred_fallthru
          _
        // Predicated region
        $region21: #{_lambda_.3} parent=11 // pred_check
          %p453 = pneg %p236
        $region22: #{_lambda_.3} parent=11 // pred_check_branch
          %455 = sbr.rel (%p453) target = $region24
        $region23: #{_lambda_.3} parent=11 // pred_region
          _
        $region24: #{_lambda_.3} parent=11 // pred_fallthru
          _
        // Predicated region
        $region25: #{_lambda_.3} parent=11 // pred_check
          %p456 = pneg %p257
        $region26: #{_lambda_.3} parent=11 // pred_check_branch
          %458 = sbr.rel (%p456) target = $region28
        $region27: #{_lambda_.3} parent=11 // pred_region
          _
        $region28: #{_lambda_.3} parent=11 // pred_fallthru
          _
        // Predicated region
        $region29: #{_lambda_.3} parent=11 // pred_check
          %p459 = pneg %p278
        $region30: #{_lambda_.3} parent=11 // pred_check_branch
          %461 = sbr.rel (%p459) target = $region32
        $region31: #{_lambda_.3} parent=11 // pred_region
          _
        $region32: #{_lambda_.3} parent=11 // pred_fallthru
          _
        // Predicated region
        $region33: #{_lambda_.3} parent=11 // pred_check
          %p462 = pneg %p299
        $region34: #{_lambda_.3} parent=11 // pred_check_branch
          %464 = sbr.rel (%p462) target = $region36
        $region35: #{_lambda_.3} parent=11 // pred_region
          _
        $region36: #{_lambda_.3} parent=11 // pred_fallthru
          _
        // Predicated region
        $region37: #{_lambda_.3} parent=11 // pred_check
          %p465 = pneg %p320
        $region38: #{_lambda_.3} parent=11 // pred_check_branch
          %467 = sbr.rel (%p465) target = $region40
        $region39: #{_lambda_.3} parent=11 // pred_region
          _
        $region40: #{_lambda_.3} parent=11 // pred_fallthru
          _
        // Predicated region
        $region41: #{_lambda_.3} parent=11 // pred_check
          %p468 = pneg %p341
        $region42: #{_lambda_.3} parent=11 // pred_check_branch
          %470 = sbr.rel (%p468) target = $region44
        $region43: #{_lambda_.3} parent=11 // pred_region
          _
        $region44: #{_lambda_.3} parent=11 // pred_fallthru
          _
        // Predicated region
        $region45: #{_lambda_.3} parent=11 // pred_check
          %p471 = pneg %p362
        $region46: #{_lambda_.3} parent=11 // pred_check_branch
          %473 = sbr.rel (%p471) target = $region48
        $region47: #{_lambda_.3} parent=11 // pred_region
          _
        $region48: #{_lambda_.3} parent=11 // pred_fallthru
          _
        // Predicated region
        $region49: #{_lambda_.3} parent=11 // pred_check
          %p474 = pneg %p383
        $region50: #{_lambda_.3} parent=11 // pred_check_branch
          %476 = sbr.rel (%p474) target = $region52
        $region51: #{_lambda_.3} parent=11 // pred_region
          _
        $region52: #{_lambda_.3} parent=11 // pred_fallthru
          _
        // Predicated region
        $region53: #{_lambda_.3} parent=11 // pred_check
          %p477 = pneg %p404
        $region54: #{_lambda_.3} parent=11 // pred_check_branch
          %479 = sbr.rel (%p477) target = $region56
        $region55: #{_lambda_.3} parent=11 // pred_region
          _
        $region56: #{_lambda_.3} parent=11 // pred_fallthru
          _
      $region12: #{_lambda_.3} parent=5 // pred_fallthru
        _
      %p480 = scmp.lt.s32.totalorder %s25, 4
      // Predicated region
      $region57: #{_lambda_.3} parent=5 // pred_check
        %p481 = pneg %p480
      $region58: #{_lambda_.3} parent=5 // pred_check_branch
        %483 = sbr.rel (%p481) target = $region60
      $region59: #{_lambda_.3} parent=5 // pred_region
        // Predicated region
        $region61: #{_lambda_.3} parent=59 // pred_check
          %p484 = pneg %p59
        $region62: #{_lambda_.3} parent=59 // pred_check_branch
          %486 = sbr.rel (%p484) target = $region64
        $region63: #{_lambda_.3} parent=59 // pred_region
          %s487 = sand.u32 %s49, 1
          %s488 = sand.u32 %s49, 1
          %s489 = smul.addr %s488, 32
          %s490 = scalar_lea.vmem [#allocation2], %s489
          %s491 = smul.u32 2, %s33
          %s492 = smul.addr %s32, 16
          %s493 = sadd.s32 %s491, %s492
          %s494 = smul.addr %s493, 4
          %s495 = scalar_lea.vmem %s0, %s494
          // Predicated region
          $region65: #{_lambda_.3} parent=63 // pred_check
            _
          $region66: #{_lambda_.3} parent=63 // pred_check_branch
            %497 = sbr.rel (0) target = $region68
          $region67: #{_lambda_.3} parent=63 // pred_region
            // Predicated region
            $region69: #{_lambda_.3} parent=67 // pred_check
              _
            $region70: #{_lambda_.3} parent=67 // pred_check_branch
              %499 = sbr.rel (0) target = $region72
            $region71: #{_lambda_.3} parent=67 // pred_region
              // Predicated region
              $region84: #{_lambda_.3} parent=71 // pred_check
                _
              $region85: #{_lambda_.3} parent=71 // pred_check_branch
                %521 = sbr.rel (0) target = $region87
              $region86: #{_lambda_.3} parent=71 // pred_region
                loop: start=0, step=1, limit=1
                $region88: #{_lambda_.3} parent=86 // loop_pre_header
                  _
                $region89: #{_lambda_.3} parent=86 // loop_header
                  %s523 = sphi 0, %s527
                  %p524 = scmp.ge.s32.totalorder %s523, 1
                  %s528 = sphi %s495, %s495
                  %s529 = sphi %s490, %s490
                $region90: #{_lambda_.3} parent=86 // loop_header_branch
                  %526 = sbr.rel (%p524) target = $region94
                $region91: #{_lambda_.3} parent=86 // loop_body
                  %v530 = vld [vmem:[%s528] sm:$0xff]
                  %531 = vst [vmem:[%s529] sm:$0xff] %v530
                  %v532 = vld [vmem:[%s528 + $0x10] sm:$0xff]
                  %533 = vst [vmem:[%s529 + $0x8] sm:$0xff] %v532
                  %v534 = vld [vmem:[%s528 + $0x20] sm:$0xff]
                  %535 = vst [vmem:[%s529 + $0x10] sm:$0xff] %v534
                  %v536 = vld [vmem:[%s528 + $0x30] sm:$0xff]
                  %537 = vst [vmem:[%s529 + $0x18] sm:$0xff] %v536
                $region92: #{_lambda_.3} parent=86 // loop_footer
                  %s527 = sadd.s32 1, %s523
                $region93: #{_lambda_.3} parent=86 // loop_footer_branch
                  %522 = sbr.rel target = $region89
                $region94: #{_lambda_.3} parent=86 // loop_exit
                  _
              $region87: #{_lambda_.3} parent=71 // pred_fallthru
                _
              // Predicated region
              $region95: #{_lambda_.3} parent=71 // pred_check
                _
              $region96: #{_lambda_.3} parent=71 // pred_check_branch
                %539 = sbr.rel target = $region98
              $region97: #{_lambda_.3} parent=71 // pred_region
                _
              $region98: #{_lambda_.3} parent=71 // pred_fallthru
                _
            $region72: #{_lambda_.3} parent=67 // pred_fallthru
              _
            // Predicated region
            $region73: #{_lambda_.3} parent=67 // pred_check
              _
            $region74: #{_lambda_.3} parent=67 // pred_check_branch
              %501 = sbr.rel target = $region76
            $region75: #{_lambda_.3} parent=67 // pred_region
              %s503 = ssub.s32 256, 1
              loop: start=0, step=1, limit=1
              $region77: #{_lambda_.3} parent=75 // loop_pre_header
                _
              $region78: #{_lambda_.3} parent=75 // loop_header
                %s505 = sphi 0, %s509
                %p506 = scmp.ge.s32.totalorder %s505, 1
                %s510 = sphi %s495, %s495
                %s511 = sphi %s490, %s490
              $region79: #{_lambda_.3} parent=75 // loop_header_branch
                %508 = sbr.rel (%p506) target = $region83
              $region80: #{_lambda_.3} parent=75 // loop_body
                %v512 = vld [vmem:[%s510] sm:%s503]
                %513 = vst [vmem:[%s511] sm:%s503] %v512
                %v514 = vld [vmem:[%s510 + $0x10] sm:%s503]
                %515 = vst [vmem:[%s511 + $0x8] sm:%s503] %v514
                %v516 = vld [vmem:[%s510 + $0x20] sm:%s503]
                %517 = vst [vmem:[%s511 + $0x10] sm:%s503] %v516
                %v518 = vld [vmem:[%s510 + $0x30] sm:%s503]
                %519 = vst [vmem:[%s511 + $0x18] sm:%s503] %v518
              $region81: #{_lambda_.3} parent=75 // loop_footer
                %s509 = sadd.s32 1, %s505
              $region82: #{_lambda_.3} parent=75 // loop_footer_branch
                %504 = sbr.rel target = $region78
              $region83: #{_lambda_.3} parent=75 // loop_exit
                _
            $region76: #{_lambda_.3} parent=67 // pred_fallthru
              _
          $region68: #{_lambda_.3} parent=63 // pred_fallthru
            _
          %540 = vnop
        $region64: #{_lambda_.3} parent=59 // pred_fallthru
          _
        // Predicated region
        $region99: #{_lambda_.3} parent=59 // pred_check
          %p541 = pneg %p87
        $region100: #{_lambda_.3} parent=59 // pred_check_branch
          %543 = sbr.rel (%p541) target = $region102
        $region101: #{_lambda_.3} parent=59 // pred_region
          %s544 = sand.u32 %s77, 1
          %s545 = sand.u32 %s77, 1
          %s546 = smul.addr %s545, 32
          %s547 = scalar_lea.vmem [#allocation3], %s546
          %s548 = smul.u32 2, %s33
          %s549 = smul.addr %s32, 16
          %s550 = sadd.s32 %s548, %s549
          %s551 = smul.addr %s550, 4
          %s552 = scalar_lea.vmem %s1, %s551
          // Predicated region
          $region103: #{_lambda_.3} parent=101 // pred_check
            _
          $region104: #{_lambda_.3} parent=101 // pred_check_branch
            %554 = sbr.rel (0) target = $region106
          $region105: #{_lambda_.3} parent=101 // pred_region
            // Predicated region
            $region107: #{_lambda_.3} parent=105 // pred_check
              _
            $region108: #{_lambda_.3} parent=105 // pred_check_branch
              %556 = sbr.rel (0) target = $region110
            $region109: #{_lambda_.3} parent=105 // pred_region
              // Predicated region
              $region122: #{_lambda_.3} parent=109 // pred_check
                _
              $region123: #{_lambda_.3} parent=109 // pred_check_branch
                %578 = sbr.rel (0) target = $region125
              $region124: #{_lambda_.3} parent=109 // pred_region
                loop: start=0, step=1, limit=1
                $region126: #{_lambda_.3} parent=124 // loop_pre_header
                  _
                $region127: #{_lambda_.3} parent=124 // loop_header
                  %s580 = sphi 0, %s584
                  %p581 = scmp.ge.s32.totalorder %s580, 1
                  %s585 = sphi %s552, %s552
                  %s586 = sphi %s547, %s547
                $region128: #{_lambda_.3} parent=124 // loop_header_branch
                  %583 = sbr.rel (%p581) target = $region132
                $region129: #{_lambda_.3} parent=124 // loop_body
                  %v587 = vld [vmem:[%s585] sm:$0xff]
                  %588 = vst [vmem:[%s586] sm:$0xff] %v587
                  %v589 = vld [vmem:[%s585 + $0x10] sm:$0xff]
                  %590 = vst [vmem:[%s586 + $0x8] sm:$0xff] %v589
                  %v591 = vld [vmem:[%s585 + $0x20] sm:$0xff]
                  %592 = vst [vmem:[%s586 + $0x10] sm:$0xff] %v591
                  %v593 = vld [vmem:[%s585 + $0x30] sm:$0xff]
                  %594 = vst [vmem:[%s586 + $0x18] sm:$0xff] %v593
                $region130: #{_lambda_.3} parent=124 // loop_footer
                  %s584 = sadd.s32 1, %s580
                $region131: #{_lambda_.3} parent=124 // loop_footer_branch
                  %579 = sbr.rel target = $region127
                $region132: #{_lambda_.3} parent=124 // loop_exit
                  _
              $region125: #{_lambda_.3} parent=109 // pred_fallthru
                _
              // Predicated region
              $region133: #{_lambda_.3} parent=109 // pred_check
                _
              $region134: #{_lambda_.3} parent=109 // pred_check_branch
                %596 = sbr.rel target = $region136
              $region135: #{_lambda_.3} parent=109 // pred_region
                _
              $region136: #{_lambda_.3} parent=109 // pred_fallthru
                _
            $region110: #{_lambda_.3} parent=105 // pred_fallthru
              _
            // Predicated region
            $region111: #{_lambda_.3} parent=105 // pred_check
              _
            $region112: #{_lambda_.3} parent=105 // pred_check_branch
              %558 = sbr.rel target = $region114
            $region113: #{_lambda_.3} parent=105 // pred_region
              %s560 = ssub.s32 256, 1
              loop: start=0, step=1, limit=1
              $region115: #{_lambda_.3} parent=113 // loop_pre_header
                _
              $region116: #{_lambda_.3} parent=113 // loop_header
                %s562 = sphi 0, %s566
                %p563 = scmp.ge.s32.totalorder %s562, 1
                %s567 = sphi %s552, %s552
                %s568 = sphi %s547, %s547
              $region117: #{_lambda_.3} parent=113 // loop_header_branch
                %565 = sbr.rel (%p563) target = $region121
              $region118: #{_lambda_.3} parent=113 // loop_body
                %v569 = vld [vmem:[%s567] sm:%s560]
                %570 = vst [vmem:[%s568] sm:%s560] %v569
                %v571 = vld [vmem:[%s567 + $0x10] sm:%s560]
                %572 = vst [vmem:[%s568 + $0x8] sm:%s560] %v571
                %v573 = vld [vmem:[%s567 + $0x20] sm:%s560]
                %574 = vst [vmem:[%s568 + $0x10] sm:%s560] %v573
                %v575 = vld [vmem:[%s567 + $0x30] sm:%s560]
                %576 = vst [vmem:[%s568 + $0x18] sm:%s560] %v575
              $region119: #{_lambda_.3} parent=113 // loop_footer
                %s566 = sadd.s32 1, %s562
              $region120: #{_lambda_.3} parent=113 // loop_footer_branch
                %561 = sbr.rel target = $region116
              $region121: #{_lambda_.3} parent=113 // loop_exit
                _
            $region114: #{_lambda_.3} parent=105 // pred_fallthru
              _
          $region106: #{_lambda_.3} parent=101 // pred_fallthru
            _
          %597 = vnop
        $region102: #{_lambda_.3} parent=59 // pred_fallthru
          _
        // Predicated region
        $region137: #{_lambda_.3} parent=59 // pred_check
          %p598 = pneg %p115
        $region138: #{_lambda_.3} parent=59 // pred_check_branch
          %600 = sbr.rel (%p598) target = $region140
        $region139: #{_lambda_.3} parent=59 // pred_region
          %s601 = smul.u32 2, %s33
          %p602 = scmp.lt.s32.totalorder %s32, 1
          %s603 = scalar_select %p602, %s32, 1
          %p604 = scmp.lt.s32.totalorder %s601, 3
          %s605 = scalar_select %p604, %s601, 3
          %s606 = smul.addr %s603, 4
          %s607 = sadd.s32 %s605, %s606
          %s608 = scalar_lea.vmem %s2, %s607
          %s609 = smul.u32 2, %s33
        $region140: #{_lambda_.3} parent=59 // pred_fallthru
          _
        // Predicated region
        $region141: #{_lambda_.3} parent=59 // pred_check
          %p610 = pneg %p141
        $region142: #{_lambda_.3} parent=59 // pred_check_branch
          %612 = sbr.rel (%p610) target = $region144
        $region143: #{_lambda_.3} parent=59 // pred_region
          %p613 = scmp.lt.s32.totalorder %s32, 1
          %s614 = scalar_select %p613, %s32, 1
          %s615 = smul.addr %s614, 4
          %s616 = smul.addr %s615, 8
          %s617 = scalar_lea.vmem %s3, %s616
        $region144: #{_lambda_.3} parent=59 // pred_fallthru
          _
        // Predicated region
        $region145: #{_lambda_.3} parent=59 // pred_check
          %p618 = pneg %p167
        $region146: #{_lambda_.3} parent=59 // pred_check_branch
          %620 = sbr.rel (%p618) target = $region148
        $region147: #{_lambda_.3} parent=59 // pred_region
          %p621 = scmp.lt.s32.totalorder %s32, 1
          %s622 = scalar_select %p621, %s32, 1
          %s623 = smul.addr %s622, 4
          %s624 = smul.addr %s623, 8
          %s625 = scalar_lea.vmem %s4, %s624
        $region148: #{_lambda_.3} parent=59 // pred_fallthru
          _
      $region60: #{_lambda_.3} parent=5 // pred_fallthru
        _
      %p626 = scmp.le.s32.totalorder 1, %s25
      %p627 = scmp.lt.s32.totalorder %s25, 5
      %p628 = pnand %p626, %p627
      %p629 = pneg %p628
      // Predicated region
      $region149: #{_lambda_.3} parent=5 // pred_check
        _
      $region150: #{_lambda_.3} parent=5 // pred_check_branch
        %631 = sbr.rel (%p628) target = $region152
      $region151: #{_lambda_.3} parent=5 // pred_region
        %s632 = ssub.s32 %s25, 1
        %s633 = sand.u32 %s52, 1
        %s634 = sand.u32 %s52, 1
        %s635 = smul.addr %s634, 32
        %s636 = scalar_lea.vmem [#allocation2], %s635
        // Predicated region
        $region153: #{_lambda_.3} parent=151 // pred_check
          %p637 = pneg %p65
        $region154: #{_lambda_.3} parent=151 // pred_check_branch
          %639 = sbr.rel (%p637) target = $region156
        $region155: #{_lambda_.3} parent=151 // pred_region
          _
        $region156: #{_lambda_.3} parent=151 // pred_fallthru
          _
        %s640 = sand.u32 %s80, 1
        %s641 = sand.u32 %s80, 1
        %s642 = smul.addr %s641, 32
        %s643 = scalar_lea.vmem [#allocation3], %s642
        // Predicated region
        $region157: #{_lambda_.3} parent=151 // pred_check
          %p644 = pneg %p93
        $region158: #{_lambda_.3} parent=151 // pred_check_branch
          %646 = sbr.rel (%p644) target = $region160
        $region159: #{_lambda_.3} parent=151 // pred_region
          _
        $region160: #{_lambda_.3} parent=151 // pred_fallthru
          _
        %s647 = sand.u32 %s52, 1
        %s648 = sand.u32 %s52, 1
        %s649 = smul.addr %s648, 32
        %s650 = scalar_lea.vmem [#allocation2], %s649
        %p651 = pneg %p65
        %p652 = pneg %p62
        %s653 = sand.u32 %s80, 1
        %s654 = sand.u32 %s80, 1
        %s655 = smul.addr %s654, 32
        %s656 = scalar_lea.vmem [#allocation3], %s655
        %p657 = pneg %p93
        %p658 = pneg %p90
        %s659 = smul.u32 2, %s35
        %p660 = scmp.lt.s32.totalorder %s34, 1
        %s661 = scalar_select %p660, %s34, 1
        %p662 = scmp.lt.s32.totalorder %s659, 3
        %s663 = scalar_select %p662, %s659, 3
        %s664 = smul.addr %s661, 4
        %s665 = sadd.s32 %s663, %s664
        %s666 = scalar_lea.vmem %s2, %s665
        %p667 = pneg %p121
        %p668 = pneg %p118
        %p669 = scmp.lt.s32.totalorder %s34, 1
        %s670 = scalar_select %p669, %s34, 1
        %s671 = smul.addr %s670, 4
        %s672 = smul.addr %s671, 8
        %s673 = scalar_lea.vmem %s3, %s672
        %p674 = pneg %p147
        %p675 = pneg %p144
        %p676 = scmp.lt.s32.totalorder %s34, 1
        %s677 = scalar_select %p676, %s34, 1
        %s678 = smul.addr %s677, 4
        %s679 = smul.addr %s678, 8
        %s680 = scalar_lea.vmem %s4, %s679
        %p681 = pneg %p173
        %p682 = pneg %p170
        %p683 = pneg %p194
        %p684 = pneg %p191
        %p685 = pneg %p215
        %p686 = pneg %p212
        %p687 = pneg %p236
        %p688 = pneg %p233
        %p689 = pneg %p257
        %p690 = pneg %p254
        %p691 = pneg %p278
        %p692 = pneg %p275
        %p693 = pneg %p299
        %p694 = pneg %p296
        %p695 = pneg %p320
        %p696 = pneg %p317
        %p697 = pneg %p341
        %p698 = pneg %p338
        %p699 = pneg %p362
        %p700 = pneg %p359
        %p701 = pneg %p383
        %p702 = pneg %p380
        %p703 = pneg %p404
        %p704 = pneg %p401
        %p705 = pneg %p432
        %p706 = pneg %p429
        %s707 = sand.u32 %s419, 1
        %s708 = scalar_lea.sflag [#allocation5], %s707
        %s709 = sand.u32 %s419, 1
        %s710 = smul.addr %s709, 16
        %s711 = scalar_lea.vmem [#allocation4], %s710
        %s712 = smul.u32 2, %s35
        %s713 = smul.u32 2, %s35
        %s714 = smul.u32 2, %s35
        %p715 = scmp.lt.s32.totalorder %s34, 1
        %s716 = scalar_select %p715, %s34, 1
        %p717 = scmp.lt.s32.totalorder %s714, 3
        %s718 = scalar_select %p717, %s714, 3
        %s719 = smul.addr %s716, 4
        %s720 = sadd.s32 %s718, %s719
        %s721 = scalar_lea.vmem %s2, %s720
        %s722 = smul.u32 2, %s35
        %p723 = scmp.lt.s32.totalorder %s34, 1
        %s724 = scalar_select %p723, %s34, 1
        %s725 = smul.addr %s724, 4
        %s726 = smul.addr %s725, 8
        %s727 = scalar_lea.vmem %s3, %s726
        %p728 = scmp.lt.s32.totalorder %s34, 1
        %s729 = scalar_select %p728, %s34, 1
        %s730 = smul.addr %s729, 4
        %s731 = smul.addr %s730, 8
        %s732 = scalar_lea.vmem %s4, %s731
        %s733 = smul.u32 2, %s35
        %v734 = vld [vmem:[%s636] sm:$0xff]
        %v735 = vld [vmem:[%s636 + $0x8] sm:$0xff]
        %v736 = vld [vmem:[%s636 + $0x10] sm:$0xff]
        %v737 = vld [vmem:[%s636 + $0x18] sm:$0xff]
        %v738 = vunpack.c.l.bf16 %v734
        %v739 = vunpack.c.h.bf16 %v734
        %v740 = vunpack.c.l.bf16 %v735
        %v741 = vunpack.c.h.bf16 %v735
        %v742 = vunpack.c.l.bf16 %v736
        %v743 = vunpack.c.h.bf16 %v736
        %v744 = vunpack.c.l.bf16 %v737
        %v745 = vunpack.c.h.bf16 %v737
        %v746 = vld [vmem:[%s643] sm:$0xff]
        %v747 = vld [vmem:[%s643 + $0x8] sm:$0xff]
        %v748 = vld [vmem:[%s643 + $0x10] sm:$0xff]
        %v749 = vld [vmem:[%s643 + $0x18] sm:$0xff]
        %v750 = vunpack.c.l.bf16 %v746
        %v751 = vunpack.c.h.bf16 %v746
        %v752 = vunpack.c.l.bf16 %v747
        %v753 = vunpack.c.h.bf16 %v747
        %v754 = vunpack.c.l.bf16 %v748
        %v755 = vunpack.c.h.bf16 %v748
        %v756 = vunpack.c.l.bf16 %v749
        %v757 = vunpack.c.h.bf16 %v749
        %v758 = vld [vmem:[%s721] sm:$0x3]
        %v759 = vld [vmem:[%s727] sm:$0xff]
        %v760 = vld [vmem:[%s727 + $0x8] sm:$0xff]
        %v761 = vld [vmem:[%s727 + $0x10] sm:$0xff]
        %v762 = vld [vmem:[%s727 + $0x18] sm:$0xff]
        %v763 = vld [vmem:[%s732] sm:$0xff]
        %v764 = vld [vmem:[%s732 + $0x8] sm:$0xff]
        %v765 = vld [vmem:[%s732 + $0x10] sm:$0xff]
        %v766 = vld [vmem:[%s732 + $0x18] sm:$0xff]
        %v767 = vmul.f32 %v763, %v763
        %v768 = vmul.f32 %v764, %v764
        %v769 = vmul.f32 %v765, %v765
        %v770 = vmul.f32 %v766, %v766
        %vm771 = vcmask 64512
        %v772 = vsel %vm771, %v767, 0.0
        %v773 = vsel %vm771, %v768, 0.0
        %v774 = vadd.f32 %v772, %v773
        %v775 = vsel %vm771, %v769, 0.0
        %v776 = vadd.f32 %v774, %v775
        %v777 = vsel %vm771, %v770, 0.0
        %v778 = vadd.f32 %v776, %v777
        %v779 = vrot.slane %v778, 4
        %v780 = vadd.f32 %v778, %v779
        %v781 = vrot.slane %v780, 2
        %v782 = vadd.f32 %v780, %v781
        %v783 = vrot.slane %v782, 1
        %v784 = vadd.f32 %v782, %v783
        %v785 = vrsqrt.pop %v784
        %v786 = vmul.f32 %v785, %v784
        %v787 = vmul.f32 %v786, %v785
        %v788 = vmul.f32 0.5, %v787
        %v789 = vsub.f32 1.5, %v788
        %v790 = vmul.f32 %v785, %v789
        %v791 = vmul.f32 %v784, %v790
        %vm792 = vcmp.eq.f32.partialorder %v784, inf
        %v793 = vsel %vm792, %v784, %v791
        %vm794 = vcmp.eq.f32.partialorder %v784, 0.0
        %v795 = vand.u32 %v784, 2147483648
        %v796 = vsel %vm794, %v795, %v793
        %v797 = vmax.f32 %v796, 1e-12
        %v798 = vrcp.pop %v797
        %v799 = vmul.f32 %v797, %v798
        %v800 = vsub.f32 1.0, %v799
        %v801 = vmul.f32 %v798, %v800
        %v802 = vadd.f32 %v798, %v801
        %vm803 = vweird.f32 %v797
        %vm804 = vweird.f32 %v798
        %vm805 = vmor %vm803, %vm804
        %v806 = vsel %vm805, %v798, %v802
        %v807 = vand.u32 2147483647, %v797
        %vm808 = vcmp.eq.f32.partialorder %v807, 8.507059e+37
        %v809 = vand.u32 %v797, 2147483648
        %v810 = vor.u32 1.1754944e-38, %v809
        %v811 = vsel %vm808, %v810, %v806
        %v812 = vmul.f32 %v763, %v811
        %v813 = vmul.f32 %v764, %v811
        %v814 = vmul.f32 %v765, %v811
        %v815 = vmul.f32 %v766, %v811
        %v816 = vlaneseq
        %v817 = vand.u32 %v816, 127
        %vm818 = vcmp.lt.s32.totalorder %v817, 4
        %v819 = vsel %vm818, 1, 0
        %vm820 = vcmp.eq.s32.totalorder %v819, 1
        %v821 = vsel %vm820, %v812, 0.0
        %v822 = vsel %vm820, %v813, 0.0
        %v823 = vsel %vm820, %v814, 0.0
        %v824 = vsel %vm820, %v815, 0.0
        %v825 = vlaneseq
        %v826 = vshrl.u32 %v825, 7
        %v827 = vperm.slane %v758, 0
        %v828 = vperm.slane %v758, 1
        %vm829 = vcmp.eq.s32.totalorder %v826, %v827
        %vm830 = vcmp.eq.s32.totalorder %v826, %v828
        %v831 = vsel %vm829, 1, 0
        %v832 = vsel %vm830, 1, 0
        %v833 = vcvt.s32.f32 %v831
        %v834 = vcvt.s32.f32 %v832
        %v836 = vsel %vm771, %v759, 0
        %v839 = vsel %vm771, %v760, 0
        %v842 = vsel %vm771, %v761, 0
        %v845 = vsel %vm771, %v762, 0
        %v848 = vsel %vm771, %v821, 0
        %v851 = vsel %vm771, %v822, 0
        %v854 = vsel %vm771, %v823, 0
        %v857 = vsel %vm771, %v824, 0
        %859 = vmatpush.xpose.msra.mxu0 0.0
        %860 = vmatpush.xpose.msra.mxu0 0.0
        %861 = vmatpush.xpose.msra.mxu0 0.0
        %862 = vmatpush.xpose.msra.mxu0 0.0
        %863 = vmatpush.xpose.msra.mxu0 0.0
        %864 = vmatpush.xpose.msra.mxu0 0.0
        %865 = vmatpush.xpose.msra.mxu0 0.0
        %866 = vmatpush.xpose.msra.mxu0 0.0
        %867 = vmatpush.xpose.msra.mxu0 0.0
        %868 = vmatpush.xpose.msra.mxu0 0.0
        %869 = vmatpush.xpose.msra.mxu0 0.0
        %870 = vmatpush.xpose.msra.mxu0 0.0
        %871 = vmatpush.xpose.msra.mxu0 %v857
        %872 = vmatpush.xpose.msra.mxu0 %v854
        %873 = vmatpush.xpose.msra.mxu0 %v851
        %874 = vmatpush.xpose.msra.mxu0 %v848
        %875 = vmatmul.f32.gmra.mxu0 %v836
        %v876 = vpop.f32.mrf.mxu0
        %v877 = vadd.f32 0.0, %v876
        %878 = vmatmul.f32.gmra.mxu0 %v839
        %v879 = vpop.f32.mrf.mxu0
        %v880 = vadd.f32 0.0, %v879
        %881 = vmatmul.f32.gmra.mxu0 %v842
        %v882 = vpop.f32.mrf.mxu0
        %v883 = vadd.f32 0.0, %v882
        %884 = vmatmul.f32.gmra.mxu0 %v845
        %v885 = vpop.f32.mrf.mxu0
        %v886 = vadd.f32 0.0, %v885
        %887 = vdwg.mxu0
        %888 = vmatpush.msra.mxu0 0.0
        %889 = vmatpush.msra.mxu0 0.0
        %890 = vmatpush.msra.mxu0 0.0
        %891 = vmatpush.msra.mxu0 0.0
        %892 = vmatpush.msra.mxu0 0.0
        %893 = vmatpush.msra.mxu0 0.0
        %894 = vmatpush.msra.mxu0 0.0
        %895 = vmatpush.msra.mxu0 0.0
        %896 = vmatpush.msra.mxu0 0.0
        %897 = vmatpush.msra.mxu0 0.0
        %898 = vmatpush.msra.mxu0 0.0
        %899 = vmatpush.msra.mxu0 0.0
        %900 = vmatpush.msra.mxu0 0.0
        %901 = vmatpush.msra.mxu0 0.0
        %902 = vmatpush.msra.mxu0 0.0
        %903 = vmatpush.msra.mxu0 %v833
        %904 = vmatmul.f32.gmra.mxu0 %v848
        %v905 = vpop.f32.mrf.mxu0
        %v906 = vadd.f32 0.0, %v905
        %907 = vmatmul.f32.gmra.mxu0 %v851
        %v908 = vpop.f32.mrf.mxu0
        %v909 = vadd.f32 0.0, %v908
        %910 = vmatmul.f32.gmra.mxu0 %v854
        %v911 = vpop.f32.mrf.mxu0
        %v912 = vadd.f32 0.0, %v911
        %913 = vmatmul.f32.gmra.mxu0 %v857
        %v914 = vpop.f32.mrf.mxu0
        %v915 = vadd.f32 0.0, %v914
        %916 = vdwg.mxu0
        %917 = vmatpush.msra.mxu0 0.0
        %918 = vmatpush.msra.mxu0 0.0
        %919 = vmatpush.msra.mxu0 0.0
        %920 = vmatpush.msra.mxu0 0.0
        %921 = vmatpush.msra.mxu0 0.0
        %922 = vmatpush.msra.mxu0 0.0
        %923 = vmatpush.msra.mxu0 0.0
        %924 = vmatpush.msra.mxu0 0.0
        %925 = vmatpush.msra.mxu0 0.0
        %926 = vmatpush.msra.mxu0 0.0
        %927 = vmatpush.msra.mxu0 0.0
        %928 = vmatpush.msra.mxu0 0.0
        %929 = vmatpush.msra.mxu0 0.0
        %930 = vmatpush.msra.mxu0 0.0
        %931 = vmatpush.msra.mxu0 0.0
        %932 = vmatpush.msra.mxu0 %v834
        %933 = vmatmul.f32.gmra.mxu0 %v848
        %v934 = vpop.f32.mrf.mxu0
        %v935 = vadd.f32 0.0, %v934
        %936 = vmatmul.f32.gmra.mxu0 %v851
        %v937 = vpop.f32.mrf.mxu0
        %v938 = vadd.f32 0.0, %v937
        %939 = vmatmul.f32.gmra.mxu0 %v854
        %v940 = vpop.f32.mrf.mxu0
        %v941 = vadd.f32 0.0, %v940
        %942 = vmatmul.f32.gmra.mxu0 %v857
        %v943 = vpop.f32.mrf.mxu0
        %v944 = vadd.f32 0.0, %v943
        %945 = vdwg.mxu0
        %vm946 = vcmask 261120
        %v948 = vsel %vm946, %v877, 0
        %v951 = vsel %vm946, %v880, 0
        %v954 = vsel %vm946, %v883, 0
        %v957 = vsel %vm946, %v886, 0
        %959 = vmatpush.msra.mxu0 0.0
        %960 = vmatpush.msra.mxu0 0.0
        %961 = vmatpush.msra.mxu0 0.0
        %962 = vmatpush.msra.mxu0 0.0
        %963 = vmatpush.msra.mxu0 0.0
        %964 = vmatpush.msra.mxu0 0.0
        %965 = vmatpush.msra.mxu0 0.0
        %966 = vmatpush.msra.mxu0 0.0
        %967 = vmatpush.msra.mxu0 0.0
        %968 = vmatpush.msra.mxu0 0.0
        %969 = vmatpush.msra.mxu0 0.0
        %970 = vmatpush.msra.mxu0 0.0
        %971 = vmatpush.msra.mxu0 %v915
        %972 = vmatpush.msra.mxu0 %v912
        %973 = vmatpush.msra.mxu0 %v909
        %974 = vmatpush.msra.mxu0 %v906
        %975 = vmatmul.f32.gmra.mxu0 %v948
        %v976 = vpop.f32.mrf.mxu0
        %v977 = vadd.f32 0.0, %v976
        %978 = vmatmul.f32.gmra.mxu0 %v951
        %v979 = vpop.f32.mrf.mxu0
        %v980 = vadd.f32 0.0, %v979
        %981 = vmatmul.f32.gmra.mxu0 %v954
        %v982 = vpop.f32.mrf.mxu0
        %v983 = vadd.f32 0.0, %v982
        %984 = vmatmul.f32.gmra.mxu0 %v957
        %v985 = vpop.f32.mrf.mxu0
        %v986 = vadd.f32 0.0, %v985
        %987 = vdwg.mxu0
        %988 = vmatpush.msra.mxu0 0.0
        %989 = vmatpush.msra.mxu0 0.0
        %990 = vmatpush.msra.mxu0 0.0
        %991 = vmatpush.msra.mxu0 0.0
        %992 = vmatpush.msra.mxu0 0.0
        %993 = vmatpush.msra.mxu0 0.0
        %994 = vmatpush.msra.mxu0 0.0
        %995 = vmatpush.msra.mxu0 0.0
        %996 = vmatpush.msra.mxu0 0.0
        %997 = vmatpush.msra.mxu0 0.0
        %998 = vmatpush.msra.mxu0 0.0
        %999 = vmatpush.msra.mxu0 0.0
        %1000 = vmatpush.msra.mxu0 %v944
        %1001 = vmatpush.msra.mxu0 %v941
        %1002 = vmatpush.msra.mxu0 %v938
        %1003 = vmatpush.msra.mxu0 %v935
        %1004 = vmatmul.f32.gmra.mxu0 %v948
        %v1005 = vpop.f32.mrf.mxu0
        %v1006 = vadd.f32 0.0, %v1005
        %1007 = vmatmul.f32.gmra.mxu0 %v951
        %v1008 = vpop.f32.mrf.mxu0
        %v1009 = vadd.f32 0.0, %v1008
        %1010 = vmatmul.f32.gmra.mxu0 %v954
        %v1011 = vpop.f32.mrf.mxu0
        %v1012 = vadd.f32 0.0, %v1011
        %1013 = vmatmul.f32.gmra.mxu0 %v957
        %v1014 = vpop.f32.mrf.mxu0
        %v1015 = vadd.f32 0.0, %v1014
        %1016 = vdwg.mxu0
        %v1017 = vld [vmem:[%s5] sm:$0xff]
        %v1018 = vld [vmem:[%s5 + $0x8] sm:$0xff]
        %v1019 = vld [vmem:[%s5 + $0x10] sm:$0xff]
        %v1020 = vld [vmem:[%s5 + $0x18] sm:$0xff]
        %v1021 = vld [vmem:[%s6] sm:$0xff]
        %v1022 = vld [vmem:[%s6 + $0x8] sm:$0xff]
        %v1023 = vld [vmem:[%s6 + $0x10] sm:$0xff]
        %v1024 = vld [vmem:[%s6 + $0x18] sm:$0xff]
        %v1026 = vsel %vm946, %v1021, 0
        %v1029 = vsel %vm946, %v1022, 0
        %v1032 = vsel %vm946, %v1023, 0
        %v1035 = vsel %vm946, %v1024, 0
        %1037 = vmatpush.msra.mxu0 0.0
        %1038 = vmatpush.msra.mxu0 0.0
        %1039 = vmatpush.msra.mxu0 0.0
        %1040 = vmatpush.msra.mxu0 0.0
        %1041 = vmatpush.msra.mxu0 0.0
        %1042 = vmatpush.msra.mxu0 0.0
        %1043 = vmatpush.msra.mxu0 0.0
        %1044 = vmatpush.msra.mxu0 0.0
        %1045 = vmatpush.msra.mxu0 0.0
        %1046 = vmatpush.msra.mxu0 0.0
        %1047 = vmatpush.msra.mxu0 0.0
        %1048 = vmatpush.msra.mxu0 0.0
        %1049 = vmatpush.msra.mxu0 %v756
        %1050 = vmatpush.msra.mxu0 %v754
        %1051 = vmatpush.msra.mxu0 %v752
        %1052 = vmatpush.msra.mxu0 %v750
        %1053 = vmatmul.f32.gmra.mxu0 %v1026
        %v1054 = vpop.f32.mrf.mxu0
        %v1055 = vadd.f32 0.0, %v1054
        %1056 = vmatmul.f32.gmra.mxu0 %v1029
        %v1057 = vpop.f32.mrf.mxu0
        %v1058 = vadd.f32 0.0, %v1057
        %1059 = vmatmul.f32.gmra.mxu0 %v1032
        %v1060 = vpop.f32.mrf.mxu0
        %v1061 = vadd.f32 0.0, %v1060
        %1062 = vmatmul.f32.gmra.mxu0 %v1035
        %v1063 = vpop.f32.mrf.mxu0
        %v1064 = vadd.f32 0.0, %v1063
        %1065 = vdwg.mxu0
        %1066 = vmatpush.msra.mxu0 0.0
        %1067 = vmatpush.msra.mxu0 0.0
        %1068 = vmatpush.msra.mxu0 0.0
        %1069 = vmatpush.msra.mxu0 0.0
        %1070 = vmatpush.msra.mxu0 0.0
        %1071 = vmatpush.msra.mxu0 0.0
        %1072 = vmatpush.msra.mxu0 0.0
        %1073 = vmatpush.msra.mxu0 0.0
        %1074 = vmatpush.msra.mxu0 0.0
        %1075 = vmatpush.msra.mxu0 0.0
        %1076 = vmatpush.msra.mxu0 0.0
        %1077 = vmatpush.msra.mxu0 0.0
        %1078 = vmatpush.msra.mxu0 %v757
        %1079 = vmatpush.msra.mxu0 %v755
        %1080 = vmatpush.msra.mxu0 %v753
        %1081 = vmatpush.msra.mxu0 %v751
        %1082 = vmatmul.f32.gmra.mxu0 %v1026
        %v1083 = vpop.f32.mrf.mxu0
        %v1084 = vadd.f32 0.0, %v1083
        %1085 = vmatmul.f32.gmra.mxu0 %v1029
        %v1086 = vpop.f32.mrf.mxu0
        %v1087 = vadd.f32 0.0, %v1086
        %1088 = vmatmul.f32.gmra.mxu0 %v1032
        %v1089 = vpop.f32.mrf.mxu0
        %v1090 = vadd.f32 0.0, %v1089
        %1091 = vmatmul.f32.gmra.mxu0 %v1035
        %v1092 = vpop.f32.mrf.mxu0
        %v1093 = vadd.f32 0.0, %v1092
        %1094 = vdwg.mxu0
        %v1096 = vsel %vm946, %v1017, 0
        %v1099 = vsel %vm946, %v1018, 0
        %v1102 = vsel %vm946, %v1019, 0
        %v1105 = vsel %vm946, %v1020, 0
        %1107 = vmatpush.msra.mxu0 0.0
        %1108 = vmatpush.msra.mxu0 0.0
        %1109 = vmatpush.msra.mxu0 0.0
        %1110 = vmatpush.msra.mxu0 0.0
        %1111 = vmatpush.msra.mxu0 0.0
        %1112 = vmatpush.msra.mxu0 0.0
        %1113 = vmatpush.msra.mxu0 0.0
        %1114 = vmatpush.msra.mxu0 0.0
        %1115 = vmatpush.msra.mxu0 0.0
        %1116 = vmatpush.msra.mxu0 0.0
        %1117 = vmatpush.msra.mxu0 0.0
        %1118 = vmatpush.msra.mxu0 0.0
        %1119 = vmatpush.msra.mxu0 %v744
        %1120 = vmatpush.msra.mxu0 %v742
        %1121 = vmatpush.msra.mxu0 %v740
        %1122 = vmatpush.msra.mxu0 %v738
        %1123 = vmatmul.f32.gmra.mxu0 %v1096
        %v1124 = vpop.f32.mrf.mxu0
        %v1125 = vadd.f32 %v1055, %v1124
        %1126 = vmatmul.f32.gmra.mxu0 %v1099
        %v1127 = vpop.f32.mrf.mxu0
        %v1128 = vadd.f32 %v1058, %v1127
        %1129 = vmatmul.f32.gmra.mxu0 %v1102
        %v1130 = vpop.f32.mrf.mxu0
        %v1131 = vadd.f32 %v1061, %v1130
        %1132 = vmatmul.f32.gmra.mxu0 %v1105
        %v1133 = vpop.f32.mrf.mxu0
        %v1134 = vadd.f32 %v1064, %v1133
        %1135 = vdwg.mxu0
        %1136 = vmatpush.msra.mxu0 0.0
        %1137 = vmatpush.msra.mxu0 0.0
        %1138 = vmatpush.msra.mxu0 0.0
        %1139 = vmatpush.msra.mxu0 0.0
        %1140 = vmatpush.msra.mxu0 0.0
        %1141 = vmatpush.msra.mxu0 0.0
        %1142 = vmatpush.msra.mxu0 0.0
        %1143 = vmatpush.msra.mxu0 0.0
        %1144 = vmatpush.msra.mxu0 0.0
        %1145 = vmatpush.msra.mxu0 0.0
        %1146 = vmatpush.msra.mxu0 0.0
        %1147 = vmatpush.msra.mxu0 0.0
        %1148 = vmatpush.msra.mxu0 %v745
        %1149 = vmatpush.msra.mxu0 %v743
        %1150 = vmatpush.msra.mxu0 %v741
        %1151 = vmatpush.msra.mxu0 %v739
        %1152 = vmatmul.f32.gmra.mxu0 %v1096
        %v1153 = vpop.f32.mrf.mxu0
        %v1154 = vadd.f32 %v1084, %v1153
        %1155 = vmatmul.f32.gmra.mxu0 %v1099
        %v1156 = vpop.f32.mrf.mxu0
        %v1157 = vadd.f32 %v1087, %v1156
        %1158 = vmatmul.f32.gmra.mxu0 %v1102
        %v1159 = vpop.f32.mrf.mxu0
        %v1160 = vadd.f32 %v1090, %v1159
        %1161 = vmatmul.f32.gmra.mxu0 %v1105
        %v1162 = vpop.f32.mrf.mxu0
        %v1163 = vadd.f32 %v1093, %v1162
        %1164 = vdwg.mxu0
        %v1165 = vld [vmem:[%s7] sm:$0xff]
        %v1166 = vld [vmem:[%s7 + $0x8] sm:$0xff]
        %v1167 = vld [vmem:[%s7 + $0x10] sm:$0xff]
        %v1168 = vld [vmem:[%s7 + $0x18] sm:$0xff]
        %v1170 = vsel %vm946, %v1165, 0
        %v1173 = vsel %vm946, %v1166, 0
        %v1176 = vsel %vm946, %v1167, 0
        %v1179 = vsel %vm946, %v1168, 0
        %1181 = vmatpush.msra.mxu0 0.0
        %1182 = vmatpush.msra.mxu0 0.0
        %1183 = vmatpush.msra.mxu0 0.0
        %1184 = vmatpush.msra.mxu0 0.0
        %1185 = vmatpush.msra.mxu0 0.0
        %1186 = vmatpush.msra.mxu0 0.0
        %1187 = vmatpush.msra.mxu0 0.0
        %1188 = vmatpush.msra.mxu0 0.0
        %1189 = vmatpush.msra.mxu0 0.0
        %1190 = vmatpush.msra.mxu0 0.0
        %1191 = vmatpush.msra.mxu0 0.0
        %1192 = vmatpush.msra.mxu0 0.0
        %1193 = vmatpush.msra.mxu0 %v986
        %1194 = vmatpush.msra.mxu0 %v983
        %1195 = vmatpush.msra.mxu0 %v980
        %1196 = vmatpush.msra.mxu0 %v977
        %1197 = vmatmul.f32.gmra.mxu0 %v1170
        %v1198 = vpop.f32.mrf.mxu0
        %v1199 = vadd.f32 0.0, %v1198
        %1200 = vmatmul.f32.gmra.mxu0 %v1173
        %v1201 = vpop.f32.mrf.mxu0
        %v1202 = vadd.f32 0.0, %v1201
        %1203 = vmatmul.f32.gmra.mxu0 %v1176
        %v1204 = vpop.f32.mrf.mxu0
        %v1205 = vadd.f32 0.0, %v1204
        %1206 = vmatmul.f32.gmra.mxu0 %v1179
        %v1207 = vpop.f32.mrf.mxu0
        %v1208 = vadd.f32 0.0, %v1207
        %1209 = vdwg.mxu0
        %1210 = vmatpush.msra.mxu0 0.0
        %1211 = vmatpush.msra.mxu0 0.0
        %1212 = vmatpush.msra.mxu0 0.0
        %1213 = vmatpush.msra.mxu0 0.0
        %1214 = vmatpush.msra.mxu0 0.0
        %1215 = vmatpush.msra.mxu0 0.0
        %1216 = vmatpush.msra.mxu0 0.0
        %1217 = vmatpush.msra.mxu0 0.0
        %1218 = vmatpush.msra.mxu0 0.0
        %1219 = vmatpush.msra.mxu0 0.0
        %1220 = vmatpush.msra.mxu0 0.0
        %1221 = vmatpush.msra.mxu0 0.0
        %1222 = vmatpush.msra.mxu0 %v1015
        %1223 = vmatpush.msra.mxu0 %v1012
        %1224 = vmatpush.msra.mxu0 %v1009
        %1225 = vmatpush.msra.mxu0 %v1006
        %1226 = vmatmul.f32.gmra.mxu0 %v1170
        %v1227 = vpop.f32.mrf.mxu0
        %v1228 = vadd.f32 0.0, %v1227
        %1229 = vmatmul.f32.gmra.mxu0 %v1173
        %v1230 = vpop.f32.mrf.mxu0
        %v1231 = vadd.f32 0.0, %v1230
        %1232 = vmatmul.f32.gmra.mxu0 %v1176
        %v1233 = vpop.f32.mrf.mxu0
        %v1234 = vadd.f32 0.0, %v1233
        %1235 = vmatmul.f32.gmra.mxu0 %v1179
        %v1236 = vpop.f32.mrf.mxu0
        %v1237 = vadd.f32 0.0, %v1236
        %1238 = vdwg.mxu0
        %v1239 = vadd.f32 %v1125, %v1199
        %v1240 = vadd.f32 %v1154, %v1228
        %v1241 = vadd.f32 %v1128, %v1202
        %v1242 = vadd.f32 %v1157, %v1231
        %v1243 = vadd.f32 %v1131, %v1205
        %v1244 = vadd.f32 %v1160, %v1234
        %v1245 = vadd.f32 %v1134, %v1208
        %v1246 = vadd.f32 %v1163, %v1237
        %v1247 = vld [vmem:[%s8] sm:$0xff]
        %v1248 = vld [vmem:[%s8 + $0x8] sm:$0xff]
        %v1249 = vld [vmem:[%s8 + $0x10] sm:$0xff]
        %v1250 = vld [vmem:[%s8 + $0x18] sm:$0xff]
        %1252 = vset.pattern.permute.xlu0 0
        %1253 = vperm.xlu0 %1252, %v1247
        %v1254 = vpop.permute.xlu0 %1253
        %1257 = vset.pattern.permute.xlu0 0
        %1258 = vperm.xlu0 %1257, %v1248
        %v1259 = vpop.permute.xlu0 %1258
        %1262 = vset.pattern.permute.xlu0 0
        %1263 = vperm.xlu0 %1262, %v1249
        %v1264 = vpop.permute.xlu0 %1263
        %1267 = vset.pattern.permute.xlu0 0
        %1268 = vperm.xlu0 %1267, %v1250
        %v1269 = vpop.permute.xlu0 %1268
        %v1271 = vmul.f32 %v1239, %v1254
        %v1272 = vmul.f32 %v1240, %v1254
        %v1273 = vmul.f32 %v1241, %v1259
        %v1274 = vmul.f32 %v1242, %v1259
        %v1275 = vmul.f32 %v1243, %v1264
        %v1276 = vmul.f32 %v1244, %v1264
        %v1277 = vmul.f32 %v1245, %v1269
        %v1278 = vmul.f32 %v1246, %v1269
        %v1279 = vld [vmem:[%s9] sm:$0xff]
        %v1280 = vld [vmem:[%s9 + $0x8] sm:$0xff]
        %v1281 = vld [vmem:[%s9 + $0x10] sm:$0xff]
        %v1282 = vld [vmem:[%s9 + $0x18] sm:$0xff]
        %1284 = vset.pattern.permute.xlu0 0
        %1285 = vperm.xlu0 %1284, %v1279
        %v1286 = vpop.permute.xlu0 %1285
        %1289 = vset.pattern.permute.xlu0 0
        %1290 = vperm.xlu0 %1289, %v1280
        %v1291 = vpop.permute.xlu0 %1290
        %1294 = vset.pattern.permute.xlu0 0
        %1295 = vperm.xlu0 %1294, %v1281
        %v1296 = vpop.permute.xlu0 %1295
        %1299 = vset.pattern.permute.xlu0 0
        %1300 = vperm.xlu0 %1299, %v1282
        %v1301 = vpop.permute.xlu0 %1300
        %v1303 = vadd.f32 %v1271, %v1286
        %v1304 = vadd.f32 %v1272, %v1286
        %v1305 = vadd.f32 %v1273, %v1291
        %v1306 = vadd.f32 %v1274, %v1291
        %v1307 = vadd.f32 %v1275, %v1296
        %v1308 = vadd.f32 %v1276, %v1296
        %v1309 = vadd.f32 %v1277, %v1301
        %v1310 = vadd.f32 %v1278, %v1301
        %vm1311 = vcmp.ge.f32.partialorder %v1303, 0.0
        %vm1312 = vcmp.ge.f32.partialorder %v1304, 0.0
        %vm1313 = vcmp.ge.f32.partialorder %v1305, 0.0
        %vm1314 = vcmp.ge.f32.partialorder %v1306, 0.0
        %vm1315 = vcmp.ge.f32.partialorder %v1307, 0.0
        %vm1316 = vcmp.ge.f32.partialorder %v1308, 0.0
        %vm1317 = vcmp.ge.f32.partialorder %v1309, 0.0
        %vm1318 = vcmp.ge.f32.partialorder %v1310, 0.0
        %v1319 = vmul.f32 %v1303, 0.2
        %v1320 = vmul.f32 %v1304, 0.2
        %v1321 = vmul.f32 %v1305, 0.2
        %v1322 = vmul.f32 %v1306, 0.2
        %v1323 = vmul.f32 %v1307, 0.2
        %v1324 = vmul.f32 %v1308, 0.2
        %v1325 = vmul.f32 %v1309, 0.2
        %v1326 = vmul.f32 %v1310, 0.2
        %v1327 = vsel %vm1311, %v1303, %v1319
        %v1328 = vsel %vm1312, %v1304, %v1320
        %v1329 = vsel %vm1313, %v1305, %v1321
        %v1330 = vsel %vm1314, %v1306, %v1322
        %v1331 = vsel %vm1315, %v1307, %v1323
        %v1332 = vsel %vm1316, %v1308, %v1324
        %v1333 = vsel %vm1317, %v1309, %v1325
        %v1334 = vsel %vm1318, %v1310, %v1326
        %v1335 = vld [vmem:[%s10] sm:$0xff]
        %v1336 = vld [vmem:[%s10 + $0x8] sm:$0xff]
        %v1337 = vld [vmem:[%s10 + $0x10] sm:$0xff]
        %v1338 = vld [vmem:[%s10 + $0x18] sm:$0xff]
        %v1339 = vld [vmem:[%s11] sm:$0xff]
        %v1340 = vld [vmem:[%s11 + $0x8] sm:$0xff]
        %v1341 = vld [vmem:[%s11 + $0x10] sm:$0xff]
        %v1342 = vld [vmem:[%s11 + $0x18] sm:$0xff]
        %v1343 = vld [vmem:[%s12] sm:$0xff]
        %v1344 = vld [vmem:[%s12 + $0x8] sm:$0xff]
        %v1345 = vld [vmem:[%s12 + $0x10] sm:$0xff]
        %v1346 = vld [vmem:[%s12 + $0x18] sm:$0xff]
        %v1348 = vsel %vm946, %v1335, 0
        %v1351 = vsel %vm946, %v1336, 0
        %v1354 = vsel %vm946, %v1337, 0
        %v1357 = vsel %vm946, %v1338, 0
        %1359 = vmatpush.msra.mxu0 0.0
        %1360 = vmatpush.msra.mxu0 0.0
        %1361 = vmatpush.msra.mxu0 0.0
        %1362 = vmatpush.msra.mxu0 0.0
        %1363 = vmatpush.msra.mxu0 0.0
        %1364 = vmatpush.msra.mxu0 0.0
        %1365 = vmatpush.msra.mxu0 0.0
        %1366 = vmatpush.msra.mxu0 0.0
        %1367 = vmatpush.msra.mxu0 0.0
        %1368 = vmatpush.msra.mxu0 0.0
        %1369 = vmatpush.msra.mxu0 0.0
        %1370 = vmatpush.msra.mxu0 0.0
        %1371 = vmatpush.msra.mxu0 %v1333
        %1372 = vmatpush.msra.mxu0 %v1331
        %1373 = vmatpush.msra.mxu0 %v1329
        %1374 = vmatpush.msra.mxu0 %v1327
        %1375 = vmatmul.f32.gmra.mxu0 %v1348
        %v1376 = vpop.f32.mrf.mxu0
        %v1377 = vadd.f32 0.0, %v1376
        %1378 = vmatmul.f32.gmra.mxu0 %v1351
        %v1379 = vpop.f32.mrf.mxu0
        %v1380 = vadd.f32 0.0, %v1379
        %1381 = vmatmul.f32.gmra.mxu0 %v1354
        %v1382 = vpop.f32.mrf.mxu0
        %v1383 = vadd.f32 0.0, %v1382
        %1384 = vmatmul.f32.gmra.mxu0 %v1357
        %v1385 = vpop.f32.mrf.mxu0
        %v1386 = vadd.f32 0.0, %v1385
        %1387 = vdwg.mxu0
        %1388 = vmatpush.msra.mxu0 0.0
        %1389 = vmatpush.msra.mxu0 0.0
        %1390 = vmatpush.msra.mxu0 0.0
        %1391 = vmatpush.msra.mxu0 0.0
        %1392 = vmatpush.msra.mxu0 0.0
        %1393 = vmatpush.msra.mxu0 0.0
        %1394 = vmatpush.msra.mxu0 0.0
        %1395 = vmatpush.msra.mxu0 0.0
        %1396 = vmatpush.msra.mxu0 0.0
        %1397 = vmatpush.msra.mxu0 0.0
        %1398 = vmatpush.msra.mxu0 0.0
        %1399 = vmatpush.msra.mxu0 0.0
        %1400 = vmatpush.msra.mxu0 %v1334
        %1401 = vmatpush.msra.mxu0 %v1332
        %1402 = vmatpush.msra.mxu0 %v1330
        %1403 = vmatpush.msra.mxu0 %v1328
        %1404 = vmatmul.f32.gmra.mxu0 %v1348
        %v1405 = vpop.f32.mrf.mxu0
        %v1406 = vadd.f32 0.0, %v1405
        %1407 = vmatmul.f32.gmra.mxu0 %v1351
        %v1408 = vpop.f32.mrf.mxu0
        %v1409 = vadd.f32 0.0, %v1408
        %1410 = vmatmul.f32.gmra.mxu0 %v1354
        %v1411 = vpop.f32.mrf.mxu0
        %v1412 = vadd.f32 0.0, %v1411
        %1413 = vmatmul.f32.gmra.mxu0 %v1357
        %v1414 = vpop.f32.mrf.mxu0
        %v1415 = vadd.f32 0.0, %v1414
        %1416 = vdwg.mxu0
        %1418 = vset.pattern.permute.xlu0 0
        %1419 = vperm.xlu0 %1418, %v1339
        %v1420 = vpop.permute.xlu0 %1419
        %1423 = vset.pattern.permute.xlu0 0
        %1424 = vperm.xlu0 %1423, %v1340
        %v1425 = vpop.permute.xlu0 %1424
        %1428 = vset.pattern.permute.xlu0 0
        %1429 = vperm.xlu0 %1428, %v1341
        %v1430 = vpop.permute.xlu0 %1429
        %1433 = vset.pattern.permute.xlu0 0
        %1434 = vperm.xlu0 %1433, %v1342
        %v1435 = vpop.permute.xlu0 %1434
        %v1437 = vmul.f32 %v1377, %v1420
        %v1438 = vmul.f32 %v1406, %v1420
        %v1439 = vmul.f32 %v1380, %v1425
        %v1440 = vmul.f32 %v1409, %v1425
        %v1441 = vmul.f32 %v1383, %v1430
        %v1442 = vmul.f32 %v1412, %v1430
        %v1443 = vmul.f32 %v1386, %v1435
        %v1444 = vmul.f32 %v1415, %v1435
        %1446 = vset.pattern.permute.xlu0 0
        %1447 = vperm.xlu0 %1446, %v1343
        %v1448 = vpop.permute.xlu0 %1447
        %1451 = vset.pattern.permute.xlu0 0
        %1452 = vperm.xlu0 %1451, %v1344
        %v1453 = vpop.permute.xlu0 %1452
        %1456 = vset.pattern.permute.xlu0 0
        %1457 = vperm.xlu0 %1456, %v1345
        %v1458 = vpop.permute.xlu0 %1457
        %1461 = vset.pattern.permute.xlu0 0
        %1462 = vperm.xlu0 %1461, %v1346
        %v1463 = vpop.permute.xlu0 %1462
        %v1465 = vadd.f32 %v1437, %v1448
        %v1466 = vadd.f32 %v1438, %v1448
        %v1467 = vadd.f32 %v1439, %v1453
        %v1468 = vadd.f32 %v1440, %v1453
        %v1469 = vadd.f32 %v1441, %v1458
        %v1470 = vadd.f32 %v1442, %v1458
        %v1471 = vadd.f32 %v1443, %v1463
        %v1472 = vadd.f32 %v1444, %v1463
        %vm1473 = vcmp.ge.f32.partialorder %v1465, 0.0
        %vm1474 = vcmp.ge.f32.partialorder %v1466, 0.0
        %vm1475 = vcmp.ge.f32.partialorder %v1467, 0.0
        %vm1476 = vcmp.ge.f32.partialorder %v1468, 0.0
        %vm1477 = vcmp.ge.f32.partialorder %v1469, 0.0
        %vm1478 = vcmp.ge.f32.partialorder %v1470, 0.0
        %vm1479 = vcmp.ge.f32.partialorder %v1471, 0.0
        %vm1480 = vcmp.ge.f32.partialorder %v1472, 0.0
        %v1481 = vmul.f32 %v1465, 0.2
        %v1482 = vmul.f32 %v1466, 0.2
        %v1483 = vmul.f32 %v1467, 0.2
        %v1484 = vmul.f32 %v1468, 0.2
        %v1485 = vmul.f32 %v1469, 0.2
        %v1486 = vmul.f32 %v1470, 0.2
        %v1487 = vmul.f32 %v1471, 0.2
        %v1488 = vmul.f32 %v1472, 0.2
        %v1489 = vsel %vm1473, %v1465, %v1481
        %v1490 = vsel %vm1474, %v1466, %v1482
        %v1491 = vsel %vm1475, %v1467, %v1483
        %v1492 = vsel %vm1476, %v1468, %v1484
        %v1493 = vsel %vm1477, %v1469, %v1485
        %v1494 = vsel %vm1478, %v1470, %v1486
        %v1495 = vsel %vm1479, %v1471, %v1487
        %v1496 = vsel %vm1480, %v1472, %v1488
        %v1497 = vld [vmem:[%s13] sm:$0xff]
        %v1498 = vld [vmem:[%s14] sm:$0xff]
        %v1499 = vld [vmem:[%s15] sm:$0xff]
        %v1501 = vsel %vm946, %v1497, 0
        %1503 = vmatpush.msra.mxu0 0.0
        %1504 = vmatpush.msra.mxu0 0.0
        %1505 = vmatpush.msra.mxu0 0.0
        %1506 = vmatpush.msra.mxu0 0.0
        %1507 = vmatpush.msra.mxu0 0.0
        %1508 = vmatpush.msra.mxu0 0.0
        %1509 = vmatpush.msra.mxu0 0.0
        %1510 = vmatpush.msra.mxu0 0.0
        %1511 = vmatpush.msra.mxu0 0.0
        %1512 = vmatpush.msra.mxu0 0.0
        %1513 = vmatpush.msra.mxu0 0.0
        %1514 = vmatpush.msra.mxu0 0.0
        %1515 = vmatpush.msra.mxu0 %v1495
        %1516 = vmatpush.msra.mxu0 %v1493
        %1517 = vmatpush.msra.mxu0 %v1491
        %1518 = vmatpush.msra.mxu0 %v1489
        %1519 = vmatmul.f32.gmra.mxu0 %v1501
        %v1520 = vpop.f32.mrf.mxu0
        %v1521 = vadd.f32 0.0, %v1520
        %1522 = vdwg.mxu0
        %1523 = vmatpush.msra.mxu0 0.0
        %1524 = vmatpush.msra.mxu0 0.0
        %1525 = vmatpush.msra.mxu0 0.0
        %1526 = vmatpush.msra.mxu0 0.0
        %1527 = vmatpush.msra.mxu0 0.0
        %1528 = vmatpush.msra.mxu0 0.0
        %1529 = vmatpush.msra.mxu0 0.0
        %1530 = vmatpush.msra.mxu0 0.0
        %1531 = vmatpush.msra.mxu0 0.0
        %1532 = vmatpush.msra.mxu0 0.0
        %1533 = vmatpush.msra.mxu0 0.0
        %1534 = vmatpush.msra.mxu0 0.0
        %1535 = vmatpush.msra.mxu0 %v1496
        %1536 = vmatpush.msra.mxu0 %v1494
        %1537 = vmatpush.msra.mxu0 %v1492
        %1538 = vmatpush.msra.mxu0 %v1490
        %1539 = vmatmul.f32.gmra.mxu0 %v1501
        %v1540 = vpop.f32.mrf.mxu0
        %v1541 = vadd.f32 0.0, %v1540
        %1542 = vdwg.mxu0
        %1544 = vset.pattern.permute.xlu0 0
        %1545 = vperm.xlu0 %1544, %v1498
        %v1546 = vpop.permute.xlu0 %1545
        %v1548 = vmul.f32 %v1521, %v1546
        %v1549 = vmul.f32 %v1541, %v1546
        %1551 = vset.pattern.permute.xlu0 0
        %1552 = vperm.xlu0 %1551, %v1499
        %v1553 = vpop.permute.xlu0 %1552
        %v1555 = vadd.f32 %v1548, %v1553
        %v1556 = vadd.f32 %v1549, %v1553
        %vm1557 = vcmp.ge.f32.partialorder %v1555, 0.0
        %vm1558 = vcmp.ge.f32.partialorder %v1556, 0.0
        %v1559 = vmul.f32 %v1555, 0.2
        %v1560 = vmul.f32 %v1556, 0.2
        %v1561 = vsel %vm1557, %v1555, %v1559
        %v1562 = vsel %vm1558, %v1556, %v1560
        %v1563 = vrot.slane %v1561, 4
        %v1564 = vmax.f32 %v1561, %v1563
        %v1565 = vrot.slane %v1564, 2
        %v1566 = vmax.f32 %v1564, %v1565
        %v1567 = vrot.slane %v1566, 1
        %v1568 = vmax.f32 %v1566, %v1567
        %v1569 = vrot.slane %v1562, 4
        %v1570 = vmax.f32 %v1562, %v1569
        %v1571 = vrot.slane %v1570, 2
        %v1572 = vmax.f32 %v1570, %v1571
        %v1573 = vrot.slane %v1572, 1
        %v1574 = vmax.f32 %v1572, %v1573
        %v1575 = vsub.f32 %v1561, %v1568
        %v1576 = vsub.f32 %v1562, %v1574
        %v1577 = vmul.f32 %v1575, 1.442695
        %v1578 = vpow.pop %v1577
        %v1579 = vmul.f32 %v1576, 1.442695
        %v1580 = vpow.pop %v1579
        %v1581 = vrot.slane %v1578, 4
        %v1582 = vadd.f32 %v1578, %v1581
        %v1583 = vrot.slane %v1582, 2
        %v1584 = vadd.f32 %v1582, %v1583
        %v1585 = vrot.slane %v1584, 1
        %v1586 = vadd.f32 %v1584, %v1585
        %v1587 = vrot.slane %v1580, 4
        %v1588 = vadd.f32 %v1580, %v1587
        %v1589 = vrot.slane %v1588, 2
        %v1590 = vadd.f32 %v1588, %v1589
        %v1591 = vrot.slane %v1590, 1
        %v1592 = vadd.f32 %v1590, %v1591
        %v1593 = vlog2.pop %v1586
        %v1594 = vmul.f32 %v1593, 0.6931472
        %v1595 = vlog2.pop %v1592
        %v1596 = vmul.f32 %v1595, 0.6931472
        %v1597 = vsub.f32 %v1575, %v1594
        %v1598 = vsub.f32 %v1576, %v1596
        %1599 = vst [vmem:[%s711] sm:$0xff] %v1597
        %1600 = vst [vmem:[%s711 + $0x8] sm:$0xff] %v1598
        %s1601 = sand.u32 %s419, 1
        %s1602 = scalar_lea.sflag [#allocation5], %s1601
        %s1603 = sand.u32 %s419, 1
        %s1604 = smul.addr %s1603, 16
        %s1605 = scalar_lea.vmem [#allocation4], %s1604
        // Predicated region
        $region161: #{_lambda_.3} parent=151 // pred_check
          %p1606 = pneg %p429
        $region162: #{_lambda_.3} parent=151 // pred_check_branch
          %1608 = sbr.rel (%p1606) target = $region164
        $region163: #{_lambda_.3} parent=151 // pred_region
          %s1609 = smul.u32 2, %s35
          %1611 = vsyncadd %s1602, 0
          %s1612 = smul.addr %s34, 4
          %s1613 = sadd.s32 %s1609, %s1612
          %s1614 = smul.addr %s1613, 8
          %s1615 = scalar_lea.hbm %s16, %s1614
          %s1617 = sshll.u32 %s1605, 4
          %s1618 = int_to_ptr.vmem [resolvable:$true] %s1617
          %s1619 = sshll.u32 %s1615, 4
          %s1620 = int_to_ptr.hbm [resolvable:$true] %s1619
          %1622 = dma.vmem_to_hbm [thread:$0]  %s1618, 256, %s1620, %s1602
        $region164: #{_lambda_.3} parent=151 // pred_fallthru
          _
      $region152: #{_lambda_.3} parent=5 // pred_fallthru
        _
      %p1623 = scmp.le.s32.totalorder 2, %s25
      // Predicated region
      $region165: #{_lambda_.3} parent=5 // pred_check
        %p1624 = pneg %p1623
      $region166: #{_lambda_.3} parent=5 // pred_check_branch
        %1626 = sbr.rel (%p1624) target = $region168
      $region167: #{_lambda_.3} parent=5 // pred_region
        %s1627 = ssub.s32 %s25, 2
        // Predicated region
        $region169: #{_lambda_.3} parent=167 // pred_check
          %p1628 = pneg %p435
        $region170: #{_lambda_.3} parent=167 // pred_check_branch
          %1630 = sbr.rel (%p1628) target = $region172
        $region171: #{_lambda_.3} parent=167 // pred_region
          %s1631 = sand.u32 %s420, 1
          %s1632 = scalar_lea.sflag [#allocation5], %s1631
          %s1633 = sand.u32 %s420, 1
          %s1634 = smul.addr %s1633, 16
          %s1635 = scalar_lea.vmem [#allocation4], %s1634
          %1637 = dma.done %s1632, 256
        $region172: #{_lambda_.3} parent=167 // pred_fallthru
          _
      $region168: #{_lambda_.3} parent=5 // pred_fallthru
        _
    $region6: #{_lambda_.3} parent=1 // loop_footer
      %s29 = sadd.s32 1, %s25
    $region7: #{_lambda_.3} parent=1 // loop_footer_branch
      %24 = sbr.rel target = $region3
    $region8: #{_lambda_.3} parent=1 // loop_exit
      _
    %1638 = vsyncpa [#allocation5], 1
    %s1639 = scalar_lea.sflag [#allocation5], 1
    %1640 = vsyncpa %s1639, 1

// kernel: _lambda_.2
$region0: #{_lambda_.2}
  #allocation0 [shape = 'u32[]', space=smem, size = 0x4, offset = 0x4, fixed_abs, tag = 'smem constant byte address 0x4 - core index']
  #allocation1 [shape = 'u32[72,128]{1,0:T(1,128)}', space=vmem, size = 0x9000, scoped, tag = 'internal scratch']
  %s0 = inlined_call_operand.vmem [shape: f32[2,512,8], index: 0, kind: input, shape index: {}]
  %s1 = inlined_call_operand.vmem [shape: s32[2,1,512], index: 1, kind: input, shape index: {}]
  %s2 = inlined_call_operand.vmem [shape: f32[16,8], index: 2, kind: input, shape index: {}]
  %s3 = inlined_call_operand.vmem [shape: f32[16,1], index: 3, kind: input, shape index: {}, may-alias: {3,15}]
  %s4 = inlined_call_operand.vmem [shape: f32[16,1], index: 4, kind: input, shape index: {}]
  %s5 = inlined_call_operand.vmem [shape: f32[32,16], index: 5, kind: input, shape index: {}]
  %s6 = inlined_call_operand.vmem [shape: f32[32,1], index: 6, kind: input, shape index: {}, may-alias: {6,9,12,18}]
  %s7 = inlined_call_operand.vmem [shape: f32[32,1], index: 7, kind: input, shape index: {}]
  %s8 = inlined_call_operand.vmem [shape: f32[32,32], index: 8, kind: input, shape index: {}]
  %s9 = inlined_call_operand.vmem [shape: f32[32,1], index: 9, kind: input, shape index: {}, may-alias: {6,9,12,18}]
  %s10 = inlined_call_operand.vmem [shape: f32[32,1], index: 10, kind: input, shape index: {}]
  %s11 = inlined_call_operand.vmem [shape: f32[32,32], index: 11, kind: input, shape index: {}]
  %s12 = inlined_call_operand.vmem [shape: f32[32,1], index: 12, kind: input, shape index: {}, may-alias: {6,9,12,18}]
  %s13 = inlined_call_operand.vmem [shape: f32[32,1], index: 13, kind: input, shape index: {}]
  %s14 = inlined_call_operand.vmem [shape: f32[16,32], index: 14, kind: input, shape index: {}]
  %s15 = inlined_call_operand.vmem [shape: f32[16,1], index: 15, kind: input, shape index: {}, may-alias: {3,15}]
  %s16 = inlined_call_operand.vmem [shape: f32[16,1], index: 16, kind: input, shape index: {}]
  %s17 = inlined_call_operand.vmem [shape: f32[32,16], index: 17, kind: input, shape index: {}]
  %s18 = inlined_call_operand.vmem [shape: f32[32,1], index: 18, kind: input, shape index: {}, may-alias: {6,9,12,18}]
  %s19 = inlined_call_operand.vmem [shape: f32[32,1], index: 19, kind: input, shape index: {}]
  %s20 = inlined_call_operand.vmem [shape: bf16[2,32,512], index: 20, kind: output, shape index: {0}]
  %s21 = inlined_call_operand.vmem [shape: bf16[2,32,512], index: 21, kind: output, shape index: {1}]
  %s22 = inlined_call_operand.vmem [shape: f32[2,32,8], index: 22, kind: output, shape index: {2}]
  %s23 = inlined_call_operand.vmem [shape: f32[2,32,8], index: 23, kind: output, shape index: {3}]
  %24 = xla_tuple %s20, %s21, %s22, %s23
  %s25 = sld [smem:[#allocation0]]
  $region209: #{_lambda_.2} parent=0
    _
  %s27 = ssub.s32 1, %s25
  %s28 = scalar_select 0, %s27, %s25
  $region1: #{_lambda_.2} parent=0
    #allocation2 [shape = 'u8[32768]{0}', space=vmem, size = 0x8000, scoped, tag = 'output window, operand 0']
    #allocation3 [shape = 'u8[32768]{0}', space=vmem, size = 0x8000, scoped, tag = 'output window, operand 1']
    loop: start=0, step=1, limit=6
    $region2: #{_lambda_.2} parent=1 // loop_pre_header
      _
    $region3: #{_lambda_.2} parent=1 // loop_header
      %s30 = sphi 0, %s34
      %p31 = scmp.ge.s32.totalorder %s30, 6
      %s37 = sphi 0, %s49
      %s38 = sphi 0, %s45
      %s39 = sphi 0, %s37
      %s40 = sphi 0, %s38
      %s41 = sphi 0, %s39
      %s42 = sphi 0, %s40
      %s54 = sphi 0, %s56
      %s57 = sphi 0, %s54
      %s58 = sphi 0, %s57
      %s74 = sphi 0, %s58
      %s82 = sphi 0, %s84
      %s85 = sphi 0, %s82
      %s86 = sphi 0, %s85
      %s102 = sphi 0, %s86
      %s106 = sphi 0, %s106
      %s108 = sphi 0, %s106
      %s109 = sphi 0, %s108
      %s123 = sphi 0, %s109
      %s127 = sphi 0, %s127
      %s129 = sphi 0, %s127
      %s130 = sphi 0, %s129
      %s144 = sphi 0, %s130
      %s148 = sphi 0, %s148
      %s150 = sphi 0, %s148
      %s151 = sphi 0, %s150
      %s165 = sphi 0, %s151
      %s169 = sphi 0, %s169
      %s171 = sphi 0, %s169
      %s172 = sphi 0, %s171
      %s186 = sphi 0, %s172
      %s190 = sphi 0, %s190
      %s192 = sphi 0, %s190
      %s193 = sphi 0, %s192
      %s207 = sphi 0, %s193
      %s211 = sphi 0, %s211
      %s213 = sphi 0, %s211
      %s214 = sphi 0, %s213
      %s228 = sphi 0, %s214
      %s232 = sphi 0, %s232
      %s234 = sphi 0, %s232
      %s235 = sphi 0, %s234
      %s249 = sphi 0, %s235
      %s253 = sphi 0, %s253
      %s255 = sphi 0, %s253
      %s256 = sphi 0, %s255
      %s270 = sphi 0, %s256
      %s274 = sphi 0, %s274
      %s276 = sphi 0, %s274
      %s277 = sphi 0, %s276
      %s291 = sphi 0, %s277
      %s295 = sphi 0, %s295
      %s297 = sphi 0, %s295
      %s298 = sphi 0, %s297
      %s312 = sphi 0, %s298
      %s316 = sphi 0, %s316
      %s318 = sphi 0, %s316
      %s319 = sphi 0, %s318
      %s333 = sphi 0, %s319
      %s337 = sphi 0, %s337
      %s339 = sphi 0, %s337
      %s340 = sphi 0, %s339
      %s354 = sphi 0, %s340
      %s358 = sphi 0, %s358
      %s360 = sphi 0, %s358
      %s361 = sphi 0, %s360
      %s375 = sphi 0, %s361
      %s379 = sphi 0, %s379
      %s381 = sphi 0, %s379
      %s382 = sphi 0, %s381
      %s396 = sphi 0, %s382
      %s400 = sphi 0, %s400
      %s402 = sphi 0, %s400
      %s403 = sphi 0, %s402
      %s417 = sphi 0, %s403
      %s421 = sphi 0, %s421
      %s423 = sphi 0, %s421
      %s424 = sphi 0, %s423
      %s438 = sphi 0, %s424
      %s442 = sphi 0, %s442
      %s444 = sphi 0, %s442
      %s445 = sphi 0, %s444
      %s459 = sphi 0, %s445
      %s463 = sphi 0, %s463
      %s465 = sphi 0, %s463
      %s466 = sphi 0, %s465
      %s480 = sphi 0, %s466
      %s488 = sphi 0, %s490
      %s491 = sphi 0, %s488
      %s492 = sphi 0, %s491
      %s508 = sphi 0, %s492
      %s516 = sphi 0, %s518
      %s519 = sphi 0, %s516
      %s520 = sphi 0, %s519
      %s536 = sphi 0, %s520
      %s542 = sphi 0, %s544
      %s545 = sphi 0, %s542
      %s546 = sphi 0, %s545
      %s562 = sphi 0, %s546
      %s568 = sphi 0, %s570
      %s571 = sphi 0, %s568
      %s572 = sphi 0, %s571
      %s588 = sphi 0, %s572
    $region4: #{_lambda_.2} parent=1 // loop_header_branch
      %33 = sbr.rel (%p31) target = $region8
    $region5: #{_lambda_.2} parent=1 // loop_body
      %s35 = ssub.s32 %s30, 1
      %s36 = ssub.s32 %s30, 2
      %s43 = sadd.s32 1, %s38
      %p44 = scmp.ge.s32.totalorder %s43, 2
      %s45 = scalar_select %p44, 0, %s43
      %s46 = sadd.s32 1, %s37
      %s47 = scalar_select %p44, %s46, %s37
      %p48 = scmp.ge.s32.totalorder %s47, 2
      %s49 = scalar_select %p48, 0, %s47
      %s50 = ssub.s32 %s37, %s49
      %s51 = ssub.s32 %s38, %s45
      %s52 = sor.u32 %s50, %s51
      %p53 = scmp.eq.s32.totalorder %s52, 0
      %s55 = sadd.s32 %s54, 1
      %s56 = scalar_select %p53, %s54, %s55
      %p59 = pneg %p53
      %p60 = scmp.eq.s32.totalorder %s30, 3
      %p61 = por %p59, %p60
      %p62 = scmp.ne.s32.totalorder %s54, %s57
      %p63 = scmp.eq.s32.totalorder %s30, 0
      %p64 = por %p62, %p63
      %p65 = scmp.ne.s32.totalorder %s54, %s57
      %p66 = scmp.eq.s32.totalorder %s35, 3
      %p67 = por %p65, %p66
      %p68 = scmp.ne.s32.totalorder %s57, %s58
      %p69 = scmp.eq.s32.totalorder %s35, 0
      %p70 = por %p68, %p69
      %p71 = scmp.ne.s32.totalorder %s57, %s58
      %p72 = scmp.eq.s32.totalorder %s36, 3
      %p73 = por %p71, %p72
      %p75 = scmp.ne.s32.totalorder %s58, %s74
      %p76 = scmp.eq.s32.totalorder %s36, 0
      %p77 = por %p75, %p76
      %s78 = ssub.s32 %s37, %s49
      %s79 = ssub.s32 %s38, %s45
      %s80 = sor.u32 %s78, %s79
      %p81 = scmp.eq.s32.totalorder %s80, 0
      %s83 = sadd.s32 %s82, 1
      %s84 = scalar_select %p81, %s82, %s83
      %p87 = pneg %p81
      %p88 = scmp.eq.s32.totalorder %s30, 3
      %p89 = por %p87, %p88
      %p90 = scmp.ne.s32.totalorder %s82, %s85
      %p91 = scmp.eq.s32.totalorder %s30, 0
      %p92 = por %p90, %p91
      %p93 = scmp.ne.s32.totalorder %s82, %s85
      %p94 = scmp.eq.s32.totalorder %s35, 3
      %p95 = por %p93, %p94
      %p96 = scmp.ne.s32.totalorder %s85, %s86
      %p97 = scmp.eq.s32.totalorder %s35, 0
      %p98 = por %p96, %p97
      %p99 = scmp.ne.s32.totalorder %s85, %s86
      %p100 = scmp.eq.s32.totalorder %s36, 3
      %p101 = por %p99, %p100
      %p103 = scmp.ne.s32.totalorder %s86, %s102
      %p104 = scmp.eq.s32.totalorder %s36, 0
      %p105 = por %p103, %p104
      %s107 = sadd.s32 %s106, 1
      %p110 = scmp.eq.s32.totalorder %s30, 3
      %p111 = scmp.ne.s32.totalorder %s106, %s108
      %p112 = scmp.eq.s32.totalorder %s30, 0
      %p113 = por %p111, %p112
      %p114 = scmp.ne.s32.totalorder %s106, %s108
      %p115 = scmp.eq.s32.totalorder %s35, 3
      %p116 = por %p114, %p115
      %p117 = scmp.ne.s32.totalorder %s108, %s109
      %p118 = scmp.eq.s32.totalorder %s35, 0
      %p119 = por %p117, %p118
      %p120 = scmp.ne.s32.totalorder %s108, %s109
      %p121 = scmp.eq.s32.totalorder %s36, 3
      %p122 = por %p120, %p121
      %p124 = scmp.ne.s32.totalorder %s109, %s123
      %p125 = scmp.eq.s32.totalorder %s36, 0
      %p126 = por %p124, %p125
      %s128 = sadd.s32 %s127, 1
      %p131 = scmp.eq.s32.totalorder %s30, 3
      %p132 = scmp.ne.s32.totalorder %s127, %s129
      %p133 = scmp.eq.s32.totalorder %s30, 0
      %p134 = por %p132, %p133
      %p135 = scmp.ne.s32.totalorder %s127, %s129
      %p136 = scmp.eq.s32.totalorder %s35, 3
      %p137 = por %p135, %p136
      %p138 = scmp.ne.s32.totalorder %s129, %s130
      %p139 = scmp.eq.s32.totalorder %s35, 0
      %p140 = por %p138, %p139
      %p141 = scmp.ne.s32.totalorder %s129, %s130
      %p142 = scmp.eq.s32.totalorder %s36, 3
      %p143 = por %p141, %p142
      %p145 = scmp.ne.s32.totalorder %s130, %s144
      %p146 = scmp.eq.s32.totalorder %s36, 0
      %p147 = por %p145, %p146
      %s149 = sadd.s32 %s148, 1
      %p152 = scmp.eq.s32.totalorder %s30, 3
      %p153 = scmp.ne.s32.totalorder %s148, %s150
      %p154 = scmp.eq.s32.totalorder %s30, 0
      %p155 = por %p153, %p154
      %p156 = scmp.ne.s32.totalorder %s148, %s150
      %p157 = scmp.eq.s32.totalorder %s35, 3
      %p158 = por %p156, %p157
      %p159 = scmp.ne.s32.totalorder %s150, %s151
      %p160 = scmp.eq.s32.totalorder %s35, 0
      %p161 = por %p159, %p160
      %p162 = scmp.ne.s32.totalorder %s150, %s151
      %p163 = scmp.eq.s32.totalorder %s36, 3
      %p164 = por %p162, %p163
      %p166 = scmp.ne.s32.totalorder %s151, %s165
      %p167 = scmp.eq.s32.totalorder %s36, 0
      %p168 = por %p166, %p167
      %s170 = sadd.s32 %s169, 1
      %p173 = scmp.eq.s32.totalorder %s30, 3
      %p174 = scmp.ne.s32.totalorder %s169, %s171
      %p175 = scmp.eq.s32.totalorder %s30, 0
      %p176 = por %p174, %p175
      %p177 = scmp.ne.s32.totalorder %s169, %s171
      %p178 = scmp.eq.s32.totalorder %s35, 3
      %p179 = por %p177, %p178
      %p180 = scmp.ne.s32.totalorder %s171, %s172
      %p181 = scmp.eq.s32.totalorder %s35, 0
      %p182 = por %p180, %p181
      %p183 = scmp.ne.s32.totalorder %s171, %s172
      %p184 = scmp.eq.s32.totalorder %s36, 3
      %p185 = por %p183, %p184
      %p187 = scmp.ne.s32.totalorder %s172, %s186
      %p188 = scmp.eq.s32.totalorder %s36, 0
      %p189 = por %p187, %p188
      %s191 = sadd.s32 %s190, 1
      %p194 = scmp.eq.s32.totalorder %s30, 3
      %p195 = scmp.ne.s32.totalorder %s190, %s192
      %p196 = scmp.eq.s32.totalorder %s30, 0
      %p197 = por %p195, %p196
      %p198 = scmp.ne.s32.totalorder %s190, %s192
      %p199 = scmp.eq.s32.totalorder %s35, 3
      %p200 = por %p198, %p199
      %p201 = scmp.ne.s32.totalorder %s192, %s193
      %p202 = scmp.eq.s32.totalorder %s35, 0
      %p203 = por %p201, %p202
      %p204 = scmp.ne.s32.totalorder %s192, %s193
      %p205 = scmp.eq.s32.totalorder %s36, 3
      %p206 = por %p204, %p205
      %p208 = scmp.ne.s32.totalorder %s193, %s207
      %p209 = scmp.eq.s32.totalorder %s36, 0
      %p210 = por %p208, %p209
      %s212 = sadd.s32 %s211, 1
      %p215 = scmp.eq.s32.totalorder %s30, 3
      %p216 = scmp.ne.s32.totalorder %s211, %s213
      %p217 = scmp.eq.s32.totalorder %s30, 0
      %p218 = por %p216, %p217
      %p219 = scmp.ne.s32.totalorder %s211, %s213
      %p220 = scmp.eq.s32.totalorder %s35, 3
      %p221 = por %p219, %p220
      %p222 = scmp.ne.s32.totalorder %s213, %s214
      %p223 = scmp.eq.s32.totalorder %s35, 0
      %p224 = por %p222, %p223
      %p225 = scmp.ne.s32.totalorder %s213, %s214
      %p226 = scmp.eq.s32.totalorder %s36, 3
      %p227 = por %p225, %p226
      %p229 = scmp.ne.s32.totalorder %s214, %s228
      %p230 = scmp.eq.s32.totalorder %s36, 0
      %p231 = por %p229, %p230
      %s233 = sadd.s32 %s232, 1
      %p236 = scmp.eq.s32.totalorder %s30, 3
      %p237 = scmp.ne.s32.totalorder %s232, %s234
      %p238 = scmp.eq.s32.totalorder %s30, 0
      %p239 = por %p237, %p238
      %p240 = scmp.ne.s32.totalorder %s232, %s234
      %p241 = scmp.eq.s32.totalorder %s35, 3
      %p242 = por %p240, %p241
      %p243 = scmp.ne.s32.totalorder %s234, %s235
      %p244 = scmp.eq.s32.totalorder %s35, 0
      %p245 = por %p243, %p244
      %p246 = scmp.ne.s32.totalorder %s234, %s235
      %p247 = scmp.eq.s32.totalorder %s36, 3
      %p248 = por %p246, %p247
      %p250 = scmp.ne.s32.totalorder %s235, %s249
      %p251 = scmp.eq.s32.totalorder %s36, 0
      %p252 = por %p250, %p251
      %s254 = sadd.s32 %s253, 1
      %p257 = scmp.eq.s32.totalorder %s30, 3
      %p258 = scmp.ne.s32.totalorder %s253, %s255
      %p259 = scmp.eq.s32.totalorder %s30, 0
      %p260 = por %p258, %p259
      %p261 = scmp.ne.s32.totalorder %s253, %s255
      %p262 = scmp.eq.s32.totalorder %s35, 3
      %p263 = por %p261, %p262
      %p264 = scmp.ne.s32.totalorder %s255, %s256
      %p265 = scmp.eq.s32.totalorder %s35, 0
      %p266 = por %p264, %p265
      %p267 = scmp.ne.s32.totalorder %s255, %s256
      %p268 = scmp.eq.s32.totalorder %s36, 3
      %p269 = por %p267, %p268
      %p271 = scmp.ne.s32.totalorder %s256, %s270
      %p272 = scmp.eq.s32.totalorder %s36, 0
      %p273 = por %p271, %p272
      %s275 = sadd.s32 %s274, 1
      %p278 = scmp.eq.s32.totalorder %s30, 3
      %p279 = scmp.ne.s32.totalorder %s274, %s276
      %p280 = scmp.eq.s32.totalorder %s30, 0
      %p281 = por %p279, %p280
      %p282 = scmp.ne.s32.totalorder %s274, %s276
      %p283 = scmp.eq.s32.totalorder %s35, 3
      %p284 = por %p282, %p283
      %p285 = scmp.ne.s32.totalorder %s276, %s277
      %p286 = scmp.eq.s32.totalorder %s35, 0
      %p287 = por %p285, %p286
      %p288 = scmp.ne.s32.totalorder %s276, %s277
      %p289 = scmp.eq.s32.totalorder %s36, 3
      %p290 = por %p288, %p289
      %p292 = scmp.ne.s32.totalorder %s277, %s291
      %p293 = scmp.eq.s32.totalorder %s36, 0
      %p294 = por %p292, %p293
      %s296 = sadd.s32 %s295, 1
      %p299 = scmp.eq.s32.totalorder %s30, 3
      %p300 = scmp.ne.s32.totalorder %s295, %s297
      %p301 = scmp.eq.s32.totalorder %s30, 0
      %p302 = por %p300, %p301
      %p303 = scmp.ne.s32.totalorder %s295, %s297
      %p304 = scmp.eq.s32.totalorder %s35, 3
      %p305 = por %p303, %p304
      %p306 = scmp.ne.s32.totalorder %s297, %s298
      %p307 = scmp.eq.s32.totalorder %s35, 0
      %p308 = por %p306, %p307
      %p309 = scmp.ne.s32.totalorder %s297, %s298
      %p310 = scmp.eq.s32.totalorder %s36, 3
      %p311 = por %p309, %p310
      %p313 = scmp.ne.s32.totalorder %s298, %s312
      %p314 = scmp.eq.s32.totalorder %s36, 0
      %p315 = por %p313, %p314
      %s317 = sadd.s32 %s316, 1
      %p320 = scmp.eq.s32.totalorder %s30, 3
      %p321 = scmp.ne.s32.totalorder %s316, %s318
      %p322 = scmp.eq.s32.totalorder %s30, 0
      %p323 = por %p321, %p322
      %p324 = scmp.ne.s32.totalorder %s316, %s318
      %p325 = scmp.eq.s32.totalorder %s35, 3
      %p326 = por %p324, %p325
      %p327 = scmp.ne.s32.totalorder %s318, %s319
      %p328 = scmp.eq.s32.totalorder %s35, 0
      %p329 = por %p327, %p328
      %p330 = scmp.ne.s32.totalorder %s318, %s319
      %p331 = scmp.eq.s32.totalorder %s36, 3
      %p332 = por %p330, %p331
      %p334 = scmp.ne.s32.totalorder %s319, %s333
      %p335 = scmp.eq.s32.totalorder %s36, 0
      %p336 = por %p334, %p335
      %s338 = sadd.s32 %s337, 1
      %p341 = scmp.eq.s32.totalorder %s30, 3
      %p342 = scmp.ne.s32.totalorder %s337, %s339
      %p343 = scmp.eq.s32.totalorder %s30, 0
      %p344 = por %p342, %p343
      %p345 = scmp.ne.s32.totalorder %s337, %s339
      %p346 = scmp.eq.s32.totalorder %s35, 3
      %p347 = por %p345, %p346
      %p348 = scmp.ne.s32.totalorder %s339, %s340
      %p349 = scmp.eq.s32.totalorder %s35, 0
      %p350 = por %p348, %p349
      %p351 = scmp.ne.s32.totalorder %s339, %s340
      %p352 = scmp.eq.s32.totalorder %s36, 3
      %p353 = por %p351, %p352
      %p355 = scmp.ne.s32.totalorder %s340, %s354
      %p356 = scmp.eq.s32.totalorder %s36, 0
      %p357 = por %p355, %p356
      %s359 = sadd.s32 %s358, 1
      %p362 = scmp.eq.s32.totalorder %s30, 3
      %p363 = scmp.ne.s32.totalorder %s358, %s360
      %p364 = scmp.eq.s32.totalorder %s30, 0
      %p365 = por %p363, %p364
      %p366 = scmp.ne.s32.totalorder %s358, %s360
      %p367 = scmp.eq.s32.totalorder %s35, 3
      %p368 = por %p366, %p367
      %p369 = scmp.ne.s32.totalorder %s360, %s361
      %p370 = scmp.eq.s32.totalorder %s35, 0
      %p371 = por %p369, %p370
      %p372 = scmp.ne.s32.totalorder %s360, %s361
      %p373 = scmp.eq.s32.totalorder %s36, 3
      %p374 = por %p372, %p373
      %p376 = scmp.ne.s32.totalorder %s361, %s375
      %p377 = scmp.eq.s32.totalorder %s36, 0
      %p378 = por %p376, %p377
      %s380 = sadd.s32 %s379, 1
      %p383 = scmp.eq.s32.totalorder %s30, 3
      %p384 = scmp.ne.s32.totalorder %s379, %s381
      %p385 = scmp.eq.s32.totalorder %s30, 0
      %p386 = por %p384, %p385
      %p387 = scmp.ne.s32.totalorder %s379, %s381
      %p388 = scmp.eq.s32.totalorder %s35, 3
      %p389 = por %p387, %p388
      %p390 = scmp.ne.s32.totalorder %s381, %s382
      %p391 = scmp.eq.s32.totalorder %s35, 0
      %p392 = por %p390, %p391
      %p393 = scmp.ne.s32.totalorder %s381, %s382
      %p394 = scmp.eq.s32.totalorder %s36, 3
      %p395 = por %p393, %p394
      %p397 = scmp.ne.s32.totalorder %s382, %s396
      %p398 = scmp.eq.s32.totalorder %s36, 0
      %p399 = por %p397, %p398
      %s401 = sadd.s32 %s400, 1
      %p404 = scmp.eq.s32.totalorder %s30, 3
      %p405 = scmp.ne.s32.totalorder %s400, %s402
      %p406 = scmp.eq.s32.totalorder %s30, 0
      %p407 = por %p405, %p406
      %p408 = scmp.ne.s32.totalorder %s400, %s402
      %p409 = scmp.eq.s32.totalorder %s35, 3
      %p410 = por %p408, %p409
      %p411 = scmp.ne.s32.totalorder %s402, %s403
      %p412 = scmp.eq.s32.totalorder %s35, 0
      %p413 = por %p411, %p412
      %p414 = scmp.ne.s32.totalorder %s402, %s403
      %p415 = scmp.eq.s32.totalorder %s36, 3
      %p416 = por %p414, %p415
      %p418 = scmp.ne.s32.totalorder %s403, %s417
      %p419 = scmp.eq.s32.totalorder %s36, 0
      %p420 = por %p418, %p419
      %s422 = sadd.s32 %s421, 1
      %p425 = scmp.eq.s32.totalorder %s30, 3
      %p426 = scmp.ne.s32.totalorder %s421, %s423
      %p427 = scmp.eq.s32.totalorder %s30, 0
      %p428 = por %p426, %p427
      %p429 = scmp.ne.s32.totalorder %s421, %s423
      %p430 = scmp.eq.s32.totalorder %s35, 3
      %p431 = por %p429, %p430
      %p432 = scmp.ne.s32.totalorder %s423, %s424
      %p433 = scmp.eq.s32.totalorder %s35, 0
      %p434 = por %p432, %p433
      %p435 = scmp.ne.s32.totalorder %s423, %s424
      %p436 = scmp.eq.s32.totalorder %s36, 3
      %p437 = por %p435, %p436
      %p439 = scmp.ne.s32.totalorder %s424, %s438
      %p440 = scmp.eq.s32.totalorder %s36, 0
      %p441 = por %p439, %p440
      %s443 = sadd.s32 %s442, 1
      %p446 = scmp.eq.s32.totalorder %s30, 3
      %p447 = scmp.ne.s32.totalorder %s442, %s444
      %p448 = scmp.eq.s32.totalorder %s30, 0
      %p449 = por %p447, %p448
      %p450 = scmp.ne.s32.totalorder %s442, %s444
      %p451 = scmp.eq.s32.totalorder %s35, 3
      %p452 = por %p450, %p451
      %p453 = scmp.ne.s32.totalorder %s444, %s445
      %p454 = scmp.eq.s32.totalorder %s35, 0
      %p455 = por %p453, %p454
      %p456 = scmp.ne.s32.totalorder %s444, %s445
      %p457 = scmp.eq.s32.totalorder %s36, 3
      %p458 = por %p456, %p457
      %p460 = scmp.ne.s32.totalorder %s445, %s459
      %p461 = scmp.eq.s32.totalorder %s36, 0
      %p462 = por %p460, %p461
      %s464 = sadd.s32 %s463, 1
      %p467 = scmp.eq.s32.totalorder %s30, 3
      %p468 = scmp.ne.s32.totalorder %s463, %s465
      %p469 = scmp.eq.s32.totalorder %s30, 0
      %p470 = por %p468, %p469
      %p471 = scmp.ne.s32.totalorder %s463, %s465
      %p472 = scmp.eq.s32.totalorder %s35, 3
      %p473 = por %p471, %p472
      %p474 = scmp.ne.s32.totalorder %s465, %s466
      %p475 = scmp.eq.s32.totalorder %s35, 0
      %p476 = por %p474, %p475
      %p477 = scmp.ne.s32.totalorder %s465, %s466
      %p478 = scmp.eq.s32.totalorder %s36, 3
      %p479 = por %p477, %p478
      %p481 = scmp.ne.s32.totalorder %s466, %s480
      %p482 = scmp.eq.s32.totalorder %s36, 0
      %p483 = por %p481, %p482
      %s484 = ssub.s32 %s37, %s49
      %s485 = ssub.s32 %s38, %s45
      %s486 = sor.u32 %s484, %s485
      %p487 = scmp.eq.s32.totalorder %s486, 0
      %s489 = sadd.s32 %s488, 1
      %s490 = scalar_select %p487, %s488, %s489
      %p493 = pneg %p487
      %p494 = scmp.eq.s32.totalorder %s30, 3
      %p495 = por %p493, %p494
      %p496 = scmp.ne.s32.totalorder %s488, %s491
      %p497 = scmp.eq.s32.totalorder %s30, 0
      %p498 = por %p496, %p497
      %p499 = scmp.ne.s32.totalorder %s488, %s491
      %p500 = scmp.eq.s32.totalorder %s35, 3
      %p501 = por %p499, %p500
      %p502 = scmp.ne.s32.totalorder %s491, %s492
      %p503 = scmp.eq.s32.totalorder %s35, 0
      %p504 = por %p502, %p503
      %p505 = scmp.ne.s32.totalorder %s491, %s492
      %p506 = scmp.eq.s32.totalorder %s36, 3
      %p507 = por %p505, %p506
      %p509 = scmp.ne.s32.totalorder %s492, %s508
      %p510 = scmp.eq.s32.totalorder %s36, 0
      %p511 = por %p509, %p510
      %s512 = ssub.s32 %s37, %s49
      %s513 = ssub.s32 %s38, %s45
      %s514 = sor.u32 %s512, %s513
      %p515 = scmp.eq.s32.totalorder %s514, 0
      %s517 = sadd.s32 %s516, 1
      %s518 = scalar_select %p515, %s516, %s517
      %p521 = pneg %p515
      %p522 = scmp.eq.s32.totalorder %s30, 3
      %p523 = por %p521, %p522
      %p524 = scmp.ne.s32.totalorder %s516, %s519
      %p525 = scmp.eq.s32.totalorder %s30, 0
      %p526 = por %p524, %p525
      %p527 = scmp.ne.s32.totalorder %s516, %s519
      %p528 = scmp.eq.s32.totalorder %s35, 3
      %p529 = por %p527, %p528
      %p530 = scmp.ne.s32.totalorder %s519, %s520
      %p531 = scmp.eq.s32.totalorder %s35, 0
      %p532 = por %p530, %p531
      %p533 = scmp.ne.s32.totalorder %s519, %s520
      %p534 = scmp.eq.s32.totalorder %s36, 3
      %p535 = por %p533, %p534
      %p537 = scmp.ne.s32.totalorder %s520, %s536
      %p538 = scmp.eq.s32.totalorder %s36, 0
      %p539 = por %p537, %p538
      %s540 = ssub.s32 %s37, %s49
      %p541 = scmp.eq.s32.totalorder %s540, 0
      %s543 = sadd.s32 %s542, 1
      %s544 = scalar_select %p541, %s542, %s543
      %p547 = pneg %p541
      %p548 = scmp.eq.s32.totalorder %s30, 3
      %p549 = por %p547, %p548
      %p550 = scmp.ne.s32.totalorder %s542, %s545
      %p551 = scmp.eq.s32.totalorder %s30, 0
      %p552 = por %p550, %p551
      %p553 = scmp.ne.s32.totalorder %s542, %s545
      %p554 = scmp.eq.s32.totalorder %s35, 3
      %p555 = por %p553, %p554
      %p556 = scmp.ne.s32.totalorder %s545, %s546
      %p557 = scmp.eq.s32.totalorder %s35, 0
      %p558 = por %p556, %p557
      %p559 = scmp.ne.s32.totalorder %s545, %s546
      %p560 = scmp.eq.s32.totalorder %s36, 3
      %p561 = por %p559, %p560
      %p563 = scmp.ne.s32.totalorder %s546, %s562
      %p564 = scmp.eq.s32.totalorder %s36, 0
      %p565 = por %p563, %p564
      %s566 = ssub.s32 %s37, %s49
      %p567 = scmp.eq.s32.totalorder %s566, 0
      %s569 = sadd.s32 %s568, 1
      %s570 = scalar_select %p567, %s568, %s569
      %p573 = pneg %p567
      %p574 = scmp.eq.s32.totalorder %s30, 3
      %p575 = por %p573, %p574
      %p576 = scmp.ne.s32.totalorder %s568, %s571
      %p577 = scmp.eq.s32.totalorder %s30, 0
      %p578 = por %p576, %p577
      %p579 = scmp.ne.s32.totalorder %s568, %s571
      %p580 = scmp.eq.s32.totalorder %s35, 3
      %p581 = por %p579, %p580
      %p582 = scmp.ne.s32.totalorder %s571, %s572
      %p583 = scmp.eq.s32.totalorder %s35, 0
      %p584 = por %p582, %p583
      %p585 = scmp.ne.s32.totalorder %s571, %s572
      %p586 = scmp.eq.s32.totalorder %s36, 3
      %p587 = por %p585, %p586
      %p589 = scmp.ne.s32.totalorder %s572, %s588
      %p590 = scmp.eq.s32.totalorder %s36, 0
      %p591 = por %p589, %p590
      %p592 = scmp.le.s32.totalorder 1, %s30
      %p593 = scmp.lt.s32.totalorder %s30, 5
      %p594 = pnand %p592, %p593
      %p595 = pneg %p594
      // Predicated region
      $region9: #{_lambda_.2} parent=5 // pred_check
        _
      $region10: #{_lambda_.2} parent=5 // pred_check_branch
        %597 = sbr.rel (%p594) target = $region12
      $region11: #{_lambda_.2} parent=5 // pred_region
        %s598 = ssub.s32 %s30, 1
        // Predicated region
        $region13: #{_lambda_.2} parent=11 // pred_check
          %p599 = pneg %p119
        $region14: #{_lambda_.2} parent=11 // pred_check_branch
          %601 = sbr.rel (%p599) target = $region16
        $region15: #{_lambda_.2} parent=11 // pred_region
          _
        $region16: #{_lambda_.2} parent=11 // pred_fallthru
          _
        // Predicated region
        $region17: #{_lambda_.2} parent=11 // pred_check
          %p602 = pneg %p140
        $region18: #{_lambda_.2} parent=11 // pred_check_branch
          %604 = sbr.rel (%p602) target = $region20
        $region19: #{_lambda_.2} parent=11 // pred_region
          _
        $region20: #{_lambda_.2} parent=11 // pred_fallthru
          _
        // Predicated region
        $region21: #{_lambda_.2} parent=11 // pred_check
          %p605 = pneg %p161
        $region22: #{_lambda_.2} parent=11 // pred_check_branch
          %607 = sbr.rel (%p605) target = $region24
        $region23: #{_lambda_.2} parent=11 // pred_region
          _
        $region24: #{_lambda_.2} parent=11 // pred_fallthru
          _
        // Predicated region
        $region25: #{_lambda_.2} parent=11 // pred_check
          %p608 = pneg %p182
        $region26: #{_lambda_.2} parent=11 // pred_check_branch
          %610 = sbr.rel (%p608) target = $region28
        $region27: #{_lambda_.2} parent=11 // pred_region
          _
        $region28: #{_lambda_.2} parent=11 // pred_fallthru
          _
        // Predicated region
        $region29: #{_lambda_.2} parent=11 // pred_check
          %p611 = pneg %p203
        $region30: #{_lambda_.2} parent=11 // pred_check_branch
          %613 = sbr.rel (%p611) target = $region32
        $region31: #{_lambda_.2} parent=11 // pred_region
          _
        $region32: #{_lambda_.2} parent=11 // pred_fallthru
          _
        // Predicated region
        $region33: #{_lambda_.2} parent=11 // pred_check
          %p614 = pneg %p224
        $region34: #{_lambda_.2} parent=11 // pred_check_branch
          %616 = sbr.rel (%p614) target = $region36
        $region35: #{_lambda_.2} parent=11 // pred_region
          _
        $region36: #{_lambda_.2} parent=11 // pred_fallthru
          _
        // Predicated region
        $region37: #{_lambda_.2} parent=11 // pred_check
          %p617 = pneg %p245
        $region38: #{_lambda_.2} parent=11 // pred_check_branch
          %619 = sbr.rel (%p617) target = $region40
        $region39: #{_lambda_.2} parent=11 // pred_region
          _
        $region40: #{_lambda_.2} parent=11 // pred_fallthru
          _
        // Predicated region
        $region41: #{_lambda_.2} parent=11 // pred_check
          %p620 = pneg %p266
        $region42: #{_lambda_.2} parent=11 // pred_check_branch
          %622 = sbr.rel (%p620) target = $region44
        $region43: #{_lambda_.2} parent=11 // pred_region
          _
        $region44: #{_lambda_.2} parent=11 // pred_fallthru
          _
        // Predicated region
        $region45: #{_lambda_.2} parent=11 // pred_check
          %p623 = pneg %p287
        $region46: #{_lambda_.2} parent=11 // pred_check_branch
          %625 = sbr.rel (%p623) target = $region48
        $region47: #{_lambda_.2} parent=11 // pred_region
          _
        $region48: #{_lambda_.2} parent=11 // pred_fallthru
          _
        // Predicated region
        $region49: #{_lambda_.2} parent=11 // pred_check
          %p626 = pneg %p308
        $region50: #{_lambda_.2} parent=11 // pred_check_branch
          %628 = sbr.rel (%p626) target = $region52
        $region51: #{_lambda_.2} parent=11 // pred_region
          _
        $region52: #{_lambda_.2} parent=11 // pred_fallthru
          _
        // Predicated region
        $region53: #{_lambda_.2} parent=11 // pred_check
          %p629 = pneg %p329
        $region54: #{_lambda_.2} parent=11 // pred_check_branch
          %631 = sbr.rel (%p629) target = $region56
        $region55: #{_lambda_.2} parent=11 // pred_region
          _
        $region56: #{_lambda_.2} parent=11 // pred_fallthru
          _
        // Predicated region
        $region57: #{_lambda_.2} parent=11 // pred_check
          %p632 = pneg %p350
        $region58: #{_lambda_.2} parent=11 // pred_check_branch
          %634 = sbr.rel (%p632) target = $region60
        $region59: #{_lambda_.2} parent=11 // pred_region
          _
        $region60: #{_lambda_.2} parent=11 // pred_fallthru
          _
        // Predicated region
        $region61: #{_lambda_.2} parent=11 // pred_check
          %p635 = pneg %p371
        $region62: #{_lambda_.2} parent=11 // pred_check_branch
          %637 = sbr.rel (%p635) target = $region64
        $region63: #{_lambda_.2} parent=11 // pred_region
          _
        $region64: #{_lambda_.2} parent=11 // pred_fallthru
          _
        // Predicated region
        $region65: #{_lambda_.2} parent=11 // pred_check
          %p638 = pneg %p392
        $region66: #{_lambda_.2} parent=11 // pred_check_branch
          %640 = sbr.rel (%p638) target = $region68
        $region67: #{_lambda_.2} parent=11 // pred_region
          _
        $region68: #{_lambda_.2} parent=11 // pred_fallthru
          _
        // Predicated region
        $region69: #{_lambda_.2} parent=11 // pred_check
          %p641 = pneg %p413
        $region70: #{_lambda_.2} parent=11 // pred_check_branch
          %643 = sbr.rel (%p641) target = $region72
        $region71: #{_lambda_.2} parent=11 // pred_region
          _
        $region72: #{_lambda_.2} parent=11 // pred_fallthru
          _
        // Predicated region
        $region73: #{_lambda_.2} parent=11 // pred_check
          %p644 = pneg %p434
        $region74: #{_lambda_.2} parent=11 // pred_check_branch
          %646 = sbr.rel (%p644) target = $region76
        $region75: #{_lambda_.2} parent=11 // pred_region
          _
        $region76: #{_lambda_.2} parent=11 // pred_fallthru
          _
        // Predicated region
        $region77: #{_lambda_.2} parent=11 // pred_check
          %p647 = pneg %p455
        $region78: #{_lambda_.2} parent=11 // pred_check_branch
          %649 = sbr.rel (%p647) target = $region80
        $region79: #{_lambda_.2} parent=11 // pred_region
          _
        $region80: #{_lambda_.2} parent=11 // pred_fallthru
          _
        // Predicated region
        $region81: #{_lambda_.2} parent=11 // pred_check
          %p650 = pneg %p476
        $region82: #{_lambda_.2} parent=11 // pred_check_branch
          %652 = sbr.rel (%p650) target = $region84
        $region83: #{_lambda_.2} parent=11 // pred_region
          _
        $region84: #{_lambda_.2} parent=11 // pred_fallthru
          _
      $region12: #{_lambda_.2} parent=5 // pred_fallthru
        _
      %p653 = scmp.lt.s32.totalorder %s30, 4
      // Predicated region
      $region85: #{_lambda_.2} parent=5 // pred_check
        %p654 = pneg %p653
      $region86: #{_lambda_.2} parent=5 // pred_check_branch
        %656 = sbr.rel (%p654) target = $region88
      $region87: #{_lambda_.2} parent=5 // pred_region
        // Predicated region
        $region89: #{_lambda_.2} parent=87 // pred_check
          %p657 = pneg %p64
        $region90: #{_lambda_.2} parent=87 // pred_check_branch
          %659 = sbr.rel (%p657) target = $region92
        $region91: #{_lambda_.2} parent=87 // pred_region
          %s660 = smul.u32 32, %s38
          %p661 = scmp.lt.s32.totalorder %s37, 1
          %s662 = scalar_select %p661, %s37, 1
          %p663 = scmp.lt.s32.totalorder %s660, 63
          %s664 = scalar_select %p663, %s660, 63
          %s665 = smul.addr %s662, 64
          %s666 = sadd.s32 %s664, %s665
          %s667 = smul.addr %s666, 8
          %s668 = scalar_lea.vmem %s0, %s667
          %s669 = smul.u32 32, %s38
        $region92: #{_lambda_.2} parent=87 // pred_fallthru
          _
        // Predicated region
        $region93: #{_lambda_.2} parent=87 // pred_check
          %p670 = pneg %p92
        $region94: #{_lambda_.2} parent=87 // pred_check_branch
          %672 = sbr.rel (%p670) target = $region96
        $region95: #{_lambda_.2} parent=87 // pred_region
          %s673 = smul.u32 2, %s38
          %p674 = scmp.lt.s32.totalorder %s37, 1
          %s675 = scalar_select %p674, %s37, 1
          %p676 = scmp.lt.s32.totalorder %s673, 3
          %s677 = scalar_select %p676, %s673, 3
          %s678 = smul.addr %s675, 4
          %s679 = sadd.s32 %s677, %s678
          %s680 = scalar_lea.vmem %s1, %s679
          %s681 = smul.u32 2, %s38
        $region96: #{_lambda_.2} parent=87 // pred_fallthru
          _
      $region88: #{_lambda_.2} parent=5 // pred_fallthru
        _
      %p682 = scmp.le.s32.totalorder 1, %s30
      %p683 = scmp.lt.s32.totalorder %s30, 5
      %p684 = pnand %p682, %p683
      %p685 = pneg %p684
      // Predicated region
      $region97: #{_lambda_.2} parent=5 // pred_check
        _
      $region98: #{_lambda_.2} parent=5 // pred_check_branch
        %687 = sbr.rel (%p684) target = $region100
      $region99: #{_lambda_.2} parent=5 // pred_region
        %s688 = ssub.s32 %s30, 1
        %s689 = smul.u32 32, %s40
        %p690 = scmp.lt.s32.totalorder %s39, 1
        %s691 = scalar_select %p690, %s39, 1
        %p692 = scmp.lt.s32.totalorder %s689, 63
        %s693 = scalar_select %p692, %s689, 63
        %s694 = smul.addr %s691, 64
        %s695 = sadd.s32 %s693, %s694
        %s696 = smul.addr %s695, 8
        %s697 = scalar_lea.vmem %s0, %s696
        %p698 = pneg %p70
        %p699 = pneg %p67
        %s700 = smul.u32 2, %s40
        %p701 = scmp.lt.s32.totalorder %s39, 1
        %s702 = scalar_select %p701, %s39, 1
        %p703 = scmp.lt.s32.totalorder %s700, 3
        %s704 = scalar_select %p703, %s700, 3
        %s705 = smul.addr %s702, 4
        %s706 = sadd.s32 %s704, %s705
        %s707 = scalar_lea.vmem %s1, %s706
        %p708 = pneg %p98
        %p709 = pneg %p95
        %p710 = pneg %p119
        %p711 = pneg %p116
        %p712 = pneg %p140
        %p713 = pneg %p137
        %p714 = pneg %p161
        %p715 = pneg %p158
        %p716 = pneg %p182
        %p717 = pneg %p179
        %p718 = pneg %p203
        %p719 = pneg %p200
        %p720 = pneg %p224
        %p721 = pneg %p221
        %p722 = pneg %p245
        %p723 = pneg %p242
        %p724 = pneg %p266
        %p725 = pneg %p263
        %p726 = pneg %p287
        %p727 = pneg %p284
        %p728 = pneg %p308
        %p729 = pneg %p305
        %p730 = pneg %p329
        %p731 = pneg %p326
        %p732 = pneg %p350
        %p733 = pneg %p347
        %p734 = pneg %p371
        %p735 = pneg %p368
        %p736 = pneg %p392
        %p737 = pneg %p389
        %p738 = pneg %p413
        %p739 = pneg %p410
        %p740 = pneg %p434
        %p741 = pneg %p431
        %p742 = pneg %p455
        %p743 = pneg %p452
        %p744 = pneg %p476
        %p745 = pneg %p473
        %p746 = pneg %p504
        %p747 = pneg %p501
        %s748 = sand.u32 %s491, 1
        %s749 = sand.u32 %s491, 1
        %s750 = smul.addr %s749, 32
        %s751 = scalar_lea.vmem [#allocation2], %s750
        %p752 = pneg %p532
        %p753 = pneg %p529
        %s754 = sand.u32 %s519, 1
        %s755 = sand.u32 %s519, 1
        %s756 = smul.addr %s755, 32
        %s757 = scalar_lea.vmem [#allocation3], %s756
        %p758 = pneg %p558
        %p759 = pneg %p555
        %p760 = scmp.lt.s32.totalorder %s39, 1
        %s761 = scalar_select %p760, %s39, 1
        %s762 = smul.addr %s761, 4
        %s763 = smul.addr %s762, 8
        %s764 = scalar_lea.vmem %s22, %s763
        %p765 = pneg %p584
        %p766 = pneg %p581
        %p767 = scmp.lt.s32.totalorder %s39, 1
        %s768 = scalar_select %p767, %s39, 1
        %s769 = smul.addr %s768, 4
        %s770 = smul.addr %s769, 8
        %s771 = scalar_lea.vmem %s23, %s770
        %s772 = smul.u32 32, %s40
        %p773 = scmp.lt.s32.totalorder %s39, 1
        %s774 = scalar_select %p773, %s39, 1
        %p775 = scmp.lt.s32.totalorder %s772, 63
        %s776 = scalar_select %p775, %s772, 63
        %s777 = smul.addr %s774, 64
        %s778 = sadd.s32 %s776, %s777
        %s779 = smul.addr %s778, 8
        %s780 = scalar_lea.vmem %s0, %s779
        %s781 = smul.u32 32, %s40
        %s782 = smul.u32 2, %s40
        %p783 = scmp.lt.s32.totalorder %s39, 1
        %s784 = scalar_select %p783, %s39, 1
        %p785 = scmp.lt.s32.totalorder %s782, 3
        %s786 = scalar_select %p785, %s782, 3
        %s787 = smul.addr %s784, 4
        %s788 = sadd.s32 %s786, %s787
        %s789 = scalar_lea.vmem %s1, %s788
        %s790 = smul.u32 2, %s40
        %s791 = smul.u32 2, %s40
        %s792 = smul.u32 2, %s40
        %p793 = scmp.lt.s32.totalorder %s39, 1
        %s794 = scalar_select %p793, %s39, 1
        %s795 = smul.addr %s794, 4
        %s796 = smul.addr %s795, 8
        %s797 = scalar_lea.vmem %s22, %s796
        %p798 = scmp.lt.s32.totalorder %s39, 1
        %s799 = scalar_select %p798, %s39, 1
        %s800 = smul.addr %s799, 4
        %s801 = smul.addr %s800, 8
        %s802 = scalar_lea.vmem %s23, %s801
        %v803 = vld [vmem:[%s780] sm:$0xff]
        %v804 = vld [vmem:[%s780 + $0x8] sm:$0xff]
        %v805 = vld [vmem:[%s780 + $0x10] sm:$0xff]
        %v806 = vld [vmem:[%s780 + $0x18] sm:$0xff]
        %v807 = vld [vmem:[%s780 + $0x20] sm:$0xff]
        %v808 = vld [vmem:[%s780 + $0x28] sm:$0xff]
        %v809 = vld [vmem:[%s780 + $0x30] sm:$0xff]
        %v810 = vld [vmem:[%s780 + $0x38] sm:$0xff]
        %v811 = vld [vmem:[%s780 + $0x40] sm:$0xff]
        %v812 = vld [vmem:[%s780 + $0x48] sm:$0xff]
        %v813 = vld [vmem:[%s780 + $0x50] sm:$0xff]
        %v814 = vld [vmem:[%s780 + $0x58] sm:$0xff]
        %v815 = vld [vmem:[%s780 + $0x60] sm:$0xff]
        %v816 = vld [vmem:[%s780 + $0x68] sm:$0xff]
        %v817 = vld [vmem:[%s780 + $0x70] sm:$0xff]
        %v818 = vld [vmem:[%s780 + $0x78] sm:$0xff]
        %v819 = vld [vmem:[%s780 + $0x80] sm:$0xff]
        %v820 = vld [vmem:[%s780 + $0x88] sm:$0xff]
        %v821 = vld [vmem:[%s780 + $0x90] sm:$0xff]
        %v822 = vld [vmem:[%s780 + $0x98] sm:$0xff]
        %v823 = vld [vmem:[%s780 + $0xa0] sm:$0xff]
        %v824 = vld [vmem:[%s780 + $0xa8] sm:$0xff]
        %v825 = vld [vmem:[%s780 + $0xb0] sm:$0xff]
        %v826 = vld [vmem:[%s780 + $0xb8] sm:$0xff]
        %v827 = vld [vmem:[%s780 + $0xc0] sm:$0xff]
        %v828 = vld [vmem:[%s780 + $0xc8] sm:$0xff]
        %v829 = vld [vmem:[%s780 + $0xd0] sm:$0xff]
        %v830 = vld [vmem:[%s780 + $0xd8] sm:$0xff]
        %v831 = vld [vmem:[%s780 + $0xe0] sm:$0xff]
        %v832 = vld [vmem:[%s780 + $0xe8] sm:$0xff]
        %v833 = vld [vmem:[%s780 + $0xf0] sm:$0xff]
        %v834 = vld [vmem:[%s780 + $0xf8] sm:$0xff]
        %v835 = vld [vmem:[%s2] sm:$0xff]
        %v836 = vld [vmem:[%s2 + $0x8] sm:$0xff]
        %vm837 = vcmask 64512
        %v839 = vsel %vm837, %v835, 0
        %v842 = vsel %vm837, %v836, 0
        %v845 = vsel %vm837, %v803, 0
        %v848 = vsel %vm837, %v804, 0
        %v851 = vsel %vm837, %v805, 0
        %v854 = vsel %vm837, %v806, 0
        %v857 = vsel %vm837, %v807, 0
        %v860 = vsel %vm837, %v808, 0
        %v863 = vsel %vm837, %v809, 0
        %v866 = vsel %vm837, %v810, 0
        %v869 = vsel %vm837, %v811, 0
        %v872 = vsel %vm837, %v812, 0
        %v875 = vsel %vm837, %v813, 0
        %v878 = vsel %vm837, %v814, 0
        %v881 = vsel %vm837, %v815, 0
        %v884 = vsel %vm837, %v816, 0
        %v887 = vsel %vm837, %v817, 0
        %v890 = vsel %vm837, %v818, 0
        %v893 = vsel %vm837, %v819, 0
        %v896 = vsel %vm837, %v820, 0
        %v899 = vsel %vm837, %v821, 0
        %v902 = vsel %vm837, %v822, 0
        %v905 = vsel %vm837, %v823, 0
        %v908 = vsel %vm837, %v824, 0
        %v911 = vsel %vm837, %v825, 0
        %v914 = vsel %vm837, %v826, 0
        %v917 = vsel %vm837, %v827, 0
        %v920 = vsel %vm837, %v828, 0
        %v923 = vsel %vm837, %v829, 0
        %v926 = vsel %vm837, %v830, 0
        %v929 = vsel %vm837, %v831, 0
        %v932 = vsel %vm837, %v832, 0
        %v935 = vsel %vm837, %v833, 0
        %v938 = vsel %vm837, %v834, 0
        %940 = vmatpush.xpose.msra.mxu0 %v890
        %941 = vmatpush.xpose.msra.mxu0 %v887
        %942 = vmatpush.xpose.msra.mxu0 %v884
        %943 = vmatpush.xpose.msra.mxu0 %v881
        %944 = vmatpush.xpose.msra.mxu0 %v878
        %945 = vmatpush.xpose.msra.mxu0 %v875
        %946 = vmatpush.xpose.msra.mxu0 %v872
        %947 = vmatpush.xpose.msra.mxu0 %v869
        %948 = vmatpush.xpose.msra.mxu0 %v866
        %949 = vmatpush.xpose.msra.mxu0 %v863
        %950 = vmatpush.xpose.msra.mxu0 %v860
        %951 = vmatpush.xpose.msra.mxu0 %v857
        %952 = vmatpush.xpose.msra.mxu0 %v854
        %953 = vmatpush.xpose.msra.mxu0 %v851
        %954 = vmatpush.xpose.msra.mxu0 %v848
        %955 = vmatpush.xpose.msra.mxu0 %v845
        %956 = vmatmul.f32.gmra.mxu0 %v839
        %v957 = vpop.f32.mrf.mxu0
        %v958 = vadd.f32 0.0, %v957
        %959 = vmatmul.f32.gmra.mxu0 %v842
        %v960 = vpop.f32.mrf.mxu0
        %v961 = vadd.f32 0.0, %v960
        %962 = vdwg.mxu0
        %963 = vmatpush.xpose.msra.mxu0 %v938
        %964 = vmatpush.xpose.msra.mxu0 %v935
        %965 = vmatpush.xpose.msra.mxu0 %v932
        %966 = vmatpush.xpose.msra.mxu0 %v929
        %967 = vmatpush.xpose.msra.mxu0 %v926
        %968 = vmatpush.xpose.msra.mxu0 %v923
        %969 = vmatpush.xpose.msra.mxu0 %v920
        %970 = vmatpush.xpose.msra.mxu0 %v917
        %971 = vmatpush.xpose.msra.mxu0 %v914
        %972 = vmatpush.xpose.msra.mxu0 %v911
        %973 = vmatpush.xpose.msra.mxu0 %v908
        %974 = vmatpush.xpose.msra.mxu0 %v905
        %975 = vmatpush.xpose.msra.mxu0 %v902
        %976 = vmatpush.xpose.msra.mxu0 %v899
        %977 = vmatpush.xpose.msra.mxu0 %v896
        %978 = vmatpush.xpose.msra.mxu0 %v893
        %979 = vmatmul.f32.gmra.mxu0 %v839
        %v980 = vpop.f32.mrf.mxu0
        %v981 = vadd.f32 0.0, %v980
        %982 = vmatmul.f32.gmra.mxu0 %v842
        %v983 = vpop.f32.mrf.mxu0
        %v984 = vadd.f32 0.0, %v983
        %985 = vdwg.mxu0
        %v986 = vld [vmem:[%s3] sm:$0xff]
        %v987 = vld [vmem:[%s3 + $0x8] sm:$0xff]
        %989 = vset.pattern.permute.xlu0 0
        %990 = vperm.xlu0 %989, %v986
        %v991 = vpop.permute.xlu0 %990
        %994 = vset.pattern.permute.xlu0 0
        %995 = vperm.xlu0 %994, %v987
        %v996 = vpop.permute.xlu0 %995
        %v998 = vmul.f32 %v958, %v991
        %v999 = vmul.f32 %v981, %v991
        %v1000 = vmul.f32 %v961, %v996
        %v1001 = vmul.f32 %v984, %v996
        %v1002 = vld [vmem:[%s4] sm:$0xff]
        %v1003 = vld [vmem:[%s4 + $0x8] sm:$0xff]
        %1005 = vset.pattern.permute.xlu0 0
        %1006 = vperm.xlu0 %1005, %v1002
        %v1007 = vpop.permute.xlu0 %1006
        %1010 = vset.pattern.permute.xlu0 0
        %1011 = vperm.xlu0 %1010, %v1003
        %v1012 = vpop.permute.xlu0 %1011
        %v1014 = vadd.f32 %v998, %v1007
        %v1015 = vadd.f32 %v999, %v1007
        %v1016 = vadd.f32 %v1000, %v1012
        %v1017 = vadd.f32 %v1001, %v1012
        %vm1018 = vcmp.ge.f32.partialorder %v1014, 0.0
        %vm1019 = vcmp.ge.f32.partialorder %v1015, 0.0
        %vm1020 = vcmp.ge.f32.partialorder %v1016, 0.0
        %vm1021 = vcmp.ge.f32.partialorder %v1017, 0.0
        %v1022 = vmul.f32 %v1014, 0.2
        %v1023 = vmul.f32 %v1015, 0.2
        %v1024 = vmul.f32 %v1016, 0.2
        %v1025 = vmul.f32 %v1017, 0.2
        %v1026 = vsel %vm1018, %v1014, %v1022
        %v1027 = vsel %vm1019, %v1015, %v1023
        %v1028 = vsel %vm1020, %v1016, %v1024
        %v1029 = vsel %vm1021, %v1017, %v1025
        %v1030 = vld [vmem:[%s5] sm:$0xff]
        %v1031 = vld [vmem:[%s5 + $0x8] sm:$0xff]
        %v1032 = vld [vmem:[%s5 + $0x10] sm:$0xff]
        %v1033 = vld [vmem:[%s5 + $0x18] sm:$0xff]
        %v1034 = vld [vmem:[%s6] sm:$0xff]
        %v1035 = vld [vmem:[%s6 + $0x8] sm:$0xff]
        %v1036 = vld [vmem:[%s6 + $0x10] sm:$0xff]
        %v1037 = vld [vmem:[%s6 + $0x18] sm:$0xff]
        %v1038 = vld [vmem:[%s7] sm:$0xff]
        %v1039 = vld [vmem:[%s7 + $0x8] sm:$0xff]
        %v1040 = vld [vmem:[%s7 + $0x10] sm:$0xff]
        %v1041 = vld [vmem:[%s7 + $0x18] sm:$0xff]
        %vm1042 = vcmask 130048
        %v1044 = vsel %vm1042, %v1030, 0
        %v1047 = vsel %vm1042, %v1031, 0
        %v1050 = vsel %vm1042, %v1032, 0
        %v1053 = vsel %vm1042, %v1033, 0
        %1055 = vmatpush.msra.mxu0 0.0
        %1056 = vmatpush.msra.mxu0 0.0
        %1057 = vmatpush.msra.mxu0 0.0
        %1058 = vmatpush.msra.mxu0 0.0
        %1059 = vmatpush.msra.mxu0 0.0
        %1060 = vmatpush.msra.mxu0 0.0
        %1061 = vmatpush.msra.mxu0 0.0
        %1062 = vmatpush.msra.mxu0 0.0
        %1063 = vmatpush.msra.mxu0 0.0
        %1064 = vmatpush.msra.mxu0 0.0
        %1065 = vmatpush.msra.mxu0 0.0
        %1066 = vmatpush.msra.mxu0 0.0
        %1067 = vmatpush.msra.mxu0 0.0
        %1068 = vmatpush.msra.mxu0 0.0
        %1069 = vmatpush.msra.mxu0 %v1028
        %1070 = vmatpush.msra.mxu0 %v1026
        %1071 = vmatmul.f32.gmra.mxu0 %v1044
        %v1072 = vpop.f32.mrf.mxu0
        %v1073 = vadd.f32 0.0, %v1072
        %1074 = vmatmul.f32.gmra.mxu0 %v1047
        %v1075 = vpop.f32.mrf.mxu0
        %v1076 = vadd.f32 0.0, %v1075
        %1077 = vmatmul.f32.gmra.mxu0 %v1050
        %v1078 = vpop.f32.mrf.mxu0
        %v1079 = vadd.f32 0.0, %v1078
        %1080 = vmatmul.f32.gmra.mxu0 %v1053
        %v1081 = vpop.f32.mrf.mxu0
        %v1082 = vadd.f32 0.0, %v1081
        %1083 = vdwg.mxu0
        %1084 = vmatpush.msra.mxu0 0.0
        %1085 = vmatpush.msra.mxu0 0.0
        %1086 = vmatpush.msra.mxu0 0.0
        %1087 = vmatpush.msra.mxu0 0.0
        %1088 = vmatpush.msra.mxu0 0.0
        %1089 = vmatpush.msra.mxu0 0.0
        %1090 = vmatpush.msra.mxu0 0.0
        %1091 = vmatpush.msra.mxu0 0.0
        %1092 = vmatpush.msra.mxu0 0.0
        %1093 = vmatpush.msra.mxu0 0.0
        %1094 = vmatpush.msra.mxu0 0.0
        %1095 = vmatpush.msra.mxu0 0.0
        %1096 = vmatpush.msra.mxu0 0.0
        %1097 = vmatpush.msra.mxu0 0.0
        %1098 = vmatpush.msra.mxu0 %v1029
        %1099 = vmatpush.msra.mxu0 %v1027
        %1100 = vmatmul.f32.gmra.mxu0 %v1044
        %v1101 = vpop.f32.mrf.mxu0
        %v1102 = vadd.f32 0.0, %v1101
        %1103 = vmatmul.f32.gmra.mxu0 %v1047
        %v1104 = vpop.f32.mrf.mxu0
        %v1105 = vadd.f32 0.0, %v1104
        %1106 = vmatmul.f32.gmra.mxu0 %v1050
        %v1107 = vpop.f32.mrf.mxu0
        %v1108 = vadd.f32 0.0, %v1107
        %1109 = vmatmul.f32.gmra.mxu0 %v1053
        %v1110 = vpop.f32.mrf.mxu0
        %v1111 = vadd.f32 0.0, %v1110
        %1112 = vdwg.mxu0
        %1114 = vset.pattern.permute.xlu0 0
        %1115 = vperm.xlu0 %1114, %v1034
        %v1116 = vpop.permute.xlu0 %1115
        %1119 = vset.pattern.permute.xlu0 0
        %1120 = vperm.xlu0 %1119, %v1035
        %v1121 = vpop.permute.xlu0 %1120
        %1124 = vset.pattern.permute.xlu0 0
        %1125 = vperm.xlu0 %1124, %v1036
        %v1126 = vpop.permute.xlu0 %1125
        %1129 = vset.pattern.permute.xlu0 0
        %1130 = vperm.xlu0 %1129, %v1037
        %v1131 = vpop.permute.xlu0 %1130
        %v1133 = vmul.f32 %v1073, %v1116
        %v1134 = vmul.f32 %v1102, %v1116
        %v1135 = vmul.f32 %v1076, %v1121
        %v1136 = vmul.f32 %v1105, %v1121
        %v1137 = vmul.f32 %v1079, %v1126
        %v1138 = vmul.f32 %v1108, %v1126
        %v1139 = vmul.f32 %v1082, %v1131
        %v1140 = vmul.f32 %v1111, %v1131
        %1142 = vset.pattern.permute.xlu0 0
        %1143 = vperm.xlu0 %1142, %v1038
        %v1144 = vpop.permute.xlu0 %1143
        %1147 = vset.pattern.permute.xlu0 0
        %1148 = vperm.xlu0 %1147, %v1039
        %v1149 = vpop.permute.xlu0 %1148
        %1152 = vset.pattern.permute.xlu0 0
        %1153 = vperm.xlu0 %1152, %v1040
        %v1154 = vpop.permute.xlu0 %1153
        %1157 = vset.pattern.permute.xlu0 0
        %1158 = vperm.xlu0 %1157, %v1041
        %v1159 = vpop.permute.xlu0 %1158
        %v1161 = vadd.f32 %v1133, %v1144
        %v1162 = vadd.f32 %v1134, %v1144
        %v1163 = vadd.f32 %v1135, %v1149
        %v1164 = vadd.f32 %v1136, %v1149
        %v1165 = vadd.f32 %v1137, %v1154
        %v1166 = vadd.f32 %v1138, %v1154
        %v1167 = vadd.f32 %v1139, %v1159
        %v1168 = vadd.f32 %v1140, %v1159
        %vm1169 = vcmp.ge.f32.partialorder %v1161, 0.0
        %vm1170 = vcmp.ge.f32.partialorder %v1162, 0.0
        %vm1171 = vcmp.ge.f32.partialorder %v1163, 0.0
        %vm1172 = vcmp.ge.f32.partialorder %v1164, 0.0
        %vm1173 = vcmp.ge.f32.partialorder %v1165, 0.0
        %vm1174 = vcmp.ge.f32.partialorder %v1166, 0.0
        %vm1175 = vcmp.ge.f32.partialorder %v1167, 0.0
        %vm1176 = vcmp.ge.f32.partialorder %v1168, 0.0
        %v1177 = vmul.f32 %v1161, 0.2
        %v1178 = vmul.f32 %v1162, 0.2
        %v1179 = vmul.f32 %v1163, 0.2
        %v1180 = vmul.f32 %v1164, 0.2
        %v1181 = vmul.f32 %v1165, 0.2
        %v1182 = vmul.f32 %v1166, 0.2
        %v1183 = vmul.f32 %v1167, 0.2
        %v1184 = vmul.f32 %v1168, 0.2
        %v1185 = vsel %vm1169, %v1161, %v1177
        %v1186 = vsel %vm1170, %v1162, %v1178
        %v1187 = vsel %vm1171, %v1163, %v1179
        %v1188 = vsel %vm1172, %v1164, %v1180
        %v1189 = vsel %vm1173, %v1165, %v1181
        %v1190 = vsel %vm1174, %v1166, %v1182
        %v1191 = vsel %vm1175, %v1167, %v1183
        %v1192 = vsel %vm1176, %v1168, %v1184
        %v1193 = vld [vmem:[%s8] sm:$0xff]
        %v1194 = vld [vmem:[%s8 + $0x8] sm:$0xff]
        %v1195 = vld [vmem:[%s8 + $0x10] sm:$0xff]
        %v1196 = vld [vmem:[%s8 + $0x18] sm:$0xff]
        %v1197 = vld [vmem:[%s9] sm:$0xff]
        %v1198 = vld [vmem:[%s9 + $0x8] sm:$0xff]
        %v1199 = vld [vmem:[%s9 + $0x10] sm:$0xff]
        %v1200 = vld [vmem:[%s9 + $0x18] sm:$0xff]
        %v1201 = vld [vmem:[%s10] sm:$0xff]
        %v1202 = vld [vmem:[%s10 + $0x8] sm:$0xff]
        %v1203 = vld [vmem:[%s10 + $0x10] sm:$0xff]
        %v1204 = vld [vmem:[%s10 + $0x18] sm:$0xff]
        %vm1205 = vcmask 261120
        %v1207 = vsel %vm1205, %v1193, 0
        %v1210 = vsel %vm1205, %v1194, 0
        %v1213 = vsel %vm1205, %v1195, 0
        %v1216 = vsel %vm1205, %v1196, 0
        %1218 = vmatpush.msra.mxu0 0.0
        %1219 = vmatpush.msra.mxu0 0.0
        %1220 = vmatpush.msra.mxu0 0.0
        %1221 = vmatpush.msra.mxu0 0.0
        %1222 = vmatpush.msra.mxu0 0.0
        %1223 = vmatpush.msra.mxu0 0.0
        %1224 = vmatpush.msra.mxu0 0.0
        %1225 = vmatpush.msra.mxu0 0.0
        %1226 = vmatpush.msra.mxu0 0.0
        %1227 = vmatpush.msra.mxu0 0.0
        %1228 = vmatpush.msra.mxu0 0.0
        %1229 = vmatpush.msra.mxu0 0.0
        %1230 = vmatpush.msra.mxu0 %v1191
        %1231 = vmatpush.msra.mxu0 %v1189
        %1232 = vmatpush.msra.mxu0 %v1187
        %1233 = vmatpush.msra.mxu0 %v1185
        %1234 = vmatmul.f32.gmra.mxu0 %v1207
        %v1235 = vpop.f32.mrf.mxu0
        %v1236 = vadd.f32 0.0, %v1235
        %1237 = vmatmul.f32.gmra.mxu0 %v1210
        %v1238 = vpop.f32.mrf.mxu0
        %v1239 = vadd.f32 0.0, %v1238
        %1240 = vmatmul.f32.gmra.mxu0 %v1213
        %v1241 = vpop.f32.mrf.mxu0
        %v1242 = vadd.f32 0.0, %v1241
        %1243 = vmatmul.f32.gmra.mxu0 %v1216
        %v1244 = vpop.f32.mrf.mxu0
        %v1245 = vadd.f32 0.0, %v1244
        %1246 = vdwg.mxu0
        %1247 = vmatpush.msra.mxu0 0.0
        %1248 = vmatpush.msra.mxu0 0.0
        %1249 = vmatpush.msra.mxu0 0.0
        %1250 = vmatpush.msra.mxu0 0.0
        %1251 = vmatpush.msra.mxu0 0.0
        %1252 = vmatpush.msra.mxu0 0.0
        %1253 = vmatpush.msra.mxu0 0.0
        %1254 = vmatpush.msra.mxu0 0.0
        %1255 = vmatpush.msra.mxu0 0.0
        %1256 = vmatpush.msra.mxu0 0.0
        %1257 = vmatpush.msra.mxu0 0.0
        %1258 = vmatpush.msra.mxu0 0.0
        %1259 = vmatpush.msra.mxu0 %v1192
        %1260 = vmatpush.msra.mxu0 %v1190
        %1261 = vmatpush.msra.mxu0 %v1188
        %1262 = vmatpush.msra.mxu0 %v1186
        %1263 = vmatmul.f32.gmra.mxu0 %v1207
        %v1264 = vpop.f32.mrf.mxu0
        %v1265 = vadd.f32 0.0, %v1264
        %1266 = vmatmul.f32.gmra.mxu0 %v1210
        %v1267 = vpop.f32.mrf.mxu0
        %v1268 = vadd.f32 0.0, %v1267
        %1269 = vmatmul.f32.gmra.mxu0 %v1213
        %v1270 = vpop.f32.mrf.mxu0
        %v1271 = vadd.f32 0.0, %v1270
        %1272 = vmatmul.f32.gmra.mxu0 %v1216
        %v1273 = vpop.f32.mrf.mxu0
        %v1274 = vadd.f32 0.0, %v1273
        %1275 = vdwg.mxu0
        %1277 = vset.pattern.permute.xlu0 0
        %1278 = vperm.xlu0 %1277, %v1197
        %v1279 = vpop.permute.xlu0 %1278
        %1282 = vset.pattern.permute.xlu0 0
        %1283 = vperm.xlu0 %1282, %v1198
        %v1284 = vpop.permute.xlu0 %1283
        %1287 = vset.pattern.permute.xlu0 0
        %1288 = vperm.xlu0 %1287, %v1199
        %v1289 = vpop.permute.xlu0 %1288
        %1292 = vset.pattern.permute.xlu0 0
        %1293 = vperm.xlu0 %1292, %v1200
        %v1294 = vpop.permute.xlu0 %1293
        %v1296 = vmul.f32 %v1236, %v1279
        %v1297 = vmul.f32 %v1265, %v1279
        %v1298 = vmul.f32 %v1239, %v1284
        %v1299 = vmul.f32 %v1268, %v1284
        %v1300 = vmul.f32 %v1242, %v1289
        %v1301 = vmul.f32 %v1271, %v1289
        %v1302 = vmul.f32 %v1245, %v1294
        %v1303 = vmul.f32 %v1274, %v1294
        %1305 = vset.pattern.permute.xlu0 0
        %1306 = vperm.xlu0 %1305, %v1201
        %v1307 = vpop.permute.xlu0 %1306
        %1310 = vset.pattern.permute.xlu0 0
        %1311 = vperm.xlu0 %1310, %v1202
        %v1312 = vpop.permute.xlu0 %1311
        %1315 = vset.pattern.permute.xlu0 0
        %1316 = vperm.xlu0 %1315, %v1203
        %v1317 = vpop.permute.xlu0 %1316
        %1320 = vset.pattern.permute.xlu0 0
        %1321 = vperm.xlu0 %1320, %v1204
        %v1322 = vpop.permute.xlu0 %1321
        %v1324 = vadd.f32 %v1296, %v1307
        %v1325 = vadd.f32 %v1297, %v1307
        %v1326 = vadd.f32 %v1298, %v1312
        %v1327 = vadd.f32 %v1299, %v1312
        %v1328 = vadd.f32 %v1300, %v1317
        %v1329 = vadd.f32 %v1301, %v1317
        %v1330 = vadd.f32 %v1302, %v1322
        %v1331 = vadd.f32 %v1303, %v1322
        %vm1332 = vcmp.ge.f32.partialorder %v1324, 0.0
        %vm1333 = vcmp.ge.f32.partialorder %v1325, 0.0
        %vm1334 = vcmp.ge.f32.partialorder %v1326, 0.0
        %vm1335 = vcmp.ge.f32.partialorder %v1327, 0.0
        %vm1336 = vcmp.ge.f32.partialorder %v1328, 0.0
        %vm1337 = vcmp.ge.f32.partialorder %v1329, 0.0
        %vm1338 = vcmp.ge.f32.partialorder %v1330, 0.0
        %vm1339 = vcmp.ge.f32.partialorder %v1331, 0.0
        %v1340 = vmul.f32 %v1324, 0.2
        %v1341 = vmul.f32 %v1325, 0.2
        %v1342 = vmul.f32 %v1326, 0.2
        %v1343 = vmul.f32 %v1327, 0.2
        %v1344 = vmul.f32 %v1328, 0.2
        %v1345 = vmul.f32 %v1329, 0.2
        %v1346 = vmul.f32 %v1330, 0.2
        %v1347 = vmul.f32 %v1331, 0.2
        %v1348 = vsel %vm1332, %v1324, %v1340
        %v1349 = vsel %vm1333, %v1325, %v1341
        %v1350 = vsel %vm1334, %v1326, %v1342
        %v1351 = vsel %vm1335, %v1327, %v1343
        %v1352 = vsel %vm1336, %v1328, %v1344
        %v1353 = vsel %vm1337, %v1329, %v1345
        %v1354 = vsel %vm1338, %v1330, %v1346
        %v1355 = vsel %vm1339, %v1331, %v1347
        %v1356 = vld [vmem:[%s11] sm:$0xff]
        %v1357 = vld [vmem:[%s11 + $0x8] sm:$0xff]
        %v1358 = vld [vmem:[%s11 + $0x10] sm:$0xff]
        %v1359 = vld [vmem:[%s11 + $0x18] sm:$0xff]
        %v1360 = vld [vmem:[%s12] sm:$0xff]
        %v1361 = vld [vmem:[%s12 + $0x8] sm:$0xff]
        %v1362 = vld [vmem:[%s12 + $0x10] sm:$0xff]
        %v1363 = vld [vmem:[%s12 + $0x18] sm:$0xff]
        %v1364 = vld [vmem:[%s13] sm:$0xff]
        %v1365 = vld [vmem:[%s13 + $0x8] sm:$0xff]
        %v1366 = vld [vmem:[%s13 + $0x10] sm:$0xff]
        %v1367 = vld [vmem:[%s13 + $0x18] sm:$0xff]
        %v1369 = vsel %vm1205, %v1356, 0
        %v1372 = vsel %vm1205, %v1357, 0
        %v1375 = vsel %vm1205, %v1358, 0
        %v1378 = vsel %vm1205, %v1359, 0
        %1380 = vmatpush.msra.mxu0 0.0
        %1381 = vmatpush.msra.mxu0 0.0
        %1382 = vmatpush.msra.mxu0 0.0
        %1383 = vmatpush.msra.mxu0 0.0
        %1384 = vmatpush.msra.mxu0 0.0
        %1385 = vmatpush.msra.mxu0 0.0
        %1386 = vmatpush.msra.mxu0 0.0
        %1387 = vmatpush.msra.mxu0 0.0
        %1388 = vmatpush.msra.mxu0 0.0
        %1389 = vmatpush.msra.mxu0 0.0
        %1390 = vmatpush.msra.mxu0 0.0
        %1391 = vmatpush.msra.mxu0 0.0
        %1392 = vmatpush.msra.mxu0 %v1354
        %1393 = vmatpush.msra.mxu0 %v1352
        %1394 = vmatpush.msra.mxu0 %v1350
        %1395 = vmatpush.msra.mxu0 %v1348
        %1396 = vmatmul.f32.gmra.mxu0 %v1369
        %v1397 = vpop.f32.mrf.mxu0
        %v1398 = vadd.f32 0.0, %v1397
        %1399 = vmatmul.f32.gmra.mxu0 %v1372
        %v1400 = vpop.f32.mrf.mxu0
        %v1401 = vadd.f32 0.0, %v1400
        %1402 = vmatmul.f32.gmra.mxu0 %v1375
        %v1403 = vpop.f32.mrf.mxu0
        %v1404 = vadd.f32 0.0, %v1403
        %1405 = vmatmul.f32.gmra.mxu0 %v1378
        %v1406 = vpop.f32.mrf.mxu0
        %v1407 = vadd.f32 0.0, %v1406
        %1408 = vdwg.mxu0
        %1409 = vmatpush.msra.mxu0 0.0
        %1410 = vmatpush.msra.mxu0 0.0
        %1411 = vmatpush.msra.mxu0 0.0
        %1412 = vmatpush.msra.mxu0 0.0
        %1413 = vmatpush.msra.mxu0 0.0
        %1414 = vmatpush.msra.mxu0 0.0
        %1415 = vmatpush.msra.mxu0 0.0
        %1416 = vmatpush.msra.mxu0 0.0
        %1417 = vmatpush.msra.mxu0 0.0
        %1418 = vmatpush.msra.mxu0 0.0
        %1419 = vmatpush.msra.mxu0 0.0
        %1420 = vmatpush.msra.mxu0 0.0
        %1421 = vmatpush.msra.mxu0 %v1355
        %1422 = vmatpush.msra.mxu0 %v1353
        %1423 = vmatpush.msra.mxu0 %v1351
        %1424 = vmatpush.msra.mxu0 %v1349
        %1425 = vmatmul.f32.gmra.mxu0 %v1369
        %v1426 = vpop.f32.mrf.mxu0
        %v1427 = vadd.f32 0.0, %v1426
        %1428 = vmatmul.f32.gmra.mxu0 %v1372
        %v1429 = vpop.f32.mrf.mxu0
        %v1430 = vadd.f32 0.0, %v1429
        %1431 = vmatmul.f32.gmra.mxu0 %v1375
        %v1432 = vpop.f32.mrf.mxu0
        %v1433 = vadd.f32 0.0, %v1432
        %1434 = vmatmul.f32.gmra.mxu0 %v1378
        %v1435 = vpop.f32.mrf.mxu0
        %v1436 = vadd.f32 0.0, %v1435
        %1437 = vdwg.mxu0
        %1439 = vset.pattern.permute.xlu0 0
        %1440 = vperm.xlu0 %1439, %v1360
        %v1441 = vpop.permute.xlu0 %1440
        %1444 = vset.pattern.permute.xlu0 0
        %1445 = vperm.xlu0 %1444, %v1361
        %v1446 = vpop.permute.xlu0 %1445
        %1449 = vset.pattern.permute.xlu0 0
        %1450 = vperm.xlu0 %1449, %v1362
        %v1451 = vpop.permute.xlu0 %1450
        %1454 = vset.pattern.permute.xlu0 0
        %1455 = vperm.xlu0 %1454, %v1363
        %v1456 = vpop.permute.xlu0 %1455
        %v1458 = vmul.f32 %v1398, %v1441
        %v1459 = vmul.f32 %v1427, %v1441
        %v1460 = vmul.f32 %v1401, %v1446
        %v1461 = vmul.f32 %v1430, %v1446
        %v1462 = vmul.f32 %v1404, %v1451
        %v1463 = vmul.f32 %v1433, %v1451
        %v1464 = vmul.f32 %v1407, %v1456
        %v1465 = vmul.f32 %v1436, %v1456
        %1467 = vset.pattern.permute.xlu0 0
        %1468 = vperm.xlu0 %1467, %v1364
        %v1469 = vpop.permute.xlu0 %1468
        %1472 = vset.pattern.permute.xlu0 0
        %1473 = vperm.xlu0 %1472, %v1365
        %v1474 = vpop.permute.xlu0 %1473
        %1477 = vset.pattern.permute.xlu0 0
        %1478 = vperm.xlu0 %1477, %v1366
        %v1479 = vpop.permute.xlu0 %1478
        %1482 = vset.pattern.permute.xlu0 0
        %1483 = vperm.xlu0 %1482, %v1367
        %v1484 = vpop.permute.xlu0 %1483
        %v1486 = vadd.f32 %v1458, %v1469
        %v1487 = vadd.f32 %v1459, %v1469
        %v1488 = vadd.f32 %v1460, %v1474
        %v1489 = vadd.f32 %v1461, %v1474
        %v1490 = vadd.f32 %v1462, %v1479
        %v1491 = vadd.f32 %v1463, %v1479
        %v1492 = vadd.f32 %v1464, %v1484
        %v1493 = vadd.f32 %v1465, %v1484
        %vm1494 = vcmp.ge.f32.partialorder %v1486, 0.0
        %vm1495 = vcmp.ge.f32.partialorder %v1487, 0.0
        %vm1496 = vcmp.ge.f32.partialorder %v1488, 0.0
        %vm1497 = vcmp.ge.f32.partialorder %v1489, 0.0
        %vm1498 = vcmp.ge.f32.partialorder %v1490, 0.0
        %vm1499 = vcmp.ge.f32.partialorder %v1491, 0.0
        %vm1500 = vcmp.ge.f32.partialorder %v1492, 0.0
        %vm1501 = vcmp.ge.f32.partialorder %v1493, 0.0
        %v1502 = vmul.f32 %v1486, 0.2
        %v1503 = vmul.f32 %v1487, 0.2
        %v1504 = vmul.f32 %v1488, 0.2
        %v1505 = vmul.f32 %v1489, 0.2
        %v1506 = vmul.f32 %v1490, 0.2
        %v1507 = vmul.f32 %v1491, 0.2
        %v1508 = vmul.f32 %v1492, 0.2
        %v1509 = vmul.f32 %v1493, 0.2
        %v1510 = vsel %vm1494, %v1486, %v1502
        %v1511 = vsel %vm1495, %v1487, %v1503
        %v1512 = vsel %vm1496, %v1488, %v1504
        %v1513 = vsel %vm1497, %v1489, %v1505
        %v1514 = vsel %vm1498, %v1490, %v1506
        %v1515 = vsel %vm1499, %v1491, %v1507
        %v1516 = vsel %vm1500, %v1492, %v1508
        %v1517 = vsel %vm1501, %v1493, %v1509
        %v1518 = vld [vmem:[%s14] sm:$0xff]
        %v1519 = vld [vmem:[%s14 + $0x8] sm:$0xff]
        %v1520 = vld [vmem:[%s15] sm:$0xff]
        %v1521 = vld [vmem:[%s15 + $0x8] sm:$0xff]
        %v1522 = vld [vmem:[%s16] sm:$0xff]
        %v1523 = vld [vmem:[%s16 + $0x8] sm:$0xff]
        %v1525 = vsel %vm1205, %v1518, 0
        %v1528 = vsel %vm1205, %v1519, 0
        %1530 = vmatpush.msra.mxu0 0.0
        %1531 = vmatpush.msra.mxu0 0.0
        %1532 = vmatpush.msra.mxu0 0.0
        %1533 = vmatpush.msra.mxu0 0.0
        %1534 = vmatpush.msra.mxu0 0.0
        %1535 = vmatpush.msra.mxu0 0.0
        %1536 = vmatpush.msra.mxu0 0.0
        %1537 = vmatpush.msra.mxu0 0.0
        %1538 = vmatpush.msra.mxu0 0.0
        %1539 = vmatpush.msra.mxu0 0.0
        %1540 = vmatpush.msra.mxu0 0.0
        %1541 = vmatpush.msra.mxu0 0.0
        %1542 = vmatpush.msra.mxu0 %v1516
        %1543 = vmatpush.msra.mxu0 %v1514
        %1544 = vmatpush.msra.mxu0 %v1512
        %1545 = vmatpush.msra.mxu0 %v1510
        %1546 = vmatmul.f32.gmra.mxu0 %v1525
        %v1547 = vpop.f32.mrf.mxu0
        %v1548 = vadd.f32 0.0, %v1547
        %1549 = vmatmul.f32.gmra.mxu0 %v1528
        %v1550 = vpop.f32.mrf.mxu0
        %v1551 = vadd.f32 0.0, %v1550
        %1552 = vdwg.mxu0
        %1553 = vmatpush.msra.mxu0 0.0
        %1554 = vmatpush.msra.mxu0 0.0
        %1555 = vmatpush.msra.mxu0 0.0
        %1556 = vmatpush.msra.mxu0 0.0
        %1557 = vmatpush.msra.mxu0 0.0
        %1558 = vmatpush.msra.mxu0 0.0
        %1559 = vmatpush.msra.mxu0 0.0
        %1560 = vmatpush.msra.mxu0 0.0
        %1561 = vmatpush.msra.mxu0 0.0
        %1562 = vmatpush.msra.mxu0 0.0
        %1563 = vmatpush.msra.mxu0 0.0
        %1564 = vmatpush.msra.mxu0 0.0
        %1565 = vmatpush.msra.mxu0 %v1517
        %1566 = vmatpush.msra.mxu0 %v1515
        %1567 = vmatpush.msra.mxu0 %v1513
        %1568 = vmatpush.msra.mxu0 %v1511
        %1569 = vmatmul.f32.gmra.mxu0 %v1525
        %v1570 = vpop.f32.mrf.mxu0
        %v1571 = vadd.f32 0.0, %v1570
        %1572 = vmatmul.f32.gmra.mxu0 %v1528
        %v1573 = vpop.f32.mrf.mxu0
        %v1574 = vadd.f32 0.0, %v1573
        %1575 = vdwg.mxu0
        %1577 = vset.pattern.permute.xlu0 0
        %1578 = vperm.xlu0 %1577, %v1520
        %v1579 = vpop.permute.xlu0 %1578
        %1582 = vset.pattern.permute.xlu0 0
        %1583 = vperm.xlu0 %1582, %v1521
        %v1584 = vpop.permute.xlu0 %1583
        %v1586 = vmul.f32 %v1548, %v1579
        %v1587 = vmul.f32 %v1571, %v1579
        %v1588 = vmul.f32 %v1551, %v1584
        %v1589 = vmul.f32 %v1574, %v1584
        %1591 = vset.pattern.permute.xlu0 0
        %1592 = vperm.xlu0 %1591, %v1522
        %v1593 = vpop.permute.xlu0 %1592
        %1596 = vset.pattern.permute.xlu0 0
        %1597 = vperm.xlu0 %1596, %v1523
        %v1598 = vpop.permute.xlu0 %1597
        %v1600 = vadd.f32 %v1586, %v1593
        %v1601 = vadd.f32 %v1587, %v1593
        %v1602 = vadd.f32 %v1588, %v1598
        %v1603 = vadd.f32 %v1589, %v1598
        %vm1604 = vcmp.ge.f32.partialorder %v1600, 0.0
        %vm1605 = vcmp.ge.f32.partialorder %v1601, 0.0
        %vm1606 = vcmp.ge.f32.partialorder %v1602, 0.0
        %vm1607 = vcmp.ge.f32.partialorder %v1603, 0.0
        %v1608 = vmul.f32 %v1600, 0.2
        %v1609 = vmul.f32 %v1601, 0.2
        %v1610 = vmul.f32 %v1602, 0.2
        %v1611 = vmul.f32 %v1603, 0.2
        %v1612 = vsel %vm1604, %v1600, %v1608
        %v1613 = vsel %vm1605, %v1601, %v1609
        %v1614 = vsel %vm1606, %v1602, %v1610
        %v1615 = vsel %vm1607, %v1603, %v1611
        %v1616 = vld [vmem:[%s17] sm:$0xff]
        %v1617 = vld [vmem:[%s17 + $0x8] sm:$0xff]
        %v1618 = vld [vmem:[%s17 + $0x10] sm:$0xff]
        %v1619 = vld [vmem:[%s17 + $0x18] sm:$0xff]
        %v1620 = vld [vmem:[%s18] sm:$0xff]
        %v1621 = vld [vmem:[%s18 + $0x8] sm:$0xff]
        %v1622 = vld [vmem:[%s18 + $0x10] sm:$0xff]
        %v1623 = vld [vmem:[%s18 + $0x18] sm:$0xff]
        %v1624 = vld [vmem:[%s19] sm:$0xff]
        %v1625 = vld [vmem:[%s19 + $0x8] sm:$0xff]
        %v1626 = vld [vmem:[%s19 + $0x10] sm:$0xff]
        %v1627 = vld [vmem:[%s19 + $0x18] sm:$0xff]
        %v1629 = vsel %vm1042, %v1616, 0
        %v1632 = vsel %vm1042, %v1617, 0
        %v1635 = vsel %vm1042, %v1618, 0
        %v1638 = vsel %vm1042, %v1619, 0
        %1640 = vmatpush.msra.mxu0 0.0
        %1641 = vmatpush.msra.mxu0 0.0
        %1642 = vmatpush.msra.mxu0 0.0
        %1643 = vmatpush.msra.mxu0 0.0
        %1644 = vmatpush.msra.mxu0 0.0
        %1645 = vmatpush.msra.mxu0 0.0
        %1646 = vmatpush.msra.mxu0 0.0
        %1647 = vmatpush.msra.mxu0 0.0
        %1648 = vmatpush.msra.mxu0 0.0
        %1649 = vmatpush.msra.mxu0 0.0
        %1650 = vmatpush.msra.mxu0 0.0
        %1651 = vmatpush.msra.mxu0 0.0
        %1652 = vmatpush.msra.mxu0 0.0
        %1653 = vmatpush.msra.mxu0 0.0
        %1654 = vmatpush.msra.mxu0 %v1614
        %1655 = vmatpush.msra.mxu0 %v1612
        %1656 = vmatmul.f32.gmra.mxu0 %v1629
        %v1657 = vpop.f32.mrf.mxu0
        %v1658 = vadd.f32 0.0, %v1657
        %1659 = vmatmul.f32.gmra.mxu0 %v1632
        %v1660 = vpop.f32.mrf.mxu0
        %v1661 = vadd.f32 0.0, %v1660
        %1662 = vmatmul.f32.gmra.mxu0 %v1635
        %v1663 = vpop.f32.mrf.mxu0
        %v1664 = vadd.f32 0.0, %v1663
        %1665 = vmatmul.f32.gmra.mxu0 %v1638
        %v1666 = vpop.f32.mrf.mxu0
        %v1667 = vadd.f32 0.0, %v1666
        %1668 = vdwg.mxu0
        %1669 = vmatpush.msra.mxu0 0.0
        %1670 = vmatpush.msra.mxu0 0.0
        %1671 = vmatpush.msra.mxu0 0.0
        %1672 = vmatpush.msra.mxu0 0.0
        %1673 = vmatpush.msra.mxu0 0.0
        %1674 = vmatpush.msra.mxu0 0.0
        %1675 = vmatpush.msra.mxu0 0.0
        %1676 = vmatpush.msra.mxu0 0.0
        %1677 = vmatpush.msra.mxu0 0.0
        %1678 = vmatpush.msra.mxu0 0.0
        %1679 = vmatpush.msra.mxu0 0.0
        %1680 = vmatpush.msra.mxu0 0.0
        %1681 = vmatpush.msra.mxu0 0.0
        %1682 = vmatpush.msra.mxu0 0.0
        %1683 = vmatpush.msra.mxu0 %v1615
        %1684 = vmatpush.msra.mxu0 %v1613
        %1685 = vmatmul.f32.gmra.mxu0 %v1629
        %v1686 = vpop.f32.mrf.mxu0
        %v1687 = vadd.f32 0.0, %v1686
        %1688 = vmatmul.f32.gmra.mxu0 %v1632
        %v1689 = vpop.f32.mrf.mxu0
        %v1690 = vadd.f32 0.0, %v1689
        %1691 = vmatmul.f32.gmra.mxu0 %v1635
        %v1692 = vpop.f32.mrf.mxu0
        %v1693 = vadd.f32 0.0, %v1692
        %1694 = vmatmul.f32.gmra.mxu0 %v1638
        %v1695 = vpop.f32.mrf.mxu0
        %v1696 = vadd.f32 0.0, %v1695
        %1697 = vdwg.mxu0
        %1699 = vset.pattern.permute.xlu0 0
        %1700 = vperm.xlu0 %1699, %v1620
        %v1701 = vpop.permute.xlu0 %1700
        %1704 = vset.pattern.permute.xlu0 0
        %1705 = vperm.xlu0 %1704, %v1621
        %v1706 = vpop.permute.xlu0 %1705
        %1709 = vset.pattern.permute.xlu0 0
        %1710 = vperm.xlu0 %1709, %v1622
        %v1711 = vpop.permute.xlu0 %1710
        %1714 = vset.pattern.permute.xlu0 0
        %1715 = vperm.xlu0 %1714, %v1623
        %v1716 = vpop.permute.xlu0 %1715
        %v1718 = vmul.f32 %v1658, %v1701
        %v1719 = vmul.f32 %v1687, %v1701
        %v1720 = vmul.f32 %v1661, %v1706
        %v1721 = vmul.f32 %v1690, %v1706
        %v1722 = vmul.f32 %v1664, %v1711
        %v1723 = vmul.f32 %v1693, %v1711
        %v1724 = vmul.f32 %v1667, %v1716
        %v1725 = vmul.f32 %v1696, %v1716
        %1727 = vset.pattern.permute.xlu0 0
        %1728 = vperm.xlu0 %1727, %v1624
        %v1729 = vpop.permute.xlu0 %1728
        %1732 = vset.pattern.permute.xlu0 0
        %1733 = vperm.xlu0 %1732, %v1625
        %v1734 = vpop.permute.xlu0 %1733
        %1737 = vset.pattern.permute.xlu0 0
        %1738 = vperm.xlu0 %1737, %v1626
        %v1739 = vpop.permute.xlu0 %1738
        %1742 = vset.pattern.permute.xlu0 0
        %1743 = vperm.xlu0 %1742, %v1627
        %v1744 = vpop.permute.xlu0 %1743
        %v1746 = vadd.f32 %v1718, %v1729
        %v1747 = vadd.f32 %v1719, %v1729
        %v1748 = vadd.f32 %v1720, %v1734
        %v1749 = vadd.f32 %v1721, %v1734
        %v1750 = vadd.f32 %v1722, %v1739
        %v1751 = vadd.f32 %v1723, %v1739
        %v1752 = vadd.f32 %v1724, %v1744
        %v1753 = vadd.f32 %v1725, %v1744
        %vm1754 = vcmp.ge.f32.partialorder %v1746, 0.0
        %vm1755 = vcmp.ge.f32.partialorder %v1747, 0.0
        %vm1756 = vcmp.ge.f32.partialorder %v1748, 0.0
        %vm1757 = vcmp.ge.f32.partialorder %v1749, 0.0
        %vm1758 = vcmp.ge.f32.partialorder %v1750, 0.0
        %vm1759 = vcmp.ge.f32.partialorder %v1751, 0.0
        %vm1760 = vcmp.ge.f32.partialorder %v1752, 0.0
        %vm1761 = vcmp.ge.f32.partialorder %v1753, 0.0
        %v1762 = vmul.f32 %v1746, 0.2
        %v1763 = vmul.f32 %v1747, 0.2
        %v1764 = vmul.f32 %v1748, 0.2
        %v1765 = vmul.f32 %v1749, 0.2
        %v1766 = vmul.f32 %v1750, 0.2
        %v1767 = vmul.f32 %v1751, 0.2
        %v1768 = vmul.f32 %v1752, 0.2
        %v1769 = vmul.f32 %v1753, 0.2
        %v1770 = vsel %vm1754, %v1746, %v1762
        %v1771 = vsel %vm1755, %v1747, %v1763
        %v1772 = vsel %vm1756, %v1748, %v1764
        %v1773 = vsel %vm1757, %v1749, %v1765
        %v1774 = vsel %vm1758, %v1750, %v1766
        %v1775 = vsel %vm1759, %v1751, %v1767
        %v1776 = vsel %vm1760, %v1752, %v1768
        %v1777 = vsel %vm1761, %v1753, %v1769
        %v1778 = vpack.c.bf16 %v1186, %v1185
        %v1779 = vpack.c.bf16 %v1188, %v1187
        %v1780 = vpack.c.bf16 %v1190, %v1189
        %v1781 = vpack.c.bf16 %v1192, %v1191
        %1782 = vst [vmem:[%s751] sm:$0xff] %v1778
        %1783 = vst [vmem:[%s751 + $0x8] sm:$0xff] %v1779
        %1784 = vst [vmem:[%s751 + $0x10] sm:$0xff] %v1780
        %1785 = vst [vmem:[%s751 + $0x18] sm:$0xff] %v1781
        %v1786 = vpack.c.bf16 %v1511, %v1510
        %v1787 = vpack.c.bf16 %v1513, %v1512
        %v1788 = vpack.c.bf16 %v1515, %v1514
        %v1789 = vpack.c.bf16 %v1517, %v1516
        %1790 = vst [vmem:[%s757] sm:$0xff] %v1786
        %1791 = vst [vmem:[%s757 + $0x8] sm:$0xff] %v1787
        %1792 = vst [vmem:[%s757 + $0x10] sm:$0xff] %v1788
        %1793 = vst [vmem:[%s757 + $0x18] sm:$0xff] %v1789
        %p1794 = scmp.eq.s32.totalorder %s40, 0
        // Predicated region
        $region101: #{_lambda_.2} parent=99 // pred_check
          %p1795 = pneg %p1794
        $region102: #{_lambda_.2} parent=99 // pred_check_branch
          %1797 = sbr.rel (%p1795) target = $region104
        $region103: #{_lambda_.2} parent=99 // pred_region
          %1798 = vst.msk [vmem:[%s797] sm:$0xff] %vm837, -10000000.0
          %1799 = vst.msk [vmem:[%s797 + $0x8] sm:$0xff] %vm837, -10000000.0
          %1800 = vst.msk [vmem:[%s797 + $0x10] sm:$0xff] %vm837, -10000000.0
          %1801 = vst.msk [vmem:[%s797 + $0x18] sm:$0xff] %vm837, -10000000.0
          %1802 = vst.msk [vmem:[%s802] sm:$0xff] %vm837, -10000000.0
          %1803 = vst.msk [vmem:[%s802 + $0x8] sm:$0xff] %vm837, -10000000.0
          %1804 = vst.msk [vmem:[%s802 + $0x10] sm:$0xff] %vm837, -10000000.0
          %1805 = vst.msk [vmem:[%s802 + $0x18] sm:$0xff] %vm837, -10000000.0
        $region104: #{_lambda_.2} parent=99 // pred_fallthru
          _
        %v1806 = vld [vmem:[%s789] sm:$0x3]
        %v1807 = vlaneseq
        %v1808 = vand.u32 %v1807, 127
        %vm1809 = vcmp.eq.s32.totalorder %v1806, 0
        %v1810 = vsel %vm1809, 1, 0
        %v1811 = vperm.slane %v1810, 0
        %v1812 = vperm.slane %v1810, 1
        %vm1813 = vcmp.eq.s32.totalorder %v1811, 1
        %vm1814 = vcmp.eq.s32.totalorder %v1812, 1
        %v1815 = vsel %vm1813, %v1510, -10000000.0
        %v1816 = vsel %vm1814, %v1511, -10000000.0
        %v1817 = vsel %vm1813, %v1512, -10000000.0
        %v1818 = vsel %vm1814, %v1513, -10000000.0
        %v1819 = vsel %vm1813, %v1514, -10000000.0
        %v1820 = vsel %vm1814, %v1515, -10000000.0
        %v1821 = vsel %vm1813, %v1516, -10000000.0
        %v1822 = vsel %vm1814, %v1517, -10000000.0
        %v1823 = vmax.f32 %v1815, %v1816
        %1824 = vmax.xlane.f32.xlu0 %v1823
        %v1825 = vpop.xlane.xlu0 %1824
        %v1826 = vmax.f32 %v1817, %v1818
        %1827 = vmax.xlane.f32.xlu0 %v1826
        %v1828 = vpop.xlane.xlu0 %1827
        %v1829 = vmax.f32 %v1819, %v1820
        %1830 = vmax.xlane.f32.xlu0 %v1829
        %v1831 = vpop.xlane.xlu0 %1830
        %v1832 = vmax.f32 %v1821, %v1822
        %1833 = vmax.xlane.f32.xlu0 %v1832
        %v1834 = vpop.xlane.xlu0 %1833
        %v1835 = vsel %vm1813, %v1770, -10000000.0
        %v1836 = vsel %vm1814, %v1771, -10000000.0
        %v1837 = vsel %vm1813, %v1772, -10000000.0
        %v1838 = vsel %vm1814, %v1773, -10000000.0
        %v1839 = vsel %vm1813, %v1774, -10000000.0
        %v1840 = vsel %vm1814, %v1775, -10000000.0
        %v1841 = vsel %vm1813, %v1776, -10000000.0
        %v1842 = vsel %vm1814, %v1777, -10000000.0
        %v1843 = vmax.f32 %v1835, %v1836
        %1844 = vmax.xlane.f32.xlu0 %v1843
        %v1845 = vpop.xlane.xlu0 %1844
        %v1846 = vmax.f32 %v1837, %v1838
        %1847 = vmax.xlane.f32.xlu0 %v1846
        %v1848 = vpop.xlane.xlu0 %1847
        %v1849 = vmax.f32 %v1839, %v1840
        %1850 = vmax.xlane.f32.xlu0 %v1849
        %v1851 = vpop.xlane.xlu0 %1850
        %v1852 = vmax.f32 %v1841, %v1842
        %1853 = vmax.xlane.f32.xlu0 %v1852
        %v1854 = vpop.xlane.xlu0 %1853
        %vm1855 = vcmp.eq.s32.totalorder %v1808, 0
        %v1856 = vsel %vm1855, %v1825, -10000000.0
        %v1857 = vsel %vm1855, %v1828, -10000000.0
        %v1858 = vsel %vm1855, %v1831, -10000000.0
        %v1859 = vsel %vm1855, %v1834, -10000000.0
        %v1860 = vsel %vm1855, %v1845, -10000000.0
        %v1861 = vsel %vm1855, %v1848, -10000000.0
        %v1862 = vsel %vm1855, %v1851, -10000000.0
        %v1863 = vsel %vm1855, %v1854, -10000000.0
        %vm1864 = vcmp.eq.s32.totalorder %v1806, 1
        %v1865 = vsel %vm1864, 1, 0
        %v1866 = vperm.slane %v1865, 0
        %v1867 = vperm.slane %v1865, 1
        %vm1868 = vcmp.eq.s32.totalorder %v1866, 1
        %vm1869 = vcmp.eq.s32.totalorder %v1867, 1
        %v1870 = vsel %vm1868, %v1510, -10000000.0
        %v1871 = vsel %vm1869, %v1511, -10000000.0
        %v1872 = vsel %vm1868, %v1512, -10000000.0
        %v1873 = vsel %vm1869, %v1513, -10000000.0
        %v1874 = vsel %vm1868, %v1514, -10000000.0
        %v1875 = vsel %vm1869, %v1515, -10000000.0
        %v1876 = vsel %vm1868, %v1516, -10000000.0
        %v1877 = vsel %vm1869, %v1517, -10000000.0
        %v1878 = vmax.f32 %v1870, %v1871
        %1879 = vmax.xlane.f32.xlu0 %v1878
        %v1880 = vpop.xlane.xlu0 %1879
        %v1881 = vmax.f32 %v1872, %v1873
        %1882 = vmax.xlane.f32.xlu0 %v1881
        %v1883 = vpop.xlane.xlu0 %1882
        %v1884 = vmax.f32 %v1874, %v1875
        %1885 = vmax.xlane.f32.xlu0 %v1884
        %v1886 = vpop.xlane.xlu0 %1885
        %v1887 = vmax.f32 %v1876, %v1877
        %1888 = vmax.xlane.f32.xlu0 %v1887
        %v1889 = vpop.xlane.xlu0 %1888
        %v1890 = vsel %vm1868, %v1770, -10000000.0
        %v1891 = vsel %vm1869, %v1771, -10000000.0
        %v1892 = vsel %vm1868, %v1772, -10000000.0
        %v1893 = vsel %vm1869, %v1773, -10000000.0
        %v1894 = vsel %vm1868, %v1774, -10000000.0
        %v1895 = vsel %vm1869, %v1775, -10000000.0
        %v1896 = vsel %vm1868, %v1776, -10000000.0
        %v1897 = vsel %vm1869, %v1777, -10000000.0
        %v1898 = vmax.f32 %v1890, %v1891
        %1899 = vmax.xlane.f32.xlu0 %v1898
        %v1900 = vpop.xlane.xlu0 %1899
        %v1901 = vmax.f32 %v1892, %v1893
        %1902 = vmax.xlane.f32.xlu0 %v1901
        %v1903 = vpop.xlane.xlu0 %1902
        %v1904 = vmax.f32 %v1894, %v1895
        %1905 = vmax.xlane.f32.xlu0 %v1904
        %v1906 = vpop.xlane.xlu0 %1905
        %v1907 = vmax.f32 %v1896, %v1897
        %1908 = vmax.xlane.f32.xlu0 %v1907
        %v1909 = vpop.xlane.xlu0 %1908
        %vm1910 = vcmp.eq.s32.totalorder %v1808, 1
        %v1911 = vsel %vm1910, %v1880, %v1856
        %v1912 = vsel %vm1910, %v1883, %v1857
        %v1913 = vsel %vm1910, %v1886, %v1858
        %v1914 = vsel %vm1910, %v1889, %v1859
        %v1915 = vsel %vm1910, %v1900, %v1860
        %v1916 = vsel %vm1910, %v1903, %v1861
        %v1917 = vsel %vm1910, %v1906, %v1862
        %v1918 = vsel %vm1910, %v1909, %v1863
        %vm1919 = vcmp.eq.s32.totalorder %v1806, 2
        %v1920 = vsel %vm1919, 1, 0
        %v1921 = vperm.slane %v1920, 0
        %v1922 = vperm.slane %v1920, 1
        %vm1923 = vcmp.eq.s32.totalorder %v1921, 1
        %vm1924 = vcmp.eq.s32.totalorder %v1922, 1
        %v1925 = vsel %vm1923, %v1510, -10000000.0
        %v1926 = vsel %vm1924, %v1511, -10000000.0
        %v1927 = vsel %vm1923, %v1512, -10000000.0
        %v1928 = vsel %vm1924, %v1513, -10000000.0
        %v1929 = vsel %vm1923, %v1514, -10000000.0
        %v1930 = vsel %vm1924, %v1515, -10000000.0
        %v1931 = vsel %vm1923, %v1516, -10000000.0
        %v1932 = vsel %vm1924, %v1517, -10000000.0
        %v1933 = vmax.f32 %v1925, %v1926
        %1934 = vmax.xlane.f32.xlu0 %v1933
        %v1935 = vpop.xlane.xlu0 %1934
        %v1936 = vmax.f32 %v1927, %v1928
        %1937 = vmax.xlane.f32.xlu0 %v1936
        %v1938 = vpop.xlane.xlu0 %1937
        %v1939 = vmax.f32 %v1929, %v1930
        %1940 = vmax.xlane.f32.xlu0 %v1939
        %v1941 = vpop.xlane.xlu0 %1940
        %v1942 = vmax.f32 %v1931, %v1932
        %1943 = vmax.xlane.f32.xlu0 %v1942
        %v1944 = vpop.xlane.xlu0 %1943
        %v1945 = vsel %vm1923, %v1770, -10000000.0
        %v1946 = vsel %vm1924, %v1771, -10000000.0
        %v1947 = vsel %vm1923, %v1772, -10000000.0
        %v1948 = vsel %vm1924, %v1773, -10000000.0
        %v1949 = vsel %vm1923, %v1774, -10000000.0
        %v1950 = vsel %vm1924, %v1775, -10000000.0
        %v1951 = vsel %vm1923, %v1776, -10000000.0
        %v1952 = vsel %vm1924, %v1777, -10000000.0
        %v1953 = vmax.f32 %v1945, %v1946
        %1954 = vmax.xlane.f32.xlu0 %v1953
        %v1955 = vpop.xlane.xlu0 %1954
        %v1956 = vmax.f32 %v1947, %v1948
        %1957 = vmax.xlane.f32.xlu0 %v1956
        %v1958 = vpop.xlane.xlu0 %1957
        %v1959 = vmax.f32 %v1949, %v1950
        %1960 = vmax.xlane.f32.xlu0 %v1959
        %v1961 = vpop.xlane.xlu0 %1960
        %v1962 = vmax.f32 %v1951, %v1952
        %1963 = vmax.xlane.f32.xlu0 %v1962
        %v1964 = vpop.xlane.xlu0 %1963
        %vm1965 = vcmp.eq.s32.totalorder %v1808, 2
        %v1966 = vsel %vm1965, %v1935, %v1911
        %v1967 = vsel %vm1965, %v1938, %v1912
        %v1968 = vsel %vm1965, %v1941, %v1913
        %v1969 = vsel %vm1965, %v1944, %v1914
        %v1970 = vsel %vm1965, %v1955, %v1915
        %v1971 = vsel %vm1965, %v1958, %v1916
        %v1972 = vsel %vm1965, %v1961, %v1917
        %v1973 = vsel %vm1965, %v1964, %v1918
        %vm1974 = vcmp.eq.s32.totalorder %v1806, 3
        %v1975 = vsel %vm1974, 1, 0
        %v1976 = vperm.slane %v1975, 0
        %v1977 = vperm.slane %v1975, 1
        %vm1978 = vcmp.eq.s32.totalorder %v1976, 1
        %vm1979 = vcmp.eq.s32.totalorder %v1977, 1
        %v1980 = vsel %vm1978, %v1510, -10000000.0
        %v1981 = vsel %vm1979, %v1511, -10000000.0
        %v1982 = vsel %vm1978, %v1512, -10000000.0
        %v1983 = vsel %vm1979, %v1513, -10000000.0
        %v1984 = vsel %vm1978, %v1514, -10000000.0
        %v1985 = vsel %vm1979, %v1515, -10000000.0
        %v1986 = vsel %vm1978, %v1516, -10000000.0
        %v1987 = vsel %vm1979, %v1517, -10000000.0
        %v1988 = vmax.f32 %v1980, %v1981
        %1989 = vmax.xlane.f32.xlu0 %v1988
        %v1990 = vpop.xlane.xlu0 %1989
        %v1991 = vmax.f32 %v1982, %v1983
        %1992 = vmax.xlane.f32.xlu0 %v1991
        %v1993 = vpop.xlane.xlu0 %1992
        %v1994 = vmax.f32 %v1984, %v1985
        %1995 = vmax.xlane.f32.xlu0 %v1994
        %v1996 = vpop.xlane.xlu0 %1995
        %v1997 = vmax.f32 %v1986, %v1987
        %1998 = vmax.xlane.f32.xlu0 %v1997
        %v1999 = vpop.xlane.xlu0 %1998
        %v2000 = vsel %vm1978, %v1770, -10000000.0
        %v2001 = vsel %vm1979, %v1771, -10000000.0
        %v2002 = vsel %vm1978, %v1772, -10000000.0
        %v2003 = vsel %vm1979, %v1773, -10000000.0
        %v2004 = vsel %vm1978, %v1774, -10000000.0
        %v2005 = vsel %vm1979, %v1775, -10000000.0
        %v2006 = vsel %vm1978, %v1776, -10000000.0
        %v2007 = vsel %vm1979, %v1777, -10000000.0
        %v2008 = vmax.f32 %v2000, %v2001
        %2009 = vmax.xlane.f32.xlu0 %v2008
        %v2010 = vpop.xlane.xlu0 %2009
        %v2011 = vmax.f32 %v2002, %v2003
        %2012 = vmax.xlane.f32.xlu0 %v2011
        %v2013 = vpop.xlane.xlu0 %2012
        %v2014 = vmax.f32 %v2004, %v2005
        %2015 = vmax.xlane.f32.xlu0 %v2014
        %v2016 = vpop.xlane.xlu0 %2015
        %v2017 = vmax.f32 %v2006, %v2007
        %2018 = vmax.xlane.f32.xlu0 %v2017
        %v2019 = vpop.xlane.xlu0 %2018
        %vm2020 = vcmp.eq.s32.totalorder %v1808, 3
        %v2021 = vsel %vm2020, %v1990, %v1966
        %v2022 = vsel %vm2020, %v1993, %v1967
        %v2023 = vsel %vm2020, %v1996, %v1968
        %v2024 = vsel %vm2020, %v1999, %v1969
        %v2025 = vsel %vm2020, %v2010, %v1970
        %v2026 = vsel %vm2020, %v2013, %v1971
        %v2027 = vsel %vm2020, %v2016, %v1972
        %v2028 = vsel %vm2020, %v2019, %v1973
        %vm2029 = vcmp.eq.s32.totalorder %v1806, 4
        %v2030 = vsel %vm2029, 1, 0
        %v2031 = vperm.slane %v2030, 0
        %v2032 = vperm.slane %v2030, 1
        %vm2033 = vcmp.eq.s32.totalorder %v2031, 1
        %vm2034 = vcmp.eq.s32.totalorder %v2032, 1
        %v2035 = vsel %vm2033, %v1510, -10000000.0
        %v2036 = vsel %vm2034, %v1511, -10000000.0
        %v2037 = vsel %vm2033, %v1512, -10000000.0
        %v2038 = vsel %vm2034, %v1513, -10000000.0
        %v2039 = vsel %vm2033, %v1514, -10000000.0
        %v2040 = vsel %vm2034, %v1515, -10000000.0
        %v2041 = vsel %vm2033, %v1516, -10000000.0
        %v2042 = vsel %vm2034, %v1517, -10000000.0
        %v2043 = vmax.f32 %v2035, %v2036
        %2044 = vmax.xlane.f32.xlu0 %v2043
        %v2045 = vpop.xlane.xlu0 %2044
        %v2046 = vmax.f32 %v2037, %v2038
        %2047 = vmax.xlane.f32.xlu0 %v2046
        %v2048 = vpop.xlane.xlu0 %2047
        %v2049 = vmax.f32 %v2039, %v2040
        %2050 = vmax.xlane.f32.xlu0 %v2049
        %v2051 = vpop.xlane.xlu0 %2050
        %v2052 = vmax.f32 %v2041, %v2042
        %2053 = vmax.xlane.f32.xlu0 %v2052
        %v2054 = vpop.xlane.xlu0 %2053
        %v2055 = vsel %vm2033, %v1770, -10000000.0
        %v2056 = vsel %vm2034, %v1771, -10000000.0
        %v2057 = vsel %vm2033, %v1772, -10000000.0
        %v2058 = vsel %vm2034, %v1773, -10000000.0
        %v2059 = vsel %vm2033, %v1774, -10000000.0
        %v2060 = vsel %vm2034, %v1775, -10000000.0
        %v2061 = vsel %vm2033, %v1776, -10000000.0
        %v2062 = vsel %vm2034, %v1777, -10000000.0
        %v2063 = vmax.f32 %v2055, %v2056
        %2064 = vmax.xlane.f32.xlu0 %v2063
        %v2065 = vpop.xlane.xlu0 %2064
        %v2066 = vmax.f32 %v2057, %v2058
        %2067 = vmax.xlane.f32.xlu0 %v2066
        %v2068 = vpop.xlane.xlu0 %2067
        %v2069 = vmax.f32 %v2059, %v2060
        %2070 = vmax.xlane.f32.xlu0 %v2069
        %v2071 = vpop.xlane.xlu0 %2070
        %v2072 = vmax.f32 %v2061, %v2062
        %2073 = vmax.xlane.f32.xlu0 %v2072
        %v2074 = vpop.xlane.xlu0 %2073
        %vm2075 = vcmp.eq.s32.totalorder %v1808, 4
        %v2076 = vsel %vm2075, %v2045, %v2021
        %v2077 = vsel %vm2075, %v2048, %v2022
        %v2078 = vsel %vm2075, %v2051, %v2023
        %v2079 = vsel %vm2075, %v2054, %v2024
        %v2080 = vsel %vm2075, %v2065, %v2025
        %v2081 = vsel %vm2075, %v2068, %v2026
        %v2082 = vsel %vm2075, %v2071, %v2027
        %v2083 = vsel %vm2075, %v2074, %v2028
        %vm2084 = vcmp.eq.s32.totalorder %v1806, 5
        %v2085 = vsel %vm2084, 1, 0
        %v2086 = vperm.slane %v2085, 0
        %v2087 = vperm.slane %v2085, 1
        %vm2088 = vcmp.eq.s32.totalorder %v2086, 1
        %vm2089 = vcmp.eq.s32.totalorder %v2087, 1
        %v2090 = vsel %vm2088, %v1510, -10000000.0
        %v2091 = vsel %vm2089, %v1511, -10000000.0
        %v2092 = vsel %vm2088, %v1512, -10000000.0
        %v2093 = vsel %vm2089, %v1513, -10000000.0
        %v2094 = vsel %vm2088, %v1514, -10000000.0
        %v2095 = vsel %vm2089, %v1515, -10000000.0
        %v2096 = vsel %vm2088, %v1516, -10000000.0
        %v2097 = vsel %vm2089, %v1517, -10000000.0
        %v2098 = vmax.f32 %v2090, %v2091
        %2099 = vmax.xlane.f32.xlu0 %v2098
        %v2100 = vpop.xlane.xlu0 %2099
        %v2101 = vmax.f32 %v2092, %v2093
        %2102 = vmax.xlane.f32.xlu0 %v2101
        %v2103 = vpop.xlane.xlu0 %2102
        %v2104 = vmax.f32 %v2094, %v2095
        %2105 = vmax.xlane.f32.xlu0 %v2104
        %v2106 = vpop.xlane.xlu0 %2105
        %v2107 = vmax.f32 %v2096, %v2097
        %2108 = vmax.xlane.f32.xlu0 %v2107
        %v2109 = vpop.xlane.xlu0 %2108
        %v2110 = vsel %vm2088, %v1770, -10000000.0
        %v2111 = vsel %vm2089, %v1771, -10000000.0
        %v2112 = vsel %vm2088, %v1772, -10000000.0
        %v2113 = vsel %vm2089, %v1773, -10000000.0
        %v2114 = vsel %vm2088, %v1774, -10000000.0
        %v2115 = vsel %vm2089, %v1775, -10000000.0
        %v2116 = vsel %vm2088, %v1776, -10000000.0
        %v2117 = vsel %vm2089, %v1777, -10000000.0
        %v2118 = vmax.f32 %v2110, %v2111
        %2119 = vmax.xlane.f32.xlu0 %v2118
        %v2120 = vpop.xlane.xlu0 %2119
        %v2121 = vmax.f32 %v2112, %v2113
        %2122 = vmax.xlane.f32.xlu0 %v2121
        %v2123 = vpop.xlane.xlu0 %2122
        %v2124 = vmax.f32 %v2114, %v2115
        %2125 = vmax.xlane.f32.xlu0 %v2124
        %v2126 = vpop.xlane.xlu0 %2125
        %v2127 = vmax.f32 %v2116, %v2117
        %2128 = vmax.xlane.f32.xlu0 %v2127
        %v2129 = vpop.xlane.xlu0 %2128
        %vm2130 = vcmp.eq.s32.totalorder %v1808, 5
        %v2131 = vsel %vm2130, %v2100, %v2076
        %v2132 = vsel %vm2130, %v2103, %v2077
        %v2133 = vsel %vm2130, %v2106, %v2078
        %v2134 = vsel %vm2130, %v2109, %v2079
        %v2135 = vsel %vm2130, %v2120, %v2080
        %v2136 = vsel %vm2130, %v2123, %v2081
        %v2137 = vsel %vm2130, %v2126, %v2082
        %v2138 = vsel %vm2130, %v2129, %v2083
        %vm2139 = vcmp.eq.s32.totalorder %v1806, 6
        %v2140 = vsel %vm2139, 1, 0
        %v2141 = vperm.slane %v2140, 0
        %v2142 = vperm.slane %v2140, 1
        %vm2143 = vcmp.eq.s32.totalorder %v2141, 1
        %vm2144 = vcmp.eq.s32.totalorder %v2142, 1
        %v2145 = vsel %vm2143, %v1510, -10000000.0
        %v2146 = vsel %vm2144, %v1511, -10000000.0
        %v2147 = vsel %vm2143, %v1512, -10000000.0
        %v2148 = vsel %vm2144, %v1513, -10000000.0
        %v2149 = vsel %vm2143, %v1514, -10000000.0
        %v2150 = vsel %vm2144, %v1515, -10000000.0
        %v2151 = vsel %vm2143, %v1516, -10000000.0
        %v2152 = vsel %vm2144, %v1517, -10000000.0
        %v2153 = vmax.f32 %v2145, %v2146
        %2154 = vmax.xlane.f32.xlu0 %v2153
        %v2155 = vpop.xlane.xlu0 %2154
        %v2156 = vmax.f32 %v2147, %v2148
        %2157 = vmax.xlane.f32.xlu0 %v2156
        %v2158 = vpop.xlane.xlu0 %2157
        %v2159 = vmax.f32 %v2149, %v2150
        %2160 = vmax.xlane.f32.xlu0 %v2159
        %v2161 = vpop.xlane.xlu0 %2160
        %v2162 = vmax.f32 %v2151, %v2152
        %2163 = vmax.xlane.f32.xlu0 %v2162
        %v2164 = vpop.xlane.xlu0 %2163
        %v2165 = vsel %vm2143, %v1770, -10000000.0
        %v2166 = vsel %vm2144, %v1771, -10000000.0
        %v2167 = vsel %vm2143, %v1772, -10000000.0
        %v2168 = vsel %vm2144, %v1773, -10000000.0
        %v2169 = vsel %vm2143, %v1774, -10000000.0
        %v2170 = vsel %vm2144, %v1775, -10000000.0
        %v2171 = vsel %vm2143, %v1776, -10000000.0
        %v2172 = vsel %vm2144, %v1777, -10000000.0
        %v2173 = vmax.f32 %v2165, %v2166
        %2174 = vmax.xlane.f32.xlu0 %v2173
        %v2175 = vpop.xlane.xlu0 %2174
        %v2176 = vmax.f32 %v2167, %v2168
        %2177 = vmax.xlane.f32.xlu0 %v2176
        %v2178 = vpop.xlane.xlu0 %2177
        %v2179 = vmax.f32 %v2169, %v2170
        %2180 = vmax.xlane.f32.xlu0 %v2179
        %v2181 = vpop.xlane.xlu0 %2180
        %v2182 = vmax.f32 %v2171, %v2172
        %2183 = vmax.xlane.f32.xlu0 %v2182
        %v2184 = vpop.xlane.xlu0 %2183
        %vm2185 = vcmp.eq.s32.totalorder %v1808, 6
        %v2186 = vsel %vm2185, %v2155, %v2131
        %v2187 = vsel %vm2185, %v2158, %v2132
        %v2188 = vsel %vm2185, %v2161, %v2133
        %v2189 = vsel %vm2185, %v2164, %v2134
        %v2190 = vsel %vm2185, %v2175, %v2135
        %v2191 = vsel %vm2185, %v2178, %v2136
        %v2192 = vsel %vm2185, %v2181, %v2137
        %v2193 = vsel %vm2185, %v2184, %v2138
        %vm2194 = vcmp.eq.s32.totalorder %v1806, 7
        %v2195 = vsel %vm2194, 1, 0
        %v2196 = vperm.slane %v2195, 0
        %v2197 = vperm.slane %v2195, 1
        %vm2198 = vcmp.eq.s32.totalorder %v2196, 1
        %vm2199 = vcmp.eq.s32.totalorder %v2197, 1
        %v2200 = vsel %vm2198, %v1510, -10000000.0
        %v2201 = vsel %vm2199, %v1511, -10000000.0
        %v2202 = vsel %vm2198, %v1512, -10000000.0
        %v2203 = vsel %vm2199, %v1513, -10000000.0
        %v2204 = vsel %vm2198, %v1514, -10000000.0
        %v2205 = vsel %vm2199, %v1515, -10000000.0
        %v2206 = vsel %vm2198, %v1516, -10000000.0
        %v2207 = vsel %vm2199, %v1517, -10000000.0
        %v2208 = vmax.f32 %v2200, %v2201
        %2209 = vmax.xlane.f32.xlu0 %v2208
        %v2210 = vpop.xlane.xlu0 %2209
        %v2211 = vmax.f32 %v2202, %v2203
        %2212 = vmax.xlane.f32.xlu0 %v2211
        %v2213 = vpop.xlane.xlu0 %2212
        %v2214 = vmax.f32 %v2204, %v2205
        %2215 = vmax.xlane.f32.xlu0 %v2214
        %v2216 = vpop.xlane.xlu0 %2215
        %v2217 = vmax.f32 %v2206, %v2207
        %2218 = vmax.xlane.f32.xlu0 %v2217
        %v2219 = vpop.xlane.xlu0 %2218
        %v2220 = vsel %vm2198, %v1770, -10000000.0
        %v2221 = vsel %vm2199, %v1771, -10000000.0
        %v2222 = vsel %vm2198, %v1772, -10000000.0
        %v2223 = vsel %vm2199, %v1773, -10000000.0
        %v2224 = vsel %vm2198, %v1774, -10000000.0
        %v2225 = vsel %vm2199, %v1775, -10000000.0
        %v2226 = vsel %vm2198, %v1776, -10000000.0
        %v2227 = vsel %vm2199, %v1777, -10000000.0
        %v2228 = vmax.f32 %v2220, %v2221
        %2229 = vmax.xlane.f32.xlu0 %v2228
        %v2230 = vpop.xlane.xlu0 %2229
        %v2231 = vmax.f32 %v2222, %v2223
        %2232 = vmax.xlane.f32.xlu0 %v2231
        %v2233 = vpop.xlane.xlu0 %2232
        %v2234 = vmax.f32 %v2224, %v2225
        %2235 = vmax.xlane.f32.xlu0 %v2234
        %v2236 = vpop.xlane.xlu0 %2235
        %v2237 = vmax.f32 %v2226, %v2227
        %2238 = vmax.xlane.f32.xlu0 %v2237
        %v2239 = vpop.xlane.xlu0 %2238
        %vm2240 = vcmp.eq.s32.totalorder %v1808, 7
        %v2241 = vsel %vm2240, %v2210, %v2186
        %v2242 = vsel %vm2240, %v2213, %v2187
        %v2243 = vsel %vm2240, %v2216, %v2188
        %v2244 = vsel %vm2240, %v2219, %v2189
        %v2245 = vsel %vm2240, %v2230, %v2190
        %v2246 = vsel %vm2240, %v2233, %v2191
        %v2247 = vsel %vm2240, %v2236, %v2192
        %v2248 = vsel %vm2240, %v2239, %v2193
        %v2249 = vld [vmem:[%s797] sm:$0xff]
        %v2250 = vld [vmem:[%s797 + $0x8] sm:$0xff]
        %v2251 = vld [vmem:[%s797 + $0x10] sm:$0xff]
        %v2252 = vld [vmem:[%s797 + $0x18] sm:$0xff]
        %v2253 = vmax.f32 %v2249, %v2241
        %v2254 = vmax.f32 %v2250, %v2242
        %v2255 = vmax.f32 %v2251, %v2243
        %v2256 = vmax.f32 %v2252, %v2244
        %2257 = vst.msk [vmem:[%s797] sm:$0xff] %vm837, %v2253
        %2258 = vst.msk [vmem:[%s797 + $0x8] sm:$0xff] %vm837, %v2254
        %2259 = vst.msk [vmem:[%s797 + $0x10] sm:$0xff] %vm837, %v2255
        %2260 = vst.msk [vmem:[%s797 + $0x18] sm:$0xff] %vm837, %v2256
        %v2261 = vld [vmem:[%s802] sm:$0xff]
        %v2262 = vld [vmem:[%s802 + $0x8] sm:$0xff]
        %v2263 = vld [vmem:[%s802 + $0x10] sm:$0xff]
        %v2264 = vld [vmem:[%s802 + $0x18] sm:$0xff]
        %v2265 = vmax.f32 %v2261, %v2245
        %v2266 = vmax.f32 %v2262, %v2246
        %v2267 = vmax.f32 %v2263, %v2247
        %v2268 = vmax.f32 %v2264, %v2248
        %2269 = vst.msk [vmem:[%s802] sm:$0xff] %vm837, %v2265
        %2270 = vst.msk [vmem:[%s802 + $0x8] sm:$0xff] %vm837, %v2266
        %2271 = vst.msk [vmem:[%s802 + $0x10] sm:$0xff] %vm837, %v2267
        %2272 = vst.msk [vmem:[%s802 + $0x18] sm:$0xff] %vm837, %v2268
        %s2273 = sand.u32 %s491, 1
        %s2274 = sand.u32 %s491, 1
        %s2275 = smul.addr %s2274, 32
        %s2276 = scalar_lea.vmem [#allocation2], %s2275
        %s2277 = sand.u32 %s519, 1
        %s2278 = sand.u32 %s519, 1
        %s2279 = smul.addr %s2278, 32
        %s2280 = scalar_lea.vmem [#allocation3], %s2279
        %p2281 = scmp.lt.s32.totalorder %s39, 1
        %s2282 = scalar_select %p2281, %s39, 1
        %s2283 = smul.addr %s2282, 4
        %s2284 = smul.addr %s2283, 8
        %s2285 = scalar_lea.vmem %s22, %s2284
        %p2286 = scmp.lt.s32.totalorder %s39, 1
        %s2287 = scalar_select %p2286, %s39, 1
        %s2288 = smul.addr %s2287, 4
        %s2289 = smul.addr %s2288, 8
        %s2290 = scalar_lea.vmem %s23, %s2289
        // Predicated region
        $region105: #{_lambda_.2} parent=99 // pred_check
          %p2291 = pneg %p501
        $region106: #{_lambda_.2} parent=99 // pred_check_branch
          %2293 = sbr.rel (%p2291) target = $region108
        $region107: #{_lambda_.2} parent=99 // pred_region
          %s2294 = smul.u32 2, %s40
          %s2295 = smul.addr %s39, 16
          %s2296 = sadd.s32 %s2294, %s2295
          %s2297 = smul.addr %s2296, 4
          %s2298 = scalar_lea.vmem %s20, %s2297
          // Predicated region
          $region109: #{_lambda_.2} parent=107 // pred_check
            _
          $region110: #{_lambda_.2} parent=107 // pred_check_branch
            %2300 = sbr.rel (0) target = $region112
          $region111: #{_lambda_.2} parent=107 // pred_region
            // Predicated region
            $region113: #{_lambda_.2} parent=111 // pred_check
              _
            $region114: #{_lambda_.2} parent=111 // pred_check_branch
              %2302 = sbr.rel (0) target = $region116
            $region115: #{_lambda_.2} parent=111 // pred_region
              // Predicated region
              $region128: #{_lambda_.2} parent=115 // pred_check
                _
              $region129: #{_lambda_.2} parent=115 // pred_check_branch
                %2324 = sbr.rel (0) target = $region131
              $region130: #{_lambda_.2} parent=115 // pred_region
                loop: start=0, step=1, limit=1
                $region132: #{_lambda_.2} parent=130 // loop_pre_header
                  _
                $region133: #{_lambda_.2} parent=130 // loop_header
                  %s2326 = sphi 0, %s2330
                  %p2327 = scmp.ge.s32.totalorder %s2326, 1
                  %s2331 = sphi %s2276, %s2276
                  %s2332 = sphi %s2298, %s2298
                $region134: #{_lambda_.2} parent=130 // loop_header_branch
                  %2329 = sbr.rel (%p2327) target = $region138
                $region135: #{_lambda_.2} parent=130 // loop_body
                  %v2333 = vld [vmem:[%s2331] sm:$0xff]
                  %2334 = vst [vmem:[%s2332] sm:$0xff] %v2333
                  %v2335 = vld [vmem:[%s2331 + $0x8] sm:$0xff]
                  %2336 = vst [vmem:[%s2332 + $0x10] sm:$0xff] %v2335
                  %v2337 = vld [vmem:[%s2331 + $0x10] sm:$0xff]
                  %2338 = vst [vmem:[%s2332 + $0x20] sm:$0xff] %v2337
                  %v2339 = vld [vmem:[%s2331 + $0x18] sm:$0xff]
                  %2340 = vst [vmem:[%s2332 + $0x30] sm:$0xff] %v2339
                $region136: #{_lambda_.2} parent=130 // loop_footer
                  %s2330 = sadd.s32 1, %s2326
                $region137: #{_lambda_.2} parent=130 // loop_footer_branch
                  %2325 = sbr.rel target = $region133
                $region138: #{_lambda_.2} parent=130 // loop_exit
                  _
              $region131: #{_lambda_.2} parent=115 // pred_fallthru
                _
              // Predicated region
              $region139: #{_lambda_.2} parent=115 // pred_check
                _
              $region140: #{_lambda_.2} parent=115 // pred_check_branch
                %2342 = sbr.rel target = $region142
              $region141: #{_lambda_.2} parent=115 // pred_region
                _
              $region142: #{_lambda_.2} parent=115 // pred_fallthru
                _
            $region116: #{_lambda_.2} parent=111 // pred_fallthru
              _
            // Predicated region
            $region117: #{_lambda_.2} parent=111 // pred_check
              _
            $region118: #{_lambda_.2} parent=111 // pred_check_branch
              %2304 = sbr.rel target = $region120
            $region119: #{_lambda_.2} parent=111 // pred_region
              %s2306 = ssub.s32 256, 1
              loop: start=0, step=1, limit=1
              $region121: #{_lambda_.2} parent=119 // loop_pre_header
                _
              $region122: #{_lambda_.2} parent=119 // loop_header
                %s2308 = sphi 0, %s2312
                %p2309 = scmp.ge.s32.totalorder %s2308, 1
                %s2313 = sphi %s2276, %s2276
                %s2314 = sphi %s2298, %s2298
              $region123: #{_lambda_.2} parent=119 // loop_header_branch
                %2311 = sbr.rel (%p2309) target = $region127
              $region124: #{_lambda_.2} parent=119 // loop_body
                %v2315 = vld [vmem:[%s2313] sm:%s2306]
                %2316 = vst [vmem:[%s2314] sm:%s2306] %v2315
                %v2317 = vld [vmem:[%s2313 + $0x8] sm:%s2306]
                %2318 = vst [vmem:[%s2314 + $0x10] sm:%s2306] %v2317
                %v2319 = vld [vmem:[%s2313 + $0x10] sm:%s2306]
                %2320 = vst [vmem:[%s2314 + $0x20] sm:%s2306] %v2319
                %v2321 = vld [vmem:[%s2313 + $0x18] sm:%s2306]
                %2322 = vst [vmem:[%s2314 + $0x30] sm:%s2306] %v2321
              $region125: #{_lambda_.2} parent=119 // loop_footer
                %s2312 = sadd.s32 1, %s2308
              $region126: #{_lambda_.2} parent=119 // loop_footer_branch
                %2307 = sbr.rel target = $region122
              $region127: #{_lambda_.2} parent=119 // loop_exit
                _
            $region120: #{_lambda_.2} parent=111 // pred_fallthru
              _
          $region112: #{_lambda_.2} parent=107 // pred_fallthru
            _
          %2343 = vnop
        $region108: #{_lambda_.2} parent=99 // pred_fallthru
          _
        // Predicated region
        $region143: #{_lambda_.2} parent=99 // pred_check
          %p2344 = pneg %p529
        $region144: #{_lambda_.2} parent=99 // pred_check_branch
          %2346 = sbr.rel (%p2344) target = $region146
        $region145: #{_lambda_.2} parent=99 // pred_region
          %s2347 = smul.u32 2, %s40
          %s2348 = smul.addr %s39, 16
          %s2349 = sadd.s32 %s2347, %s2348
          %s2350 = smul.addr %s2349, 4
          %s2351 = scalar_lea.vmem %s21, %s2350
          // Predicated region
          $region147: #{_lambda_.2} parent=145 // pred_check
            _
          $region148: #{_lambda_.2} parent=145 // pred_check_branch
            %2353 = sbr.rel (0) target = $region150
          $region149: #{_lambda_.2} parent=145 // pred_region
            // Predicated region
            $region151: #{_lambda_.2} parent=149 // pred_check
              _
            $region152: #{_lambda_.2} parent=149 // pred_check_branch
              %2355 = sbr.rel (0) target = $region154
            $region153: #{_lambda_.2} parent=149 // pred_region
              // Predicated region
              $region166: #{_lambda_.2} parent=153 // pred_check
                _
              $region167: #{_lambda_.2} parent=153 // pred_check_branch
                %2377 = sbr.rel (0) target = $region169
              $region168: #{_lambda_.2} parent=153 // pred_region
                loop: start=0, step=1, limit=1
                $region170: #{_lambda_.2} parent=168 // loop_pre_header
                  _
                $region171: #{_lambda_.2} parent=168 // loop_header
                  %s2379 = sphi 0, %s2383
                  %p2380 = scmp.ge.s32.totalorder %s2379, 1
                  %s2384 = sphi %s2280, %s2280
                  %s2385 = sphi %s2351, %s2351
                $region172: #{_lambda_.2} parent=168 // loop_header_branch
                  %2382 = sbr.rel (%p2380) target = $region176
                $region173: #{_lambda_.2} parent=168 // loop_body
                  %v2386 = vld [vmem:[%s2384] sm:$0xff]
                  %2387 = vst [vmem:[%s2385] sm:$0xff] %v2386
                  %v2388 = vld [vmem:[%s2384 + $0x8] sm:$0xff]
                  %2389 = vst [vmem:[%s2385 + $0x10] sm:$0xff] %v2388
                  %v2390 = vld [vmem:[%s2384 + $0x10] sm:$0xff]
                  %2391 = vst [vmem:[%s2385 + $0x20] sm:$0xff] %v2390
                  %v2392 = vld [vmem:[%s2384 + $0x18] sm:$0xff]
                  %2393 = vst [vmem:[%s2385 + $0x30] sm:$0xff] %v2392
                $region174: #{_lambda_.2} parent=168 // loop_footer
                  %s2383 = sadd.s32 1, %s2379
                $region175: #{_lambda_.2} parent=168 // loop_footer_branch
                  %2378 = sbr.rel target = $region171
                $region176: #{_lambda_.2} parent=168 // loop_exit
                  _
              $region169: #{_lambda_.2} parent=153 // pred_fallthru
                _
              // Predicated region
              $region177: #{_lambda_.2} parent=153 // pred_check
                _
              $region178: #{_lambda_.2} parent=153 // pred_check_branch
                %2395 = sbr.rel target = $region180
              $region179: #{_lambda_.2} parent=153 // pred_region
                _
              $region180: #{_lambda_.2} parent=153 // pred_fallthru
                _
            $region154: #{_lambda_.2} parent=149 // pred_fallthru
              _
            // Predicated region
            $region155: #{_lambda_.2} parent=149 // pred_check
              _
            $region156: #{_lambda_.2} parent=149 // pred_check_branch
              %2357 = sbr.rel target = $region158
            $region157: #{_lambda_.2} parent=149 // pred_region
              %s2359 = ssub.s32 256, 1
              loop: start=0, step=1, limit=1
              $region159: #{_lambda_.2} parent=157 // loop_pre_header
                _
              $region160: #{_lambda_.2} parent=157 // loop_header
                %s2361 = sphi 0, %s2365
                %p2362 = scmp.ge.s32.totalorder %s2361, 1
                %s2366 = sphi %s2280, %s2280
                %s2367 = sphi %s2351, %s2351
              $region161: #{_lambda_.2} parent=157 // loop_header_branch
                %2364 = sbr.rel (%p2362) target = $region165
              $region162: #{_lambda_.2} parent=157 // loop_body
                %v2368 = vld [vmem:[%s2366] sm:%s2359]
                %2369 = vst [vmem:[%s2367] sm:%s2359] %v2368
                %v2370 = vld [vmem:[%s2366 + $0x8] sm:%s2359]
                %2371 = vst [vmem:[%s2367 + $0x10] sm:%s2359] %v2370
                %v2372 = vld [vmem:[%s2366 + $0x10] sm:%s2359]
                %2373 = vst [vmem:[%s2367 + $0x20] sm:%s2359] %v2372
                %v2374 = vld [vmem:[%s2366 + $0x18] sm:%s2359]
                %2375 = vst [vmem:[%s2367 + $0x30] sm:%s2359] %v2374
              $region163: #{_lambda_.2} parent=157 // loop_footer
                %s2365 = sadd.s32 1, %s2361
              $region164: #{_lambda_.2} parent=157 // loop_footer_branch
                %2360 = sbr.rel target = $region160
              $region165: #{_lambda_.2} parent=157 // loop_exit
                _
            $region158: #{_lambda_.2} parent=149 // pred_fallthru
              _
          $region150: #{_lambda_.2} parent=145 // pred_fallthru
            _
          %2396 = vnop
        $region146: #{_lambda_.2} parent=99 // pred_fallthru
          _
        // Predicated region
        $region181: #{_lambda_.2} parent=99 // pred_check
          %p2397 = pneg %p555
        $region182: #{_lambda_.2} parent=99 // pred_check_branch
          %2399 = sbr.rel (%p2397) target = $region184
        $region183: #{_lambda_.2} parent=99 // pred_region
          _
        $region184: #{_lambda_.2} parent=99 // pred_fallthru
          _
        // Predicated region
        $region185: #{_lambda_.2} parent=99 // pred_check
          %p2400 = pneg %p581
        $region186: #{_lambda_.2} parent=99 // pred_check_branch
          %2402 = sbr.rel (%p2400) target = $region188
        $region187: #{_lambda_.2} parent=99 // pred_region
          _
        $region188: #{_lambda_.2} parent=99 // pred_fallthru
          _
      $region100: #{_lambda_.2} parent=5 // pred_fallthru
        _
      %p2403 = scmp.le.s32.totalorder 2, %s30
      // Predicated region
      $region189: #{_lambda_.2} parent=5 // pred_check
        %p2404 = pneg %p2403
      $region190: #{_lambda_.2} parent=5 // pred_check_branch
        %2406 = sbr.rel (%p2404) target = $region192
      $region191: #{_lambda_.2} parent=5 // pred_region
        %s2407 = ssub.s32 %s30, 2
        // Predicated region
        $region193: #{_lambda_.2} parent=191 // pred_check
          %p2408 = pneg %p507
        $region194: #{_lambda_.2} parent=191 // pred_check_branch
          %2410 = sbr.rel (%p2408) target = $region196
        $region195: #{_lambda_.2} parent=191 // pred_region
          %s2411 = sand.u32 %s492, 1
          %s2412 = sand.u32 %s492, 1
          %s2413 = smul.addr %s2412, 32
          %s2414 = scalar_lea.vmem [#allocation2], %s2413
        $region196: #{_lambda_.2} parent=191 // pred_fallthru
          _
        // Predicated region
        $region197: #{_lambda_.2} parent=191 // pred_check
          %p2415 = pneg %p535
        $region198: #{_lambda_.2} parent=191 // pred_check_branch
          %2417 = sbr.rel (%p2415) target = $region200
        $region199: #{_lambda_.2} parent=191 // pred_region
          %s2418 = sand.u32 %s520, 1
          %s2419 = sand.u32 %s520, 1
          %s2420 = smul.addr %s2419, 32
          %s2421 = scalar_lea.vmem [#allocation3], %s2420
        $region200: #{_lambda_.2} parent=191 // pred_fallthru
          _
        // Predicated region
        $region201: #{_lambda_.2} parent=191 // pred_check
          %p2422 = pneg %p561
        $region202: #{_lambda_.2} parent=191 // pred_check_branch
          %2424 = sbr.rel (%p2422) target = $region204
        $region203: #{_lambda_.2} parent=191 // pred_region
          %p2425 = scmp.lt.s32.totalorder %s41, 1
          %s2426 = scalar_select %p2425, %s41, 1
          %s2427 = smul.addr %s2426, 4
          %s2428 = smul.addr %s2427, 8
          %s2429 = scalar_lea.vmem %s22, %s2428
        $region204: #{_lambda_.2} parent=191 // pred_fallthru
          _
        // Predicated region
        $region205: #{_lambda_.2} parent=191 // pred_check
          %p2430 = pneg %p587
        $region206: #{_lambda_.2} parent=191 // pred_check_branch
          %2432 = sbr.rel (%p2430) target = $region208
        $region207: #{_lambda_.2} parent=191 // pred_region
          %p2433 = scmp.lt.s32.totalorder %s41, 1
          %s2434 = scalar_select %p2433, %s41, 1
          %s2435 = smul.addr %s2434, 4
          %s2436 = smul.addr %s2435, 8
          %s2437 = scalar_lea.vmem %s23, %s2436
        $region208: #{_lambda_.2} parent=191 // pred_fallthru
          _
      $region192: #{_lambda_.2} parent=5 // pred_fallthru
        _
    $region6: #{_lambda_.2} parent=1 // loop_footer
      %s34 = sadd.s32 1, %s30
    $region7: #{_lambda_.2} parent=1 // loop_footer_branch
      %29 = sbr.rel target = $region3
    $region8: #{_lambda_.2} parent=1 // loop_exit
      _

</llo_original>
